<compile_context>
chip_gen: v7x
topology: tpu7x:2x2x1
jax: 0.10.0
libtpu: 0.0.40
codegen_flags: <defaults>
</compile_context>

<pallas_src>
import functools

import numpy as np
import jax
import jax.numpy as jnp
from jax import lax
from jax.experimental import pallas as pl
from jax.experimental.pallas import tpu as pltpu


# ----------------------------------------------------------------------------
# small helpers
# ----------------------------------------------------------------------------
def _round_up(x, m):
    return ((x + m - 1) // m) * m


def _pick_rows(total_rows, bytes_per_row, budget=4 << 20):
    """Largest divisor of total_rows whose row tile stays within `budget` bytes."""
    best = 1
    for d in range(1, total_rows + 1):
        if total_rows % d == 0 and d * bytes_per_row <= budget:
            best = d
    return best


def _tile_rows_flat(a, tile_rows, stride_rows, lp):
    """a: (N, C, R, Wc) -> overlapping row windows, flattened & zero-padded to lane
    length lp: (N, nt, C, lp)."""
    n, c, r, wc = a.shape
    nt = (r - tile_rows) // stride_rows + 1
    t = jnp.stack([a[:, :, i * stride_rows: i * stride_rows + tile_rows, :]
                   for i in range(nt)], axis=1)
    t = t.reshape(n, nt, c, tile_rows * wc)
    return jnp.pad(t, ((0, 0), (0, 0), (0, 0), (0, lp - tile_rows * wc)))


def _mosaic(sems, *block_bytes):
    # explicit scoped-VMEM sizing (review item): blocks are double-buffered, leave
    # headroom for in-kernel f32 intermediates; stay well under v7x's 64 MiB.
    vmem = 3 * sum(block_bytes) + (8 << 20)
    vmem = max(24 << 20, min(40 << 20, vmem))
    return pltpu.CompilerParams(dimension_semantics=sems, vmem_limit_bytes=vmem)


# ----------------------------------------------------------------------------
# Kernel A: 3x3 reflect conv + bias + LeakyReLU(0.2), taps built in-kernel
# ----------------------------------------------------------------------------
def _conv3x3_lrelu_kernel(x_ref, w_ref, b_ref, o_ref, *, wp):
    # x_ref: (1,1,Cin,Lp)  bf16 flattened padded row tile (row stride wp = W+2)
    # w_ref: (9,Cout,Cin)  bf16 ; b_ref: (Cout,1) f32 ; o_ref: (1,1,Cout,Lo) bf16
    lo = o_ref.shape[-1]
    acc = None
    for ky in range(3):
        for kx in range(3):
            s = ky * wp + kx
            tap = x_ref[0, 0, :, s:s + lo]                               # (Cin, Lo)
            part = jnp.dot(w_ref[ky * 3 + kx], tap,
                           preferred_element_type=jnp.float32)           # (Cout, Lo)
            acc = part if acc is None else acc + part
    acc = acc + b_ref[...]
    acc = jnp.maximum(acc, 0.2 * acc)                                    # LeakyReLU(0.2)
    o_ref[0, 0] = acc.astype(o_ref.dtype)


def conv3x3_lrelu(x, w, b, *, vmem_budget=4 << 20):
    """x: (N,Cin,H,W) -> (N,Cout,H,W) bf16."""
    n, cin, h, wd = x.shape
    cout = w.shape[0]
    wp = wd + 2
    th = _pick_rows(h, (cin + cout) * wp * 2, vmem_budget)   # output rows per tile
    nt = h // th
    lp = _round_up((th + 2) * wp + 2, 128)                   # padded input lane length
    lo = th * wp                                              # output lane length

    xp = jnp.pad(x.astype(jnp.bfloat16), ((0, 0), (0, 0), (1, 1), (1, 1)),
                 mode='reflect')
    xt = _tile_rows_flat(xp, th + 2, th, lp)                  # (N, nt, Cin, lp)

    wr = jnp.transpose(w, (2, 3, 0, 1)).reshape(9, cout, cin).astype(jnp.bfloat16)
    br = b.reshape(cout, 1).astype(jnp.float32)

    ht = pl.pallas_call(
        functools.partial(_conv3x3_lrelu_kernel, wp=wp),
        out_shape=jax.ShapeDtypeStruct((n, nt, cout, lo), jnp.bfloat16),
        grid=(n, nt),
        in_specs=[
            pl.BlockSpec((1, 1, cin, lp), lambda i, t: (i, t, 0, 0)),
            pl.BlockSpec((9, cout, cin), lambda i, t: (0, 0, 0)),
            pl.BlockSpec((cout, 1), lambda i, t: (0, 0)),
        ],
        out_specs=pl.BlockSpec((1, 1, cout, lo), lambda i, t: (i, t, 0, 0)),
        compiler_params=_mosaic(("parallel", "parallel"),
                                cin * lp * 2, cout * lo * 2),
    )(xt, wr, br)

    # drop the 2 garbage columns per row and reassemble (N, Cout, H, W)
    hh = ht.reshape(n, nt, cout, th, wp).transpose(0, 2, 1, 3, 4).reshape(n, cout, h, wp)
    return hh[..., :wd]


# ----------------------------------------------------------------------------
# Kernel B: 3x3 reflect conv + LeakyReLU + 2x2/s2 compress + InstanceNorm stats
# ----------------------------------------------------------------------------
def _conv_compress_stats_kernel(p0_ref, p1_ref, p2_ref, p3_ref, w2_ref, b2_ref,
                                wc_ref, y_ref, st_ref, sum_sc, sq_sc,
                                *, wcp, wq, inv_n):
    # p*_ref: (1,1,Cmid,Lp) bf16 — parity planes (py,px) of the reflect-padded conv1
    #         output, row-tiled & lane-flattened (plane row stride wcp = W/2+1)
    # w2_ref: (9,Cout,Cmid) bf16 ; b2_ref: (Cout,1) f32 ; wc_ref: (4,Cout,Cout) bf16
    # y_ref : (1,1,Cout,Lq) bf16 — un-normalized compress output tile
    # st_ref: (1,Cout,2) f32     — [mu, rsqrt(var+eps)] written on the last step
    # sum_sc, sq_sc: VMEM (Cout,1) f32 running sum / sum-of-squares per image
    planes = (p0_ref, p1_ref, p2_ref, p3_ref)
    t = pl.program_id(1)
    lq = y_ref.shape[-1]

    @pl.when(t == 0)
    def _():
        sum_sc[...] = jnp.zeros_like(sum_sc)
        sq_sc[...] = jnp.zeros_like(sq_sc)

    y = None
    for ry in range(2):            # conv2 output row parity  == compress tap dy
        for cx in range(2):        # conv2 output col parity  == compress tap dx
            acc = None
            for ky in range(3):
                for kx in range(3):
                    pidx = ((ry + ky) % 2) * 2 + ((cx + kx) % 2)
                    s = ((ry + ky) // 2) * wcp + ((cx + kx) // 2)
                    tap = planes[pidx][0, 0, :, s:s + lq]               # (Cmid, Lq)
                    part = jnp.dot(w2_ref[ky * 3 + kx], tap,
                                   preferred_element_type=jnp.float32)  # (Cout, Lq)
                    acc = part if acc is None else acc + part
            acc = acc + b2_ref[...]
            h2q = jnp.maximum(acc, 0.2 * acc).astype(jnp.bfloat16)      # conv2 plane
            part = jnp.dot(wc_ref[ry * 2 + cx], h2q,
                           preferred_element_type=jnp.float32)          # compress tap
            y = part if y is None else y + part

    # one-pass InstanceNorm statistics over valid columns (col wq of each row is pad)
    col = lax.broadcasted_iota(jnp.int32, y.shape, 1) % wcp
    yv = jnp.where(col < wq, y, 0.0)
    sum_sc[...] += jnp.sum(yv, axis=1, keepdims=True)
    sq_sc[...] += jnp.sum(yv * yv, axis=1, keepdims=True)
    y_ref[0, 0] = y.astype(y_ref.dtype)

    @pl.when(t == pl.num_programs(1) - 1)
    def _():
        mu = sum_sc[...] * inv_n
        var = jnp.maximum(sq_sc[...] * inv_n - mu * mu, 0.0)
        st_ref[0, :, 0:1] = mu
        st_ref[0, :, 1:2] = lax.rsqrt(var + 1e-5)


def _norm_lrelu_kernel(y_ref, st_ref, o_ref):
    mu = st_ref[0, :, 0:1]
    rs = st_ref[0, :, 1:2]
    yn = (y_ref[0, 0].astype(jnp.float32) - mu) * rs
    o_ref[0, 0] = jnp.maximum(yn, 0.2 * yn)


def conv_compress_in_lrelu(hin, w2, b2, wc, *, vmem_budget=4 << 20):
    """hin: (N,Cmid,H,W) -> (N,Cout,H/2,W/2) f32."""
    n, cmid, h, wd = hin.shape
    cout = w2.shape[0]
    assert h % 2 == 0 and wd % 2 == 0, "2x2/stride-2 compress expects even H, W"
    hq, wq = h // 2, wd // 2
    wcp = wq + 1                                              # padded plane row width

    th = _pick_rows(hq, (4 * cmid + 2 * cout) * wcp * 2, vmem_budget)  # quarter rows/tile
    nt = hq // th
    lp = _round_up((th + 1) * wcp + 2, 128)
    lq = th * wcp

    hp = jnp.pad(hin.astype(jnp.bfloat16), ((0, 0), (0, 0), (1, 1), (1, 1)),
                 mode='reflect')                              # (N, Cmid, H+2, W+2)
    # 2x2 space-to-depth of the padded activation -> 4 parity planes, row-tiled
    planes = [_tile_rows_flat(hp[:, :, py::2, px::2], th + 1, th, lp)
              for py in range(2) for px in range(2)]          # each (N, nt, Cmid, lp)

    w2r = jnp.transpose(w2, (2, 3, 0, 1)).reshape(9, cout, cmid).astype(jnp.bfloat16)
    b2r = b2.reshape(cout, 1).astype(jnp.float32)
    wcr = jnp.transpose(wc, (2, 3, 0, 1)).reshape(4, cout, cout).astype(jnp.bfloat16)

    plane_spec = pl.BlockSpec((1, 1, cmid, lp), lambda i, t: (i, t, 0, 0))
    y, stats = pl.pallas_call(
        functools.partial(_conv_compress_stats_kernel,
                          wcp=wcp, wq=wq, inv_n=1.0 / float(hq * wq)),
        out_shape=(jax.ShapeDtypeStruct((n, nt, cout, lq), jnp.bfloat16),
                   jax.ShapeDtypeStruct((n, cout, 2), jnp.float32)),
        grid=(n, nt),
        in_specs=[
            plane_spec, plane_spec, plane_spec, plane_spec,
            pl.BlockSpec((9, cout, cmid), lambda i, t: (0, 0, 0)),
            pl.BlockSpec((cout, 1), lambda i, t: (0, 0)),
            pl.BlockSpec((4, cout, cout), lambda i, t: (0, 0, 0)),
        ],
        out_specs=(pl.BlockSpec((1, 1, cout, lq), lambda i, t: (i, t, 0, 0)),
                   pl.BlockSpec((1, cout, 2), lambda i, t: (i, 0, 0))),
        scratch_shapes=[pltpu.VMEM((cout, 1), jnp.float32),
                        pltpu.VMEM((cout, 1), jnp.float32)],
        compiler_params=_mosaic(("parallel", "arbitrary"),
                                4 * cmid * lp * 2, cout * lq * 2),
    )(planes[0], planes[1], planes[2], planes[3], w2r, b2r, wcr)

    # tiny finalize pass: (y - mu) * rsqrt(var + eps), LeakyReLU(0.2)
    out = pl.pallas_call(
        _norm_lrelu_kernel,
        out_shape=jax.ShapeDtypeStruct((n, nt, cout, lq), jnp.float32),
        grid=(n, nt),
        in_specs=[pl.BlockSpec((1, 1, cout, lq), lambda i, t: (i, t, 0, 0)),
                  pl.BlockSpec((1, cout, 2), lambda i, t: (i, 0, 0))],
        out_specs=pl.BlockSpec((1, 1, cout, lq), lambda i, t: (i, t, 0, 0)),
        compiler_params=_mosaic(("parallel", "parallel"),
                                cout * lq * 2, cout * lq * 4),
    )(y, stats)

    out = out.reshape(n, nt, cout, th, wcp).transpose(0, 2, 1, 3, 4)
    out = out.reshape(n, cout, hq, wcp)
    return out[..., :wq]


# ----------------------------------------------------------------------------
# EncoderBlock forward
# ----------------------------------------------------------------------------
def encoder_block_pallas(x, p):
    h1 = conv3x3_lrelu(x, p['w1'], p['b1'])                       # Block.conv1 + LReLU
    return conv_compress_in_lrelu(h1, p['w2'], p['b2'], p['wc'])  # conv2+LReLU+compress+IN+LReLU


# ----------------------------------------------------------------------------
# deterministic parameter init (shapes from the module __init__)
# ----------------------------------------------------------------------------
def init_params(key, in_ch, out_ch):
    mid = out_ch // 2
    ks = jax.random.split(key, 5)

    def u(k, shape, fan_in):
        b = 1.0 / np.sqrt(fan_in)
        return jax.random.uniform(k, shape, jnp.float32, -b, b)

    return {
        'w1': u(ks[0], (mid, in_ch, 3, 3), in_ch * 9),
        'b1': u(ks[1], (mid,), in_ch * 9),
        'w2': u(ks[2], (out_ch, mid, 3, 3), mid * 9),
        'b2': u(ks[3], (out_ch,), mid * 9),
        'wc': u(ks[4], (out_ch, out_ch, 2, 2), out_ch * 4),   # compress_op, bias=False
    }


# ----------------------------------------------------------------------------
# pure-JAX (XLA) reference with the same bf16-storage / f32-accumulate policy
# ----------------------------------------------------------------------------
def ref_forward(x, p):
    dn = ('NCHW', 'OIHW', 'NCHW')
    lrelu = lambda v: jnp.where(v >= 0.0, v, 0.2 * v)

    def conv3x3_reflect(h, w, b):
        hp = jnp.pad(h, ((0, 0), (0, 0), (1, 1), (1, 1)), mode='reflect')
        y = lax.conv_general_dilated(hp.astype(jnp.bfloat16), w.astype(jnp.bfloat16),
                                     (1, 1), 'VALID', dimension_numbers=dn,
                                     preferred_element_type=jnp.float32)
        return y + b[None, :, None, None]

    h1 = lrelu(conv3x3_reflect(x, p['w1'], p['b1'])).astype(jnp.bfloat16)
    h2 = lrelu(conv3x3_reflect(h1, p['w2'], p['b2'])).astype(jnp.bfloat16)
    y = lax.conv_general_dilated(h2, p['wc'].astype(jnp.bfloat16), (2, 2), 'VALID',
                                 dimension_numbers=dn,
                                 preferred_element_type=jnp.float32)
    mu = jnp.mean(y, axis=(2, 3), keepdims=True)            # InstanceNorm2d (no affine)
    var = jnp.mean((y - mu) ** 2, axis=(2, 3), keepdims=True)
    yn = (y - mu) * lax.rsqrt(var + 1e-5)
    return lrelu(yn)


# ----------------------------------------------------------------------------
if __name__ == "__main__":
    in_ch, out_ch = 4, 8
    N, H, W = 2, 16, 16

    key = jax.random.PRNGKey(0)
    k_x, k_p = jax.random.split(key)
    x = jax.random.normal(k_x, (N, in_ch, H, W), jnp.float32)
    params = init_params(k_p, in_ch, out_ch)

    fwd = jax.jit(encoder_block_pallas)
    out = jax.block_until_ready(fwd(x, params))
    ref = jax.block_until_ready(ref_forward(x, params))

    assert out.shape == (N, out_ch, H // 2, W // 2)
    np.testing.assert_allclose(np.asarray(out), np.asarray(ref), rtol=2e-2, atol=2e-2)
    print("KERNEL_OK")
</pallas_src>

<mosaic_0001>
module attributes {stable_mosaic.version = 11 : i64} {
  func.func @_conv3x3_lrelu_kernel(%arg0: i32, %arg1: i32, %arg2: memref<1x1x4x384xbf16, #tpu.memory_space<vmem>>, %arg3: memref<9x4x4xbf16, #tpu.memory_space<vmem>>, %arg4: memref<4x1xf32, #tpu.memory_space<vmem>>, %arg5: memref<1x1x4x288xbf16, #tpu.memory_space<vmem>>) attributes {dimension_semantics = [#tpu.dimension_semantics<parallel>, #tpu.dimension_semantics<parallel>], iteration_bounds = array<i64: 2, 1>, scalar_prefetch = 0 : i64, scratch_operands = 0 : i64, tpu.core_type = #tpu.core_type<tc>, window_params = [{transform_indices = @transform_0, window_bounds = array<i64: 1, 1, 4, 384>}, {pipeline_mode = #tpu.pipeline_mode<synchronous>, transform_indices = @transform_1, window_bounds = array<i64: 9, 4, 4>}, {pipeline_mode = #tpu.pipeline_mode<synchronous>, transform_indices = @transform_2, window_bounds = array<i64: 4, 1>}, {transform_indices = @transform_3, window_bounds = array<i64: 1, 1, 4, 288>}]} {
    %c0 = arith.constant 0 : index
    %c0_0 = arith.constant 0 : index
    %c0_1 = arith.constant 0 : index
    %c0_2 = arith.constant 0 : index
    %0 = vector.load %arg2[%c0, %c0_0, %c0_1, %c0_2] : memref<1x1x4x384xbf16, #tpu.memory_space<vmem>>, vector<1x1x4x288xbf16>
    %1 = vector.shape_cast %0 : vector<1x1x4x288xbf16> to vector<4x288xbf16>
    %c0_3 = arith.constant 0 : index
    %c0_4 = arith.constant 0 : index
    %c0_5 = arith.constant 0 : index
    %2 = vector.load %arg3[%c0_3, %c0_4, %c0_5] : memref<9x4x4xbf16, #tpu.memory_space<vmem>>, vector<1x4x4xbf16>
    %3 = vector.shape_cast %2 : vector<1x4x4xbf16> to vector<4x4xbf16>
    %cst = arith.constant dense<0.000000e+00> : vector<4x288xf32>
    %4 = tpu.matmul %3, %1, %cst {dimension_numbers = #tpu.dot_dimension_numbers<[1], [0], [0], [1], [0, 0, 1, 1], [], []>} : vector<4x4xbf16>, vector<4x288xbf16>, vector<4x288xf32> -> vector<4x288xf32>
    %c0_6 = arith.constant 0 : index
    %c0_7 = arith.constant 0 : index
    %c0_8 = arith.constant 0 : index
    %c1 = arith.constant 1 : index
    %5 = vector.load %arg2[%c0_6, %c0_7, %c0_8, %c1] : memref<1x1x4x384xbf16, #tpu.memory_space<vmem>>, vector<1x1x4x288xbf16>
    %6 = vector.shape_cast %5 : vector<1x1x4x288xbf16> to vector<4x288xbf16>
    %c1_9 = arith.constant 1 : index
    %c0_10 = arith.constant 0 : index
    %c0_11 = arith.constant 0 : index
    %7 = vector.load %arg3[%c1_9, %c0_10, %c0_11] : memref<9x4x4xbf16, #tpu.memory_space<vmem>>, vector<1x4x4xbf16>
    %8 = vector.shape_cast %7 : vector<1x4x4xbf16> to vector<4x4xbf16>
    %cst_12 = arith.constant dense<0.000000e+00> : vector<4x288xf32>
    %9 = tpu.matmul %8, %6, %cst_12 {dimension_numbers = #tpu.dot_dimension_numbers<[1], [0], [0], [1], [0, 0, 1, 1], [], []>} : vector<4x4xbf16>, vector<4x288xbf16>, vector<4x288xf32> -> vector<4x288xf32>
    %10 = arith.addf %4, %9 : vector<4x288xf32>
    %c0_13 = arith.constant 0 : index
    %c0_14 = arith.constant 0 : index
    %c0_15 = arith.constant 0 : index
    %c2 = arith.constant 2 : index
    %11 = vector.load %arg2[%c0_13, %c0_14, %c0_15, %c2] : memref<1x1x4x384xbf16, #tpu.memory_space<vmem>>, vector<1x1x4x288xbf16>
    %12 = vector.shape_cast %11 : vector<1x1x4x288xbf16> to vector<4x288xbf16>
    %c2_16 = arith.constant 2 : index
    %c0_17 = arith.constant 0 : index
    %c0_18 = arith.constant 0 : index
    %13 = vector.load %arg3[%c2_16, %c0_17, %c0_18] : memref<9x4x4xbf16, #tpu.memory_space<vmem>>, vector<1x4x4xbf16>
    %14 = vector.shape_cast %13 : vector<1x4x4xbf16> to vector<4x4xbf16>
    %cst_19 = arith.constant dense<0.000000e+00> : vector<4x288xf32>
    %15 = tpu.matmul %14, %12, %cst_19 {dimension_numbers = #tpu.dot_dimension_numbers<[1], [0], [0], [1], [0, 0, 1, 1], [], []>} : vector<4x4xbf16>, vector<4x288xbf16>, vector<4x288xf32> -> vector<4x288xf32>
    %16 = arith.addf %10, %15 : vector<4x288xf32>
    %c0_20 = arith.constant 0 : index
    %c0_21 = arith.constant 0 : index
    %c0_22 = arith.constant 0 : index
    %c18 = arith.constant 18 : index
    %17 = vector.load %arg2[%c0_20, %c0_21, %c0_22, %c18] : memref<1x1x4x384xbf16, #tpu.memory_space<vmem>>, vector<1x1x4x288xbf16>
    %18 = vector.shape_cast %17 : vector<1x1x4x288xbf16> to vector<4x288xbf16>
    %c3 = arith.constant 3 : index
    %c0_23 = arith.constant 0 : index
    %c0_24 = arith.constant 0 : index
    %19 = vector.load %arg3[%c3, %c0_23, %c0_24] : memref<9x4x4xbf16, #tpu.memory_space<vmem>>, vector<1x4x4xbf16>
    %20 = vector.shape_cast %19 : vector<1x4x4xbf16> to vector<4x4xbf16>
    %cst_25 = arith.constant dense<0.000000e+00> : vector<4x288xf32>
    %21 = tpu.matmul %20, %18, %cst_25 {dimension_numbers = #tpu.dot_dimension_numbers<[1], [0], [0], [1], [0, 0, 1, 1], [], []>} : vector<4x4xbf16>, vector<4x288xbf16>, vector<4x288xf32> -> vector<4x288xf32>
    %22 = arith.addf %16, %21 : vector<4x288xf32>
    %c0_26 = arith.constant 0 : index
    %c0_27 = arith.constant 0 : index
    %c0_28 = arith.constant 0 : index
    %c19 = arith.constant 19 : index
    %23 = vector.load %arg2[%c0_26, %c0_27, %c0_28, %c19] : memref<1x1x4x384xbf16, #tpu.memory_space<vmem>>, vector<1x1x4x288xbf16>
    %24 = vector.shape_cast %23 : vector<1x1x4x288xbf16> to vector<4x288xbf16>
    %c4 = arith.constant 4 : index
    %c0_29 = arith.constant 0 : index
    %c0_30 = arith.constant 0 : index
    %25 = vector.load %arg3[%c4, %c0_29, %c0_30] : memref<9x4x4xbf16, #tpu.memory_space<vmem>>, vector<1x4x4xbf16>
    %26 = vector.shape_cast %25 : vector<1x4x4xbf16> to vector<4x4xbf16>
    %cst_31 = arith.constant dense<0.000000e+00> : vector<4x288xf32>
    %27 = tpu.matmul %26, %24, %cst_31 {dimension_numbers = #tpu.dot_dimension_numbers<[1], [0], [0], [1], [0, 0, 1, 1], [], []>} : vector<4x4xbf16>, vector<4x288xbf16>, vector<4x288xf32> -> vector<4x288xf32>
    %28 = arith.addf %22, %27 : vector<4x288xf32>
    %c0_32 = arith.constant 0 : index
    %c0_33 = arith.constant 0 : index
    %c0_34 = arith.constant 0 : index
    %c20 = arith.constant 20 : index
    %29 = vector.load %arg2[%c0_32, %c0_33, %c0_34, %c20] : memref<1x1x4x384xbf16, #tpu.memory_space<vmem>>, vector<1x1x4x288xbf16>
    %30 = vector.shape_cast %29 : vector<1x1x4x288xbf16> to vector<4x288xbf16>
    %c5 = arith.constant 5 : index
    %c0_35 = arith.constant 0 : index
    %c0_36 = arith.constant 0 : index
    %31 = vector.load %arg3[%c5, %c0_35, %c0_36] : memref<9x4x4xbf16, #tpu.memory_space<vmem>>, vector<1x4x4xbf16>
    %32 = vector.shape_cast %31 : vector<1x4x4xbf16> to vector<4x4xbf16>
    %cst_37 = arith.constant dense<0.000000e+00> : vector<4x288xf32>
    %33 = tpu.matmul %32, %30, %cst_37 {dimension_numbers = #tpu.dot_dimension_numbers<[1], [0], [0], [1], [0, 0, 1, 1], [], []>} : vector<4x4xbf16>, vector<4x288xbf16>, vector<4x288xf32> -> vector<4x288xf32>
    %34 = arith.addf %28, %33 : vector<4x288xf32>
    %c0_38 = arith.constant 0 : index
    %c0_39 = arith.constant 0 : index
    %c0_40 = arith.constant 0 : index
    %c36 = arith.constant 36 : index
    %35 = vector.load %arg2[%c0_38, %c0_39, %c0_40, %c36] : memref<1x1x4x384xbf16, #tpu.memory_space<vmem>>, vector<1x1x4x288xbf16>
    %36 = vector.shape_cast %35 : vector<1x1x4x288xbf16> to vector<4x288xbf16>
    %c6 = arith.constant 6 : index
    %c0_41 = arith.constant 0 : index
    %c0_42 = arith.constant 0 : index
    %37 = vector.load %arg3[%c6, %c0_41, %c0_42] : memref<9x4x4xbf16, #tpu.memory_space<vmem>>, vector<1x4x4xbf16>
    %38 = vector.shape_cast %37 : vector<1x4x4xbf16> to vector<4x4xbf16>
    %cst_43 = arith.constant dense<0.000000e+00> : vector<4x288xf32>
    %39 = tpu.matmul %38, %36, %cst_43 {dimension_numbers = #tpu.dot_dimension_numbers<[1], [0], [0], [1], [0, 0, 1, 1], [], []>} : vector<4x4xbf16>, vector<4x288xbf16>, vector<4x288xf32> -> vector<4x288xf32>
    %40 = arith.addf %34, %39 : vector<4x288xf32>
    %c0_44 = arith.constant 0 : index
    %c0_45 = arith.constant 0 : index
    %c0_46 = arith.constant 0 : index
    %c37 = arith.constant 37 : index
    %41 = vector.load %arg2[%c0_44, %c0_45, %c0_46, %c37] : memref<1x1x4x384xbf16, #tpu.memory_space<vmem>>, vector<1x1x4x288xbf16>
    %42 = vector.shape_cast %41 : vector<1x1x4x288xbf16> to vector<4x288xbf16>
    %c7 = arith.constant 7 : index
    %c0_47 = arith.constant 0 : index
    %c0_48 = arith.constant 0 : index
    %43 = vector.load %arg3[%c7, %c0_47, %c0_48] : memref<9x4x4xbf16, #tpu.memory_space<vmem>>, vector<1x4x4xbf16>
    %44 = vector.shape_cast %43 : vector<1x4x4xbf16> to vector<4x4xbf16>
    %cst_49 = arith.constant dense<0.000000e+00> : vector<4x288xf32>
    %45 = tpu.matmul %44, %42, %cst_49 {dimension_numbers = #tpu.dot_dimension_numbers<[1], [0], [0], [1], [0, 0, 1, 1], [], []>} : vector<4x4xbf16>, vector<4x288xbf16>, vector<4x288xf32> -> vector<4x288xf32>
    %46 = arith.addf %40, %45 : vector<4x288xf32>
    %c0_50 = arith.constant 0 : index
    %c0_51 = arith.constant 0 : index
    %c0_52 = arith.constant 0 : index
    %c38 = arith.constant 38 : index
    %47 = vector.load %arg2[%c0_50, %c0_51, %c0_52, %c38] : memref<1x1x4x384xbf16, #tpu.memory_space<vmem>>, vector<1x1x4x288xbf16>
    %48 = vector.shape_cast %47 : vector<1x1x4x288xbf16> to vector<4x288xbf16>
    %c8 = arith.constant 8 : index
    %c0_53 = arith.constant 0 : index
    %c0_54 = arith.constant 0 : index
    %49 = vector.load %arg3[%c8, %c0_53, %c0_54] : memref<9x4x4xbf16, #tpu.memory_space<vmem>>, vector<1x4x4xbf16>
    %50 = vector.shape_cast %49 : vector<1x4x4xbf16> to vector<4x4xbf16>
    %cst_55 = arith.constant dense<0.000000e+00> : vector<4x288xf32>
    %51 = tpu.matmul %50, %48, %cst_55 {dimension_numbers = #tpu.dot_dimension_numbers<[1], [0], [0], [1], [0, 0, 1, 1], [], []>} : vector<4x4xbf16>, vector<4x288xbf16>, vector<4x288xf32> -> vector<4x288xf32>
    %52 = arith.addf %46, %51 : vector<4x288xf32>
    %c0_56 = arith.constant 0 : index
    %c0_57 = arith.constant 0 : index
    %53 = vector.load %arg4[%c0_56, %c0_57] : memref<4x1xf32, #tpu.memory_space<vmem>>, vector<4x1xf32>
    %54 = vector.broadcast %53 : vector<4x1xf32> to vector<4x288xf32>
    %55 = arith.addf %52, %54 : vector<4x288xf32>
    %cst_58 = arith.constant 2.000000e-01 : f32
    %56 = vector.broadcast %cst_58 : f32 to vector<4x288xf32>
    %57 = arith.mulf %56, %55 : vector<4x288xf32>
    %58 = arith.maximumf %55, %57 : vector<4x288xf32>
    %59 = arith.truncf %58 : vector<4x288xf32> to vector<4x288xbf16>
    %c0_59 = arith.constant 0 : index
    %c0_60 = arith.constant 0 : index
    %c0_61 = arith.constant 0 : index
    %c0_62 = arith.constant 0 : index
    %60 = vector.load %arg5[%c0_59, %c0_60, %c0_61, %c0_62] : memref<1x1x4x288xbf16, #tpu.memory_space<vmem>>, vector<1x1x4x288xbf16>
    %61 = vector.shape_cast %60 : vector<1x1x4x288xbf16> to vector<4x288xbf16>
    %62 = vector.shape_cast %59 : vector<4x288xbf16> to vector<1x1x4x288xbf16>
    tpu.vector_store %arg5[%c0_59, %c0_60, %c0_61, %c0_62], %62 {strides = array<i32>} : memref<1x1x4x288xbf16, #tpu.memory_space<vmem>>, vector<1x1x4x288xbf16>,
    return
  }
  func.func @transform_0(%arg0: i32, %arg1: i32) -> (i32, i32, i32, i32) {
    %c0_i32 = arith.constant 0 : i32
    %c0_i32_0 = arith.constant 0 : i32
    %c0_i32_1 = arith.constant 0 : i32
    return %arg0, %arg1, %c0_i32, %c0_i32_0 : i32, i32, i32, i32
  }
  func.func @transform_1(%arg0: i32, %arg1: i32) -> (i32, i32, i32) {
    %c0_i32 = arith.constant 0 : i32
    %c0_i32_0 = arith.constant 0 : i32
    %c0_i32_1 = arith.constant 0 : i32
    %c0_i32_2 = arith.constant 0 : i32
    return %c0_i32, %c0_i32_0, %c0_i32_1 : i32, i32, i32
  }
  func.func @transform_2(%arg0: i32, %arg1: i32) -> (i32, i32) {
    %c0_i32 = arith.constant 0 : i32
    %c0_i32_0 = arith.constant 0 : i32
    %c0_i32_1 = arith.constant 0 : i32
    return %c0_i32, %c0_i32_0 : i32, i32
  }
  func.func @transform_3(%arg0: i32, %arg1: i32) -> (i32, i32, i32, i32) {
    %c0_i32 = arith.constant 0 : i32
    %c0_i32_0 = arith.constant 0 : i32
    %c0_i32_1 = arith.constant 0 : i32
    return %arg0, %arg1, %c0_i32, %c0_i32_0 : i32, i32, i32, i32
  }
}

module attributes {stable_mosaic.version = 11 : i64} {
  func.func @_norm_lrelu_kernel(%arg0: i32, %arg1: i32, %arg2: memref<1x1x8x72xbf16, #tpu.memory_space<vmem>>, %arg3: memref<1x8x2xf32, #tpu.memory_space<vmem>>, %arg4: memref<1x1x8x72xf32, #tpu.memory_space<vmem>>) attributes {dimension_semantics = [#tpu.dimension_semantics<parallel>, #tpu.dimension_semantics<parallel>], iteration_bounds = array<i64: 2, 1>, scalar_prefetch = 0 : i64, scratch_operands = 0 : i64, tpu.core_type = #tpu.core_type<tc>, window_params = [{transform_indices = @transform_0, window_bounds = array<i64: 1, 1, 8, 72>}, {transform_indices = @transform_1, window_bounds = array<i64: 1, 8, 2>}, {transform_indices = @transform_2, window_bounds = array<i64: 1, 1, 8, 72>}]} {
    %c0 = arith.constant 0 : index
    %c0_0 = arith.constant 0 : index
    %c0_1 = arith.constant 0 : index
    %0 = vector.load %arg3[%c0, %c0_0, %c0_1] : memref<1x8x2xf32, #tpu.memory_space<vmem>>, vector<1x8x1xf32>
    %1 = vector.shape_cast %0 : vector<1x8x1xf32> to vector<8x1xf32>
    %c0_2 = arith.constant 0 : index
    %c0_3 = arith.constant 0 : index
    %c1 = arith.constant 1 : index
    %2 = vector.load %arg3[%c0_2, %c0_3, %c1] : memref<1x8x2xf32, #tpu.memory_space<vmem>>, vector<1x8x1xf32>
    %3 = vector.shape_cast %2 : vector<1x8x1xf32> to vector<8x1xf32>
    %c0_4 = arith.constant 0 : index
    %c0_5 = arith.constant 0 : index
    %c0_6 = arith.constant 0 : index
    %c0_7 = arith.constant 0 : index
    %4 = vector.load %arg2[%c0_4, %c0_5, %c0_6, %c0_7] : memref<1x1x8x72xbf16, #tpu.memory_space<vmem>>, vector<1x1x8x72xbf16>
    %5 = vector.shape_cast %4 : vector<1x1x8x72xbf16> to vector<8x72xbf16>
    %6 = arith.extf %5 : vector<8x72xbf16> to vector<8x72xf32>
    %7 = vector.broadcast %1 : vector<8x1xf32> to vector<8x72xf32>
    %8 = arith.subf %6, %7 : vector<8x72xf32>
    %9 = vector.broadcast %3 : vector<8x1xf32> to vector<8x72xf32>
    %10 = arith.mulf %8, %9 : vector<8x72xf32>
    %cst = arith.constant 2.000000e-01 : f32
    %11 = vector.broadcast %cst : f32 to vector<8x72xf32>
    %12 = arith.mulf %11, %10 : vector<8x72xf32>
    %13 = arith.maximumf %10, %12 : vector<8x72xf32>
    %c0_8 = arith.constant 0 : index
    %c0_9 = arith.constant 0 : index
    %c0_10 = arith.constant 0 : index
    %c0_11 = arith.constant 0 : index
    %14 = vector.load %arg4[%c0_8, %c0_9, %c0_10, %c0_11] : memref<1x1x8x72xf32, #tpu.memory_space<vmem>>, vector<1x1x8x72xf32>
    %15 = vector.shape_cast %14 : vector<1x1x8x72xf32> to vector<8x72xf32>
    %16 = vector.shape_cast %13 : vector<8x72xf32> to vector<1x1x8x72xf32>
    tpu.vector_store %arg4[%c0_8, %c0_9, %c0_10, %c0_11], %16 {strides = array<i32>} : memref<1x1x8x72xf32, #tpu.memory_space<vmem>>, vector<1x1x8x72xf32>,
    return
  }
  func.func @transform_0(%arg0: i32, %arg1: i32) -> (i32, i32, i32, i32) {
    %c0_i32 = arith.constant 0 : i32
    %c0_i32_0 = arith.constant 0 : i32
    %c0_i32_1 = arith.constant 0 : i32
    return %arg0, %arg1, %c0_i32, %c0_i32_0 : i32, i32, i32, i32
  }
  func.func @transform_1(%arg0: i32, %arg1: i32) -> (i32, i32, i32) {
    %c0_i32 = arith.constant 0 : i32
    %c0_i32_0 = arith.constant 0 : i32
    %c0_i32_1 = arith.constant 0 : i32
    return %arg0, %c0_i32, %c0_i32_0 : i32, i32, i32
  }
  func.func @transform_2(%arg0: i32, %arg1: i32) -> (i32, i32, i32, i32) {
    %c0_i32 = arith.constant 0 : i32
    %c0_i32_0 = arith.constant 0 : i32
    %c0_i32_1 = arith.constant 0 : i32
    return %arg0, %arg1, %c0_i32, %c0_i32_0 : i32, i32, i32, i32
  }
}

module attributes {stable_mosaic.version = 11 : i64} {
  func.func @_conv_compress_stats_kernel(%arg0: i32, %arg1: i32, %arg2: memref<1x1x4x128xbf16, #tpu.memory_space<vmem>>, %arg3: memref<1x1x4x128xbf16, #tpu.memory_space<vmem>>, %arg4: memref<1x1x4x128xbf16, #tpu.memory_space<vmem>>, %arg5: memref<1x1x4x128xbf16, #tpu.memory_space<vmem>>, %arg6: memref<9x8x4xbf16, #tpu.memory_space<vmem>>, %arg7: memref<8x1xf32, #tpu.memory_space<vmem>>, %arg8: memref<4x8x8xbf16, #tpu.memory_space<vmem>>, %arg9: memref<1x1x8x72xbf16, #tpu.memory_space<vmem>>, %arg10: memref<1x8x2xf32, #tpu.memory_space<vmem>>, %arg11: memref<8x1xf32, #tpu.memory_space<vmem>>, %arg12: memref<8x1xf32, #tpu.memory_space<vmem>>) attributes {dimension_semantics = [#tpu.dimension_semantics<parallel>, #tpu.dimension_semantics<arbitrary>], iteration_bounds = array<i64: 2, 1>, scalar_prefetch = 0 : i64, scratch_operands = 2 : i64, tpu.core_type = #tpu.core_type<tc>, window_params = [{transform_indices = @transform_0, window_bounds = array<i64: 1, 1, 4, 128>}, {transform_indices = @transform_1, window_bounds = array<i64: 1, 1, 4, 128>}, {transform_indices = @transform_2, window_bounds = array<i64: 1, 1, 4, 128>}, {transform_indices = @transform_3, window_bounds = array<i64: 1, 1, 4, 128>}, {pipeline_mode = #tpu.pipeline_mode<synchronous>, transform_indices = @transform_4, window_bounds = array<i64: 9, 8, 4>}, {pipeline_mode = #tpu.pipeline_mode<synchronous>, transform_indices = @transform_5, window_bounds = array<i64: 8, 1>}, {pipeline_mode = #tpu.pipeline_mode<synchronous>, transform_indices = @transform_6, window_bounds = array<i64: 4, 8, 8>}, {transform_indices = @transform_7, window_bounds = array<i64: 1, 1, 8, 72>}, {transform_indices = @transform_8, window_bounds = array<i64: 1, 8, 2>}]} {
    %c0_i32 = arith.constant 0 : i32
    %0 = arith.cmpi eq, %arg1, %c0_i32 : i32
    %1 = arith.extui %0 : i1 to i32
    %c0_i32_0 = arith.constant 0 : i32
    %2 = arith.cmpi ne, %1, %c0_i32_0 : i32
    scf.if %2 {
      %cst_326 = arith.constant 0.000000e+00 : f32
      %297 = vector.broadcast %cst_326 : f32 to vector<8x1xf32>
      %c0_327 = arith.constant 0 : index
      %c0_328 = arith.constant 0 : index
      %298 = vector.load %arg11[%c0_327, %c0_328] : memref<8x1xf32, #tpu.memory_space<vmem>>, vector<8x1xf32>
      tpu.vector_store %arg11[%c0_327, %c0_328], %297 {strides = array<i32>} : memref<8x1xf32, #tpu.memory_space<vmem>>, vector<8x1xf32>,
      %cst_329 = arith.constant 0.000000e+00 : f32
      %299 = vector.broadcast %cst_329 : f32 to vector<8x1xf32>
      %c0_330 = arith.constant 0 : index
      %c0_331 = arith.constant 0 : index
      %300 = vector.load %arg12[%c0_330, %c0_331] : memref<8x1xf32, #tpu.memory_space<vmem>>, vector<8x1xf32>
      tpu.vector_store %arg12[%c0_330, %c0_331], %299 {strides = array<i32>} : memref<8x1xf32, #tpu.memory_space<vmem>>, vector<8x1xf32>,
    } else {
    }
    %c0 = arith.constant 0 : index
    %c0_1 = arith.constant 0 : index
    %c0_2 = arith.constant 0 : index
    %c0_3 = arith.constant 0 : index
    %3 = vector.load %arg2[%c0, %c0_1, %c0_2, %c0_3] : memref<1x1x4x128xbf16, #tpu.memory_space<vmem>>, vector<1x1x4x72xbf16>
    %4 = vector.shape_cast %3 : vector<1x1x4x72xbf16> to vector<4x72xbf16>
    %c0_4 = arith.constant 0 : index
    %c0_5 = arith.constant 0 : index
    %c0_6 = arith.constant 0 : index
    %5 = vector.load %arg6[%c0_4, %c0_5, %c0_6] : memref<9x8x4xbf16, #tpu.memory_space<vmem>>, vector<1x8x4xbf16>
    %6 = vector.shape_cast %5 : vector<1x8x4xbf16> to vector<8x4xbf16>
    %cst = arith.constant dense<0.000000e+00> : vector<8x72xf32>
    %7 = tpu.matmul %6, %4, %cst {dimension_numbers = #tpu.dot_dimension_numbers<[1], [0], [0], [1], [0, 0, 1, 1], [], []>} : vector<8x4xbf16>, vector<4x72xbf16>, vector<8x72xf32> -> vector<8x72xf32>
    %c0_7 = arith.constant 0 : index
    %c0_8 = arith.constant 0 : index
    %c0_9 = arith.constant 0 : index
    %c0_10 = arith.constant 0 : index
    %8 = vector.load %arg3[%c0_7, %c0_8, %c0_9, %c0_10] : memref<1x1x4x128xbf16, #tpu.memory_space<vmem>>, vector<1x1x4x72xbf16>
    %9 = vector.shape_cast %8 : vector<1x1x4x72xbf16> to vector<4x72xbf16>
    %c1 = arith.constant 1 : index
    %c0_11 = arith.constant 0 : index
    %c0_12 = arith.constant 0 : index
    %10 = vector.load %arg6[%c1, %c0_11, %c0_12] : memref<9x8x4xbf16, #tpu.memory_space<vmem>>, vector<1x8x4xbf16>
    %11 = vector.shape_cast %10 : vector<1x8x4xbf16> to vector<8x4xbf16>
    %cst_13 = arith.constant dense<0.000000e+00> : vector<8x72xf32>
    %12 = tpu.matmul %11, %9, %cst_13 {dimension_numbers = #tpu.dot_dimension_numbers<[1], [0], [0], [1], [0, 0, 1, 1], [], []>} : vector<8x4xbf16>, vector<4x72xbf16>, vector<8x72xf32> -> vector<8x72xf32>
    %13 = arith.addf %7, %12 : vector<8x72xf32>
    %c0_14 = arith.constant 0 : index
    %c0_15 = arith.constant 0 : index
    %c0_16 = arith.constant 0 : index
    %c1_17 = arith.constant 1 : index
    %14 = vector.load %arg2[%c0_14, %c0_15, %c0_16, %c1_17] : memref<1x1x4x128xbf16, #tpu.memory_space<vmem>>, vector<1x1x4x72xbf16>
    %15 = vector.shape_cast %14 : vector<1x1x4x72xbf16> to vector<4x72xbf16>
    %c2 = arith.constant 2 : index
    %c0_18 = arith.constant 0 : index
    %c0_19 = arith.constant 0 : index
    %16 = vector.load %arg6[%c2, %c0_18, %c0_19] : memref<9x8x4xbf16, #tpu.memory_space<vmem>>, vector<1x8x4xbf16>
    %17 = vector.shape_cast %16 : vector<1x8x4xbf16> to vector<8x4xbf16>
    %cst_20 = arith.constant dense<0.000000e+00> : vector<8x72xf32>
    %18 = tpu.matmul %17, %15, %cst_20 {dimension_numbers = #tpu.dot_dimension_numbers<[1], [0], [0], [1], [0, 0, 1, 1], [], []>} : vector<8x4xbf16>, vector<4x72xbf16>, vector<8x72xf32> -> vector<8x72xf32>
    %19 = arith.addf %13, %18 : vector<8x72xf32>
    %c0_21 = arith.constant 0 : index
    %c0_22 = arith.constant 0 : index
    %c0_23 = arith.constant 0 : index
    %c0_24 = arith.constant 0 : index
    %20 = vector.load %arg4[%c0_21, %c0_22, %c0_23, %c0_24] : memref<1x1x4x128xbf16, #tpu.memory_space<vmem>>, vector<1x1x4x72xbf16>
    %21 = vector.shape_cast %20 : vector<1x1x4x72xbf16> to vector<4x72xbf16>
    %c3 = arith.constant 3 : index
    %c0_25 = arith.constant 0 : index
    %c0_26 = arith.constant 0 : index
    %22 = vector.load %arg6[%c3, %c0_25, %c0_26] : memref<9x8x4xbf16, #tpu.memory_space<vmem>>, vector<1x8x4xbf16>
    %23 = vector.shape_cast %22 : vector<1x8x4xbf16> to vector<8x4xbf16>
    %cst_27 = arith.constant dense<0.000000e+00> : vector<8x72xf32>
    %24 = tpu.matmul %23, %21, %cst_27 {dimension_numbers = #tpu.dot_dimension_numbers<[1], [0], [0], [1], [0, 0, 1, 1], [], []>} : vector<8x4xbf16>, vector<4x72xbf16>, vector<8x72xf32> -> vector<8x72xf32>
    %25 = arith.addf %19, %24 : vector<8x72xf32>
    %c0_28 = arith.constant 0 : index
    %c0_29 = arith.constant 0 : index
    %c0_30 = arith.constant 0 : index
    %c0_31 = arith.constant 0 : index
    %26 = vector.load %arg5[%c0_28, %c0_29, %c0_30, %c0_31] : memref<1x1x4x128xbf16, #tpu.memory_space<vmem>>, vector<1x1x4x72xbf16>
    %27 = vector.shape_cast %26 : vector<1x1x4x72xbf16> to vector<4x72xbf16>
    %c4 = arith.constant 4 : index
    %c0_32 = arith.constant 0 : index
    %c0_33 = arith.constant 0 : index
    %28 = vector.load %arg6[%c4, %c0_32, %c0_33] : memref<9x8x4xbf16, #tpu.memory_space<vmem>>, vector<1x8x4xbf16>
    %29 = vector.shape_cast %28 : vector<1x8x4xbf16> to vector<8x4xbf16>
    %cst_34 = arith.constant dense<0.000000e+00> : vector<8x72xf32>
    %30 = tpu.matmul %29, %27, %cst_34 {dimension_numbers = #tpu.dot_dimension_numbers<[1], [0], [0], [1], [0, 0, 1, 1], [], []>} : vector<8x4xbf16>, vector<4x72xbf16>, vector<8x72xf32> -> vector<8x72xf32>
    %31 = arith.addf %25, %30 : vector<8x72xf32>
    %c0_35 = arith.constant 0 : index
    %c0_36 = arith.constant 0 : index
    %c0_37 = arith.constant 0 : index
    %c1_38 = arith.constant 1 : index
    %32 = vector.load %arg4[%c0_35, %c0_36, %c0_37, %c1_38] : memref<1x1x4x128xbf16, #tpu.memory_space<vmem>>, vector<1x1x4x72xbf16>
    %33 = vector.shape_cast %32 : vector<1x1x4x72xbf16> to vector<4x72xbf16>
    %c5 = arith.constant 5 : index
    %c0_39 = arith.constant 0 : index
    %c0_40 = arith.constant 0 : index
    %34 = vector.load %arg6[%c5, %c0_39, %c0_40] : memref<9x8x4xbf16, #tpu.memory_space<vmem>>, vector<1x8x4xbf16>
    %35 = vector.shape_cast %34 : vector<1x8x4xbf16> to vector<8x4xbf16>
    %cst_41 = arith.constant dense<0.000000e+00> : vector<8x72xf32>
    %36 = tpu.matmul %35, %33, %cst_41 {dimension_numbers = #tpu.dot_dimension_numbers<[1], [0], [0], [1], [0, 0, 1, 1], [], []>} : vector<8x4xbf16>, vector<4x72xbf16>, vector<8x72xf32> -> vector<8x72xf32>
    %37 = arith.addf %31, %36 : vector<8x72xf32>
    %c0_42 = arith.constant 0 : index
    %c0_43 = arith.constant 0 : index
    %c0_44 = arith.constant 0 : index
    %c9 = arith.constant 9 : index
    %38 = vector.load %arg2[%c0_42, %c0_43, %c0_44, %c9] : memref<1x1x4x128xbf16, #tpu.memory_space<vmem>>, vector<1x1x4x72xbf16>
    %39 = vector.shape_cast %38 : vector<1x1x4x72xbf16> to vector<4x72xbf16>
    %c6 = arith.constant 6 : index
    %c0_45 = arith.constant 0 : index
    %c0_46 = arith.constant 0 : index
    %40 = vector.load %arg6[%c6, %c0_45, %c0_46] : memref<9x8x4xbf16, #tpu.memory_space<vmem>>, vector<1x8x4xbf16>
    %41 = vector.shape_cast %40 : vector<1x8x4xbf16> to vector<8x4xbf16>
    %cst_47 = arith.constant dense<0.000000e+00> : vector<8x72xf32>
    %42 = tpu.matmul %41, %39, %cst_47 {dimension_numbers = #tpu.dot_dimension_numbers<[1], [0], [0], [1], [0, 0, 1, 1], [], []>} : vector<8x4xbf16>, vector<4x72xbf16>, vector<8x72xf32> -> vector<8x72xf32>
    %43 = arith.addf %37, %42 : vector<8x72xf32>
    %c0_48 = arith.constant 0 : index
    %c0_49 = arith.constant 0 : index
    %c0_50 = arith.constant 0 : index
    %c9_51 = arith.constant 9 : index
    %44 = vector.load %arg3[%c0_48, %c0_49, %c0_50, %c9_51] : memref<1x1x4x128xbf16, #tpu.memory_space<vmem>>, vector<1x1x4x72xbf16>
    %45 = vector.shape_cast %44 : vector<1x1x4x72xbf16> to vector<4x72xbf16>
    %c7 = arith.constant 7 : index
    %c0_52 = arith.constant 0 : index
    %c0_53 = arith.constant 0 : index
    %46 = vector.load %arg6[%c7, %c0_52, %c0_53] : memref<9x8x4xbf16, #tpu.memory_space<vmem>>, vector<1x8x4xbf16>
    %47 = vector.shape_cast %46 : vector<1x8x4xbf16> to vector<8x4xbf16>
    %cst_54 = arith.constant dense<0.000000e+00> : vector<8x72xf32>
    %48 = tpu.matmul %47, %45, %cst_54 {dimension_numbers = #tpu.dot_dimension_numbers<[1], [0], [0], [1], [0, 0, 1, 1], [], []>} : vector<8x4xbf16>, vector<4x72xbf16>, vector<8x72xf32> -> vector<8x72xf32>
    %49 = arith.addf %43, %48 : vector<8x72xf32>
    %c0_55 = arith.constant 0 : index
    %c0_56 = arith.constant 0 : index
    %c0_57 = arith.constant 0 : index
    %c10 = arith.constant 10 : index
    %50 = vector.load %arg2[%c0_55, %c0_56, %c0_57, %c10] : memref<1x1x4x128xbf16, #tpu.memory_space<vmem>>, vector<1x1x4x72xbf16>
    %51 = vector.shape_cast %50 : vector<1x1x4x72xbf16> to vector<4x72xbf16>
    %c8 = arith.constant 8 : index
    %c0_58 = arith.constant 0 : index
    %c0_59 = arith.constant 0 : index
    %52 = vector.load %arg6[%c8, %c0_58, %c0_59] : memref<9x8x4xbf16, #tpu.memory_space<vmem>>, vector<1x8x4xbf16>
    %53 = vector.shape_cast %52 : vector<1x8x4xbf16> to vector<8x4xbf16>
    %cst_60 = arith.constant dense<0.000000e+00> : vector<8x72xf32>
    %54 = tpu.matmul %53, %51, %cst_60 {dimension_numbers = #tpu.dot_dimension_numbers<[1], [0], [0], [1], [0, 0, 1, 1], [], []>} : vector<8x4xbf16>, vector<4x72xbf16>, vector<8x72xf32> -> vector<8x72xf32>
    %55 = arith.addf %49, %54 : vector<8x72xf32>
    %c0_61 = arith.constant 0 : index
    %c0_62 = arith.constant 0 : index
    %56 = vector.load %arg7[%c0_61, %c0_62] : memref<8x1xf32, #tpu.memory_space<vmem>>, vector<8x1xf32>
    %57 = vector.broadcast %56 : vector<8x1xf32> to vector<8x72xf32>
    %58 = arith.addf %55, %57 : vector<8x72xf32>
    %cst_63 = arith.constant 2.000000e-01 : f32
    %59 = vector.broadcast %cst_63 : f32 to vector<8x72xf32>
    %60 = arith.mulf %59, %58 : vector<8x72xf32>
    %61 = arith.maximumf %58, %60 : vector<8x72xf32>
    %62 = arith.truncf %61 : vector<8x72xf32> to vector<8x72xbf16>
    %c0_64 = arith.constant 0 : index
    %c0_65 = arith.constant 0 : index
    %c0_66 = arith.constant 0 : index
    %63 = vector.load %arg8[%c0_64, %c0_65, %c0_66] : memref<4x8x8xbf16, #tpu.memory_space<vmem>>, vector<1x8x8xbf16>
    %64 = vector.shape_cast %63 : vector<1x8x8xbf16> to vector<8x8xbf16>
    %cst_67 = arith.constant dense<0.000000e+00> : vector<8x72xf32>
    %65 = tpu.matmul %64, %62, %cst_67 {dimension_numbers = #tpu.dot_dimension_numbers<[1], [0], [0], [1], [0, 0, 1, 1], [], []>} : vector<8x8xbf16>, vector<8x72xbf16>, vector<8x72xf32> -> vector<8x72xf32>
    %c0_68 = arith.constant 0 : index
    %c0_69 = arith.constant 0 : index
    %c0_70 = arith.constant 0 : index
    %c0_71 = arith.constant 0 : index
    %66 = vector.load %arg3[%c0_68, %c0_69, %c0_70, %c0_71] : memref<1x1x4x128xbf16, #tpu.memory_space<vmem>>, vector<1x1x4x72xbf16>
    %67 = vector.shape_cast %66 : vector<1x1x4x72xbf16> to vector<4x72xbf16>
    %c0_72 = arith.constant 0 : index
    %c0_73 = arith.constant 0 : index
    %c0_74 = arith.constant 0 : index
    %68 = vector.load %arg6[%c0_72, %c0_73, %c0_74] : memref<9x8x4xbf16, #tpu.memory_space<vmem>>, vector<1x8x4xbf16>
    %69 = vector.shape_cast %68 : vector<1x8x4xbf16> to vector<8x4xbf16>
    %cst_75 = arith.constant dense<0.000000e+00> : vector<8x72xf32>
    %70 = tpu.matmul %69, %67, %cst_75 {dimension_numbers = #tpu.dot_dimension_numbers<[1], [0], [0], [1], [0, 0, 1, 1], [], []>} : vector<8x4xbf16>, vector<4x72xbf16>, vector<8x72xf32> -> vector<8x72xf32>
    %c0_76 = arith.constant 0 : index
    %c0_77 = arith.constant 0 : index
    %c0_78 = arith.constant 0 : index
    %c1_79 = arith.constant 1 : index
    %71 = vector.load %arg2[%c0_76, %c0_77, %c0_78, %c1_79] : memref<1x1x4x128xbf16, #tpu.memory_space<vmem>>, vector<1x1x4x72xbf16>
    %72 = vector.shape_cast %71 : vector<1x1x4x72xbf16> to vector<4x72xbf16>
    %c1_80 = arith.constant 1 : index
    %c0_81 = arith.constant 0 : index
    %c0_82 = arith.constant 0 : index
    %73 = vector.load %arg6[%c1_80, %c0_81, %c0_82] : memref<9x8x4xbf16, #tpu.memory_space<vmem>>, vector<1x8x4xbf16>
    %74 = vector.shape_cast %73 : vector<1x8x4xbf16> to vector<8x4xbf16>
    %cst_83 = arith.constant dense<0.000000e+00> : vector<8x72xf32>
    %75 = tpu.matmul %74, %72, %cst_83 {dimension_numbers = #tpu.dot_dimension_numbers<[1], [0], [0], [1], [0, 0, 1, 1], [], []>} : vector<8x4xbf16>, vector<4x72xbf16>, vector<8x72xf32> -> vector<8x72xf32>
    %76 = arith.addf %70, %75 : vector<8x72xf32>
    %c0_84 = arith.constant 0 : index
    %c0_85 = arith.constant 0 : index
    %c0_86 = arith.constant 0 : index
    %c1_87 = arith.constant 1 : index
    %77 = vector.load %arg3[%c0_84, %c0_85, %c0_86, %c1_87] : memref<1x1x4x128xbf16, #tpu.memory_space<vmem>>, vector<1x1x4x72xbf16>
    %78 = vector.shape_cast %77 : vector<1x1x4x72xbf16> to vector<4x72xbf16>
    %c2_88 = arith.constant 2 : index
    %c0_89 = arith.constant 0 : index
    %c0_90 = arith.constant 0 : index
    %79 = vector.load %arg6[%c2_88, %c0_89, %c0_90] : memref<9x8x4xbf16, #tpu.memory_space<vmem>>, vector<1x8x4xbf16>
    %80 = vector.shape_cast %79 : vector<1x8x4xbf16> to vector<8x4xbf16>
    %cst_91 = arith.constant dense<0.000000e+00> : vector<8x72xf32>
    %81 = tpu.matmul %80, %78, %cst_91 {dimension_numbers = #tpu.dot_dimension_numbers<[1], [0], [0], [1], [0, 0, 1, 1], [], []>} : vector<8x4xbf16>, vector<4x72xbf16>, vector<8x72xf32> -> vector<8x72xf32>
    %82 = arith.addf %76, %81 : vector<8x72xf32>
    %c0_92 = arith.constant 0 : index
    %c0_93 = arith.constant 0 : index
    %c0_94 = arith.constant 0 : index
    %c0_95 = arith.constant 0 : index
    %83 = vector.load %arg5[%c0_92, %c0_93, %c0_94, %c0_95] : memref<1x1x4x128xbf16, #tpu.memory_space<vmem>>, vector<1x1x4x72xbf16>
    %84 = vector.shape_cast %83 : vector<1x1x4x72xbf16> to vector<4x72xbf16>
    %c3_96 = arith.constant 3 : index
    %c0_97 = arith.constant 0 : index
    %c0_98 = arith.constant 0 : index
    %85 = vector.load %arg6[%c3_96, %c0_97, %c0_98] : memref<9x8x4xbf16, #tpu.memory_space<vmem>>, vector<1x8x4xbf16>
    %86 = vector.shape_cast %85 : vector<1x8x4xbf16> to vector<8x4xbf16>
    %cst_99 = arith.constant dense<0.000000e+00> : vector<8x72xf32>
    %87 = tpu.matmul %86, %84, %cst_99 {dimension_numbers = #tpu.dot_dimension_numbers<[1], [0], [0], [1], [0, 0, 1, 1], [], []>} : vector<8x4xbf16>, vector<4x72xbf16>, vector<8x72xf32> -> vector<8x72xf32>
    %88 = arith.addf %82, %87 : vector<8x72xf32>
    %c0_100 = arith.constant 0 : index
    %c0_101 = arith.constant 0 : index
    %c0_102 = arith.constant 0 : index
    %c1_103 = arith.constant 1 : index
    %89 = vector.load %arg4[%c0_100, %c0_101, %c0_102, %c1_103] : memref<1x1x4x128xbf16, #tpu.memory_space<vmem>>, vector<1x1x4x72xbf16>
    %90 = vector.shape_cast %89 : vector<1x1x4x72xbf16> to vector<4x72xbf16>
    %c4_104 = arith.constant 4 : index
    %c0_105 = arith.constant 0 : index
    %c0_106 = arith.constant 0 : index
    %91 = vector.load %arg6[%c4_104, %c0_105, %c0_106] : memref<9x8x4xbf16, #tpu.memory_space<vmem>>, vector<1x8x4xbf16>
    %92 = vector.shape_cast %91 : vector<1x8x4xbf16> to vector<8x4xbf16>
    %cst_107 = arith.constant dense<0.000000e+00> : vector<8x72xf32>
    %93 = tpu.matmul %92, %90, %cst_107 {dimension_numbers = #tpu.dot_dimension_numbers<[1], [0], [0], [1], [0, 0, 1, 1], [], []>} : vector<8x4xbf16>, vector<4x72xbf16>, vector<8x72xf32> -> vector<8x72xf32>
    %94 = arith.addf %88, %93 : vector<8x72xf32>
    %c0_108 = arith.constant 0 : index
    %c0_109 = arith.constant 0 : index
    %c0_110 = arith.constant 0 : index
    %c1_111 = arith.constant 1 : index
    %95 = vector.load %arg5[%c0_108, %c0_109, %c0_110, %c1_111] : memref<1x1x4x128xbf16, #tpu.memory_space<vmem>>, vector<1x1x4x72xbf16>
    %96 = vector.shape_cast %95 : vector<1x1x4x72xbf16> to vector<4x72xbf16>
    %c5_112 = arith.constant 5 : index
    %c0_113 = arith.constant 0 : index
    %c0_114 = arith.constant 0 : index
    %97 = vector.load %arg6[%c5_112, %c0_113, %c0_114] : memref<9x8x4xbf16, #tpu.memory_space<vmem>>, vector<1x8x4xbf16>
    %98 = vector.shape_cast %97 : vector<1x8x4xbf16> to vector<8x4xbf16>
    %cst_115 = arith.constant dense<0.000000e+00> : vector<8x72xf32>
    %99 = tpu.matmul %98, %96, %cst_115 {dimension_numbers = #tpu.dot_dimension_numbers<[1], [0], [0], [1], [0, 0, 1, 1], [], []>} : vector<8x4xbf16>, vector<4x72xbf16>, vector<8x72xf32> -> vector<8x72xf32>
    %100 = arith.addf %94, %99 : vector<8x72xf32>
    %c0_116 = arith.constant 0 : index
    %c0_117 = arith.constant 0 : index
    %c0_118 = arith.constant 0 : index
    %c9_119 = arith.constant 9 : index
    %101 = vector.load %arg3[%c0_116, %c0_117, %c0_118, %c9_119] : memref<1x1x4x128xbf16, #tpu.memory_space<vmem>>, vector<1x1x4x72xbf16>
    %102 = vector.shape_cast %101 : vector<1x1x4x72xbf16> to vector<4x72xbf16>
    %c6_120 = arith.constant 6 : index
    %c0_121 = arith.constant 0 : index
    %c0_122 = arith.constant 0 : index
    %103 = vector.load %arg6[%c6_120, %c0_121, %c0_122] : memref<9x8x4xbf16, #tpu.memory_space<vmem>>, vector<1x8x4xbf16>
    %104 = vector.shape_cast %103 : vector<1x8x4xbf16> to vector<8x4xbf16>
    %cst_123 = arith.constant dense<0.000000e+00> : vector<8x72xf32>
    %105 = tpu.matmul %104, %102, %cst_123 {dimension_numbers = #tpu.dot_dimension_numbers<[1], [0], [0], [1], [0, 0, 1, 1], [], []>} : vector<8x4xbf16>, vector<4x72xbf16>, vector<8x72xf32> -> vector<8x72xf32>
    %106 = arith.addf %100, %105 : vector<8x72xf32>
    %c0_124 = arith.constant 0 : index
    %c0_125 = arith.constant 0 : index
    %c0_126 = arith.constant 0 : index
    %c10_127 = arith.constant 10 : index
    %107 = vector.load %arg2[%c0_124, %c0_125, %c0_126, %c10_127] : memref<1x1x4x128xbf16, #tpu.memory_space<vmem>>, vector<1x1x4x72xbf16>
    %108 = vector.shape_cast %107 : vector<1x1x4x72xbf16> to vector<4x72xbf16>
    %c7_128 = arith.constant 7 : index
    %c0_129 = arith.constant 0 : index
    %c0_130 = arith.constant 0 : index
    %109 = vector.load %arg6[%c7_128, %c0_129, %c0_130] : memref<9x8x4xbf16, #tpu.memory_space<vmem>>, vector<1x8x4xbf16>
    %110 = vector.shape_cast %109 : vector<1x8x4xbf16> to vector<8x4xbf16>
    %cst_131 = arith.constant dense<0.000000e+00> : vector<8x72xf32>
    %111 = tpu.matmul %110, %108, %cst_131 {dimension_numbers = #tpu.dot_dimension_numbers<[1], [0], [0], [1], [0, 0, 1, 1], [], []>} : vector<8x4xbf16>, vector<4x72xbf16>, vector<8x72xf32> -> vector<8x72xf32>
    %112 = arith.addf %106, %111 : vector<8x72xf32>
    %c0_132 = arith.constant 0 : index
    %c0_133 = arith.constant 0 : index
    %c0_134 = arith.constant 0 : index
    %c10_135 = arith.constant 10 : index
    %113 = vector.load %arg3[%c0_132, %c0_133, %c0_134, %c10_135] : memref<1x1x4x128xbf16, #tpu.memory_space<vmem>>, vector<1x1x4x72xbf16>
    %114 = vector.shape_cast %113 : vector<1x1x4x72xbf16> to vector<4x72xbf16>
    %c8_136 = arith.constant 8 : index
    %c0_137 = arith.constant 0 : index
    %c0_138 = arith.constant 0 : index
    %115 = vector.load %arg6[%c8_136, %c0_137, %c0_138] : memref<9x8x4xbf16, #tpu.memory_space<vmem>>, vector<1x8x4xbf16>
    %116 = vector.shape_cast %115 : vector<1x8x4xbf16> to vector<8x4xbf16>
    %cst_139 = arith.constant dense<0.000000e+00> : vector<8x72xf32>
    %117 = tpu.matmul %116, %114, %cst_139 {dimension_numbers = #tpu.dot_dimension_numbers<[1], [0], [0], [1], [0, 0, 1, 1], [], []>} : vector<8x4xbf16>, vector<4x72xbf16>, vector<8x72xf32> -> vector<8x72xf32>
    %118 = arith.addf %112, %117 : vector<8x72xf32>
    %c0_140 = arith.constant 0 : index
    %c0_141 = arith.constant 0 : index
    %119 = vector.load %arg7[%c0_140, %c0_141] : memref<8x1xf32, #tpu.memory_space<vmem>>, vector<8x1xf32>
    %120 = vector.broadcast %119 : vector<8x1xf32> to vector<8x72xf32>
    %121 = arith.addf %118, %120 : vector<8x72xf32>
    %cst_142 = arith.constant 2.000000e-01 : f32
    %122 = vector.broadcast %cst_142 : f32 to vector<8x72xf32>
    %123 = arith.mulf %122, %121 : vector<8x72xf32>
    %124 = arith.maximumf %121, %123 : vector<8x72xf32>
    %125 = arith.truncf %124 : vector<8x72xf32> to vector<8x72xbf16>
    %c1_143 = arith.constant 1 : index
    %c0_144 = arith.constant 0 : index
    %c0_145 = arith.constant 0 : index
    %126 = vector.load %arg8[%c1_143, %c0_144, %c0_145] : memref<4x8x8xbf16, #tpu.memory_space<vmem>>, vector<1x8x8xbf16>
    %127 = vector.shape_cast %126 : vector<1x8x8xbf16> to vector<8x8xbf16>
    %cst_146 = arith.constant dense<0.000000e+00> : vector<8x72xf32>
    %128 = tpu.matmul %127, %125, %cst_146 {dimension_numbers = #tpu.dot_dimension_numbers<[1], [0], [0], [1], [0, 0, 1, 1], [], []>} : vector<8x8xbf16>, vector<8x72xbf16>, vector<8x72xf32> -> vector<8x72xf32>
    %129 = arith.addf %65, %128 : vector<8x72xf32>
    %c0_147 = arith.constant 0 : index
    %c0_148 = arith.constant 0 : index
    %c0_149 = arith.constant 0 : index
    %c0_150 = arith.constant 0 : index
    %130 = vector.load %arg4[%c0_147, %c0_148, %c0_149, %c0_150] : memref<1x1x4x128xbf16, #tpu.memory_space<vmem>>, vector<1x1x4x72xbf16>
    %131 = vector.shape_cast %130 : vector<1x1x4x72xbf16> to vector<4x72xbf16>
    %c0_151 = arith.constant 0 : index
    %c0_152 = arith.constant 0 : index
    %c0_153 = arith.constant 0 : index
    %132 = vector.load %arg6[%c0_151, %c0_152, %c0_153] : memref<9x8x4xbf16, #tpu.memory_space<vmem>>, vector<1x8x4xbf16>
    %133 = vector.shape_cast %132 : vector<1x8x4xbf16> to vector<8x4xbf16>
    %cst_154 = arith.constant dense<0.000000e+00> : vector<8x72xf32>
    %134 = tpu.matmul %133, %131, %cst_154 {dimension_numbers = #tpu.dot_dimension_numbers<[1], [0], [0], [1], [0, 0, 1, 1], [], []>} : vector<8x4xbf16>, vector<4x72xbf16>, vector<8x72xf32> -> vector<8x72xf32>
    %c0_155 = arith.constant 0 : index
    %c0_156 = arith.constant 0 : index
    %c0_157 = arith.constant 0 : index
    %c0_158 = arith.constant 0 : index
    %135 = vector.load %arg5[%c0_155, %c0_156, %c0_157, %c0_158] : memref<1x1x4x128xbf16, #tpu.memory_space<vmem>>, vector<1x1x4x72xbf16>
    %136 = vector.shape_cast %135 : vector<1x1x4x72xbf16> to vector<4x72xbf16>
    %c1_159 = arith.constant 1 : index
    %c0_160 = arith.constant 0 : index
    %c0_161 = arith.constant 0 : index
    %137 = vector.load %arg6[%c1_159, %c0_160, %c0_161] : memref<9x8x4xbf16, #tpu.memory_space<vmem>>, vector<1x8x4xbf16>
    %138 = vector.shape_cast %137 : vector<1x8x4xbf16> to vector<8x4xbf16>
    %cst_162 = arith.constant dense<0.000000e+00> : vector<8x72xf32>
    %139 = tpu.matmul %138, %136, %cst_162 {dimension_numbers = #tpu.dot_dimension_numbers<[1], [0], [0], [1], [0, 0, 1, 1], [], []>} : vector<8x4xbf16>, vector<4x72xbf16>, vector<8x72xf32> -> vector<8x72xf32>
    %140 = arith.addf %134, %139 : vector<8x72xf32>
    %c0_163 = arith.constant 0 : index
    %c0_164 = arith.constant 0 : index
    %c0_165 = arith.constant 0 : index
    %c1_166 = arith.constant 1 : index
    %141 = vector.load %arg4[%c0_163, %c0_164, %c0_165, %c1_166] : memref<1x1x4x128xbf16, #tpu.memory_space<vmem>>, vector<1x1x4x72xbf16>
    %142 = vector.shape_cast %141 : vector<1x1x4x72xbf16> to vector<4x72xbf16>
    %c2_167 = arith.constant 2 : index
    %c0_168 = arith.constant 0 : index
    %c0_169 = arith.constant 0 : index
    %143 = vector.load %arg6[%c2_167, %c0_168, %c0_169] : memref<9x8x4xbf16, #tpu.memory_space<vmem>>, vector<1x8x4xbf16>
    %144 = vector.shape_cast %143 : vector<1x8x4xbf16> to vector<8x4xbf16>
    %cst_170 = arith.constant dense<0.000000e+00> : vector<8x72xf32>
    %145 = tpu.matmul %144, %142, %cst_170 {dimension_numbers = #tpu.dot_dimension_numbers<[1], [0], [0], [1], [0, 0, 1, 1], [], []>} : vector<8x4xbf16>, vector<4x72xbf16>, vector<8x72xf32> -> vector<8x72xf32>
    %146 = arith.addf %140, %145 : vector<8x72xf32>
    %c0_171 = arith.constant 0 : index
    %c0_172 = arith.constant 0 : index
    %c0_173 = arith.constant 0 : index
    %c9_174 = arith.constant 9 : index
    %147 = vector.load %arg2[%c0_171, %c0_172, %c0_173, %c9_174] : memref<1x1x4x128xbf16, #tpu.memory_space<vmem>>, vector<1x1x4x72xbf16>
    %148 = vector.shape_cast %147 : vector<1x1x4x72xbf16> to vector<4x72xbf16>
    %c3_175 = arith.constant 3 : index
    %c0_176 = arith.constant 0 : index
    %c0_177 = arith.constant 0 : index
    %149 = vector.load %arg6[%c3_175, %c0_176, %c0_177] : memref<9x8x4xbf16, #tpu.memory_space<vmem>>, vector<1x8x4xbf16>
    %150 = vector.shape_cast %149 : vector<1x8x4xbf16> to vector<8x4xbf16>
    %cst_178 = arith.constant dense<0.000000e+00> : vector<8x72xf32>
    %151 = tpu.matmul %150, %148, %cst_178 {dimension_numbers = #tpu.dot_dimension_numbers<[1], [0], [0], [1], [0, 0, 1, 1], [], []>} : vector<8x4xbf16>, vector<4x72xbf16>, vector<8x72xf32> -> vector<8x72xf32>
    %152 = arith.addf %146, %151 : vector<8x72xf32>
    %c0_179 = arith.constant 0 : index
    %c0_180 = arith.constant 0 : index
    %c0_181 = arith.constant 0 : index
    %c9_182 = arith.constant 9 : index
    %153 = vector.load %arg3[%c0_179, %c0_180, %c0_181, %c9_182] : memref<1x1x4x128xbf16, #tpu.memory_space<vmem>>, vector<1x1x4x72xbf16>
    %154 = vector.shape_cast %153 : vector<1x1x4x72xbf16> to vector<4x72xbf16>
    %c4_183 = arith.constant 4 : index
    %c0_184 = arith.constant 0 : index
    %c0_185 = arith.constant 0 : index
    %155 = vector.load %arg6[%c4_183, %c0_184, %c0_185] : memref<9x8x4xbf16, #tpu.memory_space<vmem>>, vector<1x8x4xbf16>
    %156 = vector.shape_cast %155 : vector<1x8x4xbf16> to vector<8x4xbf16>
    %cst_186 = arith.constant dense<0.000000e+00> : vector<8x72xf32>
    %157 = tpu.matmul %156, %154, %cst_186 {dimension_numbers = #tpu.dot_dimension_numbers<[1], [0], [0], [1], [0, 0, 1, 1], [], []>} : vector<8x4xbf16>, vector<4x72xbf16>, vector<8x72xf32> -> vector<8x72xf32>
    %158 = arith.addf %152, %157 : vector<8x72xf32>
    %c0_187 = arith.constant 0 : index
    %c0_188 = arith.constant 0 : index
    %c0_189 = arith.constant 0 : index
    %c10_190 = arith.constant 10 : index
    %159 = vector.load %arg2[%c0_187, %c0_188, %c0_189, %c10_190] : memref<1x1x4x128xbf16, #tpu.memory_space<vmem>>, vector<1x1x4x72xbf16>
    %160 = vector.shape_cast %159 : vector<1x1x4x72xbf16> to vector<4x72xbf16>
    %c5_191 = arith.constant 5 : index
    %c0_192 = arith.constant 0 : index
    %c0_193 = arith.constant 0 : index
    %161 = vector.load %arg6[%c5_191, %c0_192, %c0_193] : memref<9x8x4xbf16, #tpu.memory_space<vmem>>, vector<1x8x4xbf16>
    %162 = vector.shape_cast %161 : vector<1x8x4xbf16> to vector<8x4xbf16>
    %cst_194 = arith.constant dense<0.000000e+00> : vector<8x72xf32>
    %163 = tpu.matmul %162, %160, %cst_194 {dimension_numbers = #tpu.dot_dimension_numbers<[1], [0], [0], [1], [0, 0, 1, 1], [], []>} : vector<8x4xbf16>, vector<4x72xbf16>, vector<8x72xf32> -> vector<8x72xf32>
    %164 = arith.addf %158, %163 : vector<8x72xf32>
    %c0_195 = arith.constant 0 : index
    %c0_196 = arith.constant 0 : index
    %c0_197 = arith.constant 0 : index
    %c9_198 = arith.constant 9 : index
    %165 = vector.load %arg4[%c0_195, %c0_196, %c0_197, %c9_198] : memref<1x1x4x128xbf16, #tpu.memory_space<vmem>>, vector<1x1x4x72xbf16>
    %166 = vector.shape_cast %165 : vector<1x1x4x72xbf16> to vector<4x72xbf16>
    %c6_199 = arith.constant 6 : index
    %c0_200 = arith.constant 0 : index
    %c0_201 = arith.constant 0 : index
    %167 = vector.load %arg6[%c6_199, %c0_200, %c0_201] : memref<9x8x4xbf16, #tpu.memory_space<vmem>>, vector<1x8x4xbf16>
    %168 = vector.shape_cast %167 : vector<1x8x4xbf16> to vector<8x4xbf16>
    %cst_202 = arith.constant dense<0.000000e+00> : vector<8x72xf32>
    %169 = tpu.matmul %168, %166, %cst_202 {dimension_numbers = #tpu.dot_dimension_numbers<[1], [0], [0], [1], [0, 0, 1, 1], [], []>} : vector<8x4xbf16>, vector<4x72xbf16>, vector<8x72xf32> -> vector<8x72xf32>
    %170 = arith.addf %164, %169 : vector<8x72xf32>
    %c0_203 = arith.constant 0 : index
    %c0_204 = arith.constant 0 : index
    %c0_205 = arith.constant 0 : index
    %c9_206 = arith.constant 9 : index
    %171 = vector.load %arg5[%c0_203, %c0_204, %c0_205, %c9_206] : memref<1x1x4x128xbf16, #tpu.memory_space<vmem>>, vector<1x1x4x72xbf16>
    %172 = vector.shape_cast %171 : vector<1x1x4x72xbf16> to vector<4x72xbf16>
    %c7_207 = arith.constant 7 : index
    %c0_208 = arith.constant 0 : index
    %c0_209 = arith.constant 0 : index
    %173 = vector.load %arg6[%c7_207, %c0_208, %c0_209] : memref<9x8x4xbf16, #tpu.memory_space<vmem>>, vector<1x8x4xbf16>
    %174 = vector.shape_cast %173 : vector<1x8x4xbf16> to vector<8x4xbf16>
    %cst_210 = arith.constant dense<0.000000e+00> : vector<8x72xf32>
    %175 = tpu.matmul %174, %172, %cst_210 {dimension_numbers = #tpu.dot_dimension_numbers<[1], [0], [0], [1], [0, 0, 1, 1], [], []>} : vector<8x4xbf16>, vector<4x72xbf16>, vector<8x72xf32> -> vector<8x72xf32>
    %176 = arith.addf %170, %175 : vector<8x72xf32>
    %c0_211 = arith.constant 0 : index
    %c0_212 = arith.constant 0 : index
    %c0_213 = arith.constant 0 : index
    %c10_214 = arith.constant 10 : index
    %177 = vector.load %arg4[%c0_211, %c0_212, %c0_213, %c10_214] : memref<1x1x4x128xbf16, #tpu.memory_space<vmem>>, vector<1x1x4x72xbf16>
    %178 = vector.shape_cast %177 : vector<1x1x4x72xbf16> to vector<4x72xbf16>
    %c8_215 = arith.constant 8 : index
    %c0_216 = arith.constant 0 : index
    %c0_217 = arith.constant 0 : index
    %179 = vector.load %arg6[%c8_215, %c0_216, %c0_217] : memref<9x8x4xbf16, #tpu.memory_space<vmem>>, vector<1x8x4xbf16>
    %180 = vector.shape_cast %179 : vector<1x8x4xbf16> to vector<8x4xbf16>
    %cst_218 = arith.constant dense<0.000000e+00> : vector<8x72xf32>
    %181 = tpu.matmul %180, %178, %cst_218 {dimension_numbers = #tpu.dot_dimension_numbers<[1], [0], [0], [1], [0, 0, 1, 1], [], []>} : vector<8x4xbf16>, vector<4x72xbf16>, vector<8x72xf32> -> vector<8x72xf32>
    %182 = arith.addf %176, %181 : vector<8x72xf32>
    %c0_219 = arith.constant 0 : index
    %c0_220 = arith.constant 0 : index
    %183 = vector.load %arg7[%c0_219, %c0_220] : memref<8x1xf32, #tpu.memory_space<vmem>>, vector<8x1xf32>
    %184 = vector.broadcast %183 : vector<8x1xf32> to vector<8x72xf32>
    %185 = arith.addf %182, %184 : vector<8x72xf32>
    %cst_221 = arith.constant 2.000000e-01 : f32
    %186 = vector.broadcast %cst_221 : f32 to vector<8x72xf32>
    %187 = arith.mulf %186, %185 : vector<8x72xf32>
    %188 = arith.maximumf %185, %187 : vector<8x72xf32>
    %189 = arith.truncf %188 : vector<8x72xf32> to vector<8x72xbf16>
    %c2_222 = arith.constant 2 : index
    %c0_223 = arith.constant 0 : index
    %c0_224 = arith.constant 0 : index
    %190 = vector.load %arg8[%c2_222, %c0_223, %c0_224] : memref<4x8x8xbf16, #tpu.memory_space<vmem>>, vector<1x8x8xbf16>
    %191 = vector.shape_cast %190 : vector<1x8x8xbf16> to vector<8x8xbf16>
    %cst_225 = arith.constant dense<0.000000e+00> : vector<8x72xf32>
    %192 = tpu.matmul %191, %189, %cst_225 {dimension_numbers = #tpu.dot_dimension_numbers<[1], [0], [0], [1], [0, 0, 1, 1], [], []>} : vector<8x8xbf16>, vector<8x72xbf16>, vector<8x72xf32> -> vector<8x72xf32>
    %193 = arith.addf %129, %192 : vector<8x72xf32>
    %c0_226 = arith.constant 0 : index
    %c0_227 = arith.constant 0 : index
    %c0_228 = arith.constant 0 : index
    %c0_229 = arith.constant 0 : index
    %194 = vector.load %arg5[%c0_226, %c0_227, %c0_228, %c0_229] : memref<1x1x4x128xbf16, #tpu.memory_space<vmem>>, vector<1x1x4x72xbf16>
    %195 = vector.shape_cast %194 : vector<1x1x4x72xbf16> to vector<4x72xbf16>
    %c0_230 = arith.constant 0 : index
    %c0_231 = arith.constant 0 : index
    %c0_232 = arith.constant 0 : index
    %196 = vector.load %arg6[%c0_230, %c0_231, %c0_232] : memref<9x8x4xbf16, #tpu.memory_space<vmem>>, vector<1x8x4xbf16>
    %197 = vector.shape_cast %196 : vector<1x8x4xbf16> to vector<8x4xbf16>
    %cst_233 = arith.constant dense<0.000000e+00> : vector<8x72xf32>
    %198 = tpu.matmul %197, %195, %cst_233 {dimension_numbers = #tpu.dot_dimension_numbers<[1], [0], [0], [1], [0, 0, 1, 1], [], []>} : vector<8x4xbf16>, vector<4x72xbf16>, vector<8x72xf32> -> vector<8x72xf32>
    %c0_234 = arith.constant 0 : index
    %c0_235 = arith.constant 0 : index
    %c0_236 = arith.constant 0 : index
    %c1_237 = arith.constant 1 : index
    %199 = vector.load %arg4[%c0_234, %c0_235, %c0_236, %c1_237] : memref<1x1x4x128xbf16, #tpu.memory_space<vmem>>, vector<1x1x4x72xbf16>
    %200 = vector.shape_cast %199 : vector<1x1x4x72xbf16> to vector<4x72xbf16>
    %c1_238 = arith.constant 1 : index
    %c0_239 = arith.constant 0 : index
    %c0_240 = arith.constant 0 : index
    %201 = vector.load %arg6[%c1_238, %c0_239, %c0_240] : memref<9x8x4xbf16, #tpu.memory_space<vmem>>, vector<1x8x4xbf16>
    %202 = vector.shape_cast %201 : vector<1x8x4xbf16> to vector<8x4xbf16>
    %cst_241 = arith.constant dense<0.000000e+00> : vector<8x72xf32>
    %203 = tpu.matmul %202, %200, %cst_241 {dimension_numbers = #tpu.dot_dimension_numbers<[1], [0], [0], [1], [0, 0, 1, 1], [], []>} : vector<8x4xbf16>, vector<4x72xbf16>, vector<8x72xf32> -> vector<8x72xf32>
    %204 = arith.addf %198, %203 : vector<8x72xf32>
    %c0_242 = arith.constant 0 : index
    %c0_243 = arith.constant 0 : index
    %c0_244 = arith.constant 0 : index
    %c1_245 = arith.constant 1 : index
    %205 = vector.load %arg5[%c0_242, %c0_243, %c0_244, %c1_245] : memref<1x1x4x128xbf16, #tpu.memory_space<vmem>>, vector<1x1x4x72xbf16>
    %206 = vector.shape_cast %205 : vector<1x1x4x72xbf16> to vector<4x72xbf16>
    %c2_246 = arith.constant 2 : index
    %c0_247 = arith.constant 0 : index
    %c0_248 = arith.constant 0 : index
    %207 = vector.load %arg6[%c2_246, %c0_247, %c0_248] : memref<9x8x4xbf16, #tpu.memory_space<vmem>>, vector<1x8x4xbf16>
    %208 = vector.shape_cast %207 : vector<1x8x4xbf16> to vector<8x4xbf16>
    %cst_249 = arith.constant dense<0.000000e+00> : vector<8x72xf32>
    %209 = tpu.matmul %208, %206, %cst_249 {dimension_numbers = #tpu.dot_dimension_numbers<[1], [0], [0], [1], [0, 0, 1, 1], [], []>} : vector<8x4xbf16>, vector<4x72xbf16>, vector<8x72xf32> -> vector<8x72xf32>
    %210 = arith.addf %204, %209 : vector<8x72xf32>
    %c0_250 = arith.constant 0 : index
    %c0_251 = arith.constant 0 : index
    %c0_252 = arith.constant 0 : index
    %c9_253 = arith.constant 9 : index
    %211 = vector.load %arg3[%c0_250, %c0_251, %c0_252, %c9_253] : memref<1x1x4x128xbf16, #tpu.memory_space<vmem>>, vector<1x1x4x72xbf16>
    %212 = vector.shape_cast %211 : vector<1x1x4x72xbf16> to vector<4x72xbf16>
    %c3_254 = arith.constant 3 : index
    %c0_255 = arith.constant 0 : index
    %c0_256 = arith.constant 0 : index
    %213 = vector.load %arg6[%c3_254, %c0_255, %c0_256] : memref<9x8x4xbf16, #tpu.memory_space<vmem>>, vector<1x8x4xbf16>
    %214 = vector.shape_cast %213 : vector<1x8x4xbf16> to vector<8x4xbf16>
    %cst_257 = arith.constant dense<0.000000e+00> : vector<8x72xf32>
    %215 = tpu.matmul %214, %212, %cst_257 {dimension_numbers = #tpu.dot_dimension_numbers<[1], [0], [0], [1], [0, 0, 1, 1], [], []>} : vector<8x4xbf16>, vector<4x72xbf16>, vector<8x72xf32> -> vector<8x72xf32>
    %216 = arith.addf %210, %215 : vector<8x72xf32>
    %c0_258 = arith.constant 0 : index
    %c0_259 = arith.constant 0 : index
    %c0_260 = arith.constant 0 : index
    %c10_261 = arith.constant 10 : index
    %217 = vector.load %arg2[%c0_258, %c0_259, %c0_260, %c10_261] : memref<1x1x4x128xbf16, #tpu.memory_space<vmem>>, vector<1x1x4x72xbf16>
    %218 = vector.shape_cast %217 : vector<1x1x4x72xbf16> to vector<4x72xbf16>
    %c4_262 = arith.constant 4 : index
    %c0_263 = arith.constant 0 : index
    %c0_264 = arith.constant 0 : index
    %219 = vector.load %arg6[%c4_262, %c0_263, %c0_264] : memref<9x8x4xbf16, #tpu.memory_space<vmem>>, vector<1x8x4xbf16>
    %220 = vector.shape_cast %219 : vector<1x8x4xbf16> to vector<8x4xbf16>
    %cst_265 = arith.constant dense<0.000000e+00> : vector<8x72xf32>
    %221 = tpu.matmul %220, %218, %cst_265 {dimension_numbers = #tpu.dot_dimension_numbers<[1], [0], [0], [1], [0, 0, 1, 1], [], []>} : vector<8x4xbf16>, vector<4x72xbf16>, vector<8x72xf32> -> vector<8x72xf32>
    %222 = arith.addf %216, %221 : vector<8x72xf32>
    %c0_266 = arith.constant 0 : index
    %c0_267 = arith.constant 0 : index
    %c0_268 = arith.constant 0 : index
    %c10_269 = arith.constant 10 : index
    %223 = vector.load %arg3[%c0_266, %c0_267, %c0_268, %c10_269] : memref<1x1x4x128xbf16, #tpu.memory_space<vmem>>, vector<1x1x4x72xbf16>
    %224 = vector.shape_cast %223 : vector<1x1x4x72xbf16> to vector<4x72xbf16>
    %c5_270 = arith.constant 5 : index
    %c0_271 = arith.constant 0 : index
    %c0_272 = arith.constant 0 : index
    %225 = vector.load %arg6[%c5_270, %c0_271, %c0_272] : memref<9x8x4xbf16, #tpu.memory_space<vmem>>, vector<1x8x4xbf16>
    %226 = vector.shape_cast %225 : vector<1x8x4xbf16> to vector<8x4xbf16>
    %cst_273 = arith.constant dense<0.000000e+00> : vector<8x72xf32>
    %227 = tpu.matmul %226, %224, %cst_273 {dimension_numbers = #tpu.dot_dimension_numbers<[1], [0], [0], [1], [0, 0, 1, 1], [], []>} : vector<8x4xbf16>, vector<4x72xbf16>, vector<8x72xf32> -> vector<8x72xf32>
    %228 = arith.addf %222, %227 : vector<8x72xf32>
    %c0_274 = arith.constant 0 : index
    %c0_275 = arith.constant 0 : index
    %c0_276 = arith.constant 0 : index
    %c9_277 = arith.constant 9 : index
    %229 = vector.load %arg5[%c0_274, %c0_275, %c0_276, %c9_277] : memref<1x1x4x128xbf16, #tpu.memory_space<vmem>>, vector<1x1x4x72xbf16>
    %230 = vector.shape_cast %229 : vector<1x1x4x72xbf16> to vector<4x72xbf16>
    %c6_278 = arith.constant 6 : index
    %c0_279 = arith.constant 0 : index
    %c0_280 = arith.constant 0 : index
    %231 = vector.load %arg6[%c6_278, %c0_279, %c0_280] : memref<9x8x4xbf16, #tpu.memory_space<vmem>>, vector<1x8x4xbf16>
    %232 = vector.shape_cast %231 : vector<1x8x4xbf16> to vector<8x4xbf16>
    %cst_281 = arith.constant dense<0.000000e+00> : vector<8x72xf32>
    %233 = tpu.matmul %232, %230, %cst_281 {dimension_numbers = #tpu.dot_dimension_numbers<[1], [0], [0], [1], [0, 0, 1, 1], [], []>} : vector<8x4xbf16>, vector<4x72xbf16>, vector<8x72xf32> -> vector<8x72xf32>
    %234 = arith.addf %228, %233 : vector<8x72xf32>
    %c0_282 = arith.constant 0 : index
    %c0_283 = arith.constant 0 : index
    %c0_284 = arith.constant 0 : index
    %c10_285 = arith.constant 10 : index
    %235 = vector.load %arg4[%c0_282, %c0_283, %c0_284, %c10_285] : memref<1x1x4x128xbf16, #tpu.memory_space<vmem>>, vector<1x1x4x72xbf16>
    %236 = vector.shape_cast %235 : vector<1x1x4x72xbf16> to vector<4x72xbf16>
    %c7_286 = arith.constant 7 : index
    %c0_287 = arith.constant 0 : index
    %c0_288 = arith.constant 0 : index
    %237 = vector.load %arg6[%c7_286, %c0_287, %c0_288] : memref<9x8x4xbf16, #tpu.memory_space<vmem>>, vector<1x8x4xbf16>
    %238 = vector.shape_cast %237 : vector<1x8x4xbf16> to vector<8x4xbf16>
    %cst_289 = arith.constant dense<0.000000e+00> : vector<8x72xf32>
    %239 = tpu.matmul %238, %236, %cst_289 {dimension_numbers = #tpu.dot_dimension_numbers<[1], [0], [0], [1], [0, 0, 1, 1], [], []>} : vector<8x4xbf16>, vector<4x72xbf16>, vector<8x72xf32> -> vector<8x72xf32>
    %240 = arith.addf %234, %239 : vector<8x72xf32>
    %c0_290 = arith.constant 0 : index
    %c0_291 = arith.constant 0 : index
    %c0_292 = arith.constant 0 : index
    %c10_293 = arith.constant 10 : index
    %241 = vector.load %arg5[%c0_290, %c0_291, %c0_292, %c10_293] : memref<1x1x4x128xbf16, #tpu.memory_space<vmem>>, vector<1x1x4x72xbf16>
    %242 = vector.shape_cast %241 : vector<1x1x4x72xbf16> to vector<4x72xbf16>
    %c8_294 = arith.constant 8 : index
    %c0_295 = arith.constant 0 : index
    %c0_296 = arith.constant 0 : index
    %243 = vector.load %arg6[%c8_294, %c0_295, %c0_296] : memref<9x8x4xbf16, #tpu.memory_space<vmem>>, vector<1x8x4xbf16>
    %244 = vector.shape_cast %243 : vector<1x8x4xbf16> to vector<8x4xbf16>
    %cst_297 = arith.constant dense<0.000000e+00> : vector<8x72xf32>
    %245 = tpu.matmul %244, %242, %cst_297 {dimension_numbers = #tpu.dot_dimension_numbers<[1], [0], [0], [1], [0, 0, 1, 1], [], []>} : vector<8x4xbf16>, vector<4x72xbf16>, vector<8x72xf32> -> vector<8x72xf32>
    %246 = arith.addf %240, %245 : vector<8x72xf32>
    %c0_298 = arith.constant 0 : index
    %c0_299 = arith.constant 0 : index
    %247 = vector.load %arg7[%c0_298, %c0_299] : memref<8x1xf32, #tpu.memory_space<vmem>>, vector<8x1xf32>
    %248 = vector.broadcast %247 : vector<8x1xf32> to vector<8x72xf32>
    %249 = arith.addf %246, %248 : vector<8x72xf32>
    %cst_300 = arith.constant 2.000000e-01 : f32
    %250 = vector.broadcast %cst_300 : f32 to vector<8x72xf32>
    %251 = arith.mulf %250, %249 : vector<8x72xf32>
    %252 = arith.maximumf %249, %251 : vector<8x72xf32>
    %253 = arith.truncf %252 : vector<8x72xf32> to vector<8x72xbf16>
    %c3_301 = arith.constant 3 : index
    %c0_302 = arith.constant 0 : index
    %c0_303 = arith.constant 0 : index
    %254 = vector.load %arg8[%c3_301, %c0_302, %c0_303] : memref<4x8x8xbf16, #tpu.memory_space<vmem>>, vector<1x8x8xbf16>
    %255 = vector.shape_cast %254 : vector<1x8x8xbf16> to vector<8x8xbf16>
    %cst_304 = arith.constant dense<0.000000e+00> : vector<8x72xf32>
    %256 = tpu.matmul %255, %253, %cst_304 {dimension_numbers = #tpu.dot_dimension_numbers<[1], [0], [0], [1], [0, 0, 1, 1], [], []>} : vector<8x8xbf16>, vector<8x72xbf16>, vector<8x72xf32> -> vector<8x72xf32>
    %257 = arith.addf %193, %256 : vector<8x72xf32>
    %258 = tpu.iota {dimensions = array<i32: 1>} : vector<8x72xi32>
    %c9_i32 = arith.constant 9 : i32
    %c0_i32_305 = arith.constant 0 : i32
    %259 = arith.cmpi eq, %c9_i32, %c0_i32_305 : i32
    %c1_i32 = arith.constant 1 : i32
    %260 = arith.select %259, %c1_i32, %c9_i32 : i32
    %261 = vector.broadcast %260 : i32 to vector<8x72xi32>
    %262 = arith.remsi %258, %261 : vector<8x72xi32>
    %c0_i32_306 = arith.constant 0 : i32
    %263 = vector.broadcast %c0_i32_306 : i32 to vector<8x72xi32>
    %264 = arith.cmpi ne, %262, %263 : vector<8x72xi32>
    %c0_i32_307 = arith.constant 0 : i32
    %265 = vector.broadcast %c0_i32_307 : i32 to vector<8x72xi32>
    %266 = arith.cmpi slt, %262, %265 : vector<8x72xi32>
    %c0_i32_308 = arith.constant 0 : i32
    %267 = arith.cmpi slt, %260, %c0_i32_308 : i32
    %268 = vector.broadcast %267 : i1 to vector<8x72xi1>
    %269 = vector.broadcast %268 : vector<8x72xi1> to vector<8x72xi1>
    %270 = arith.xori %266, %269 : vector<8x72xi1>
    %271 = arith.andi %270, %264 : vector<8x72xi1>
    %272 = vector.broadcast %260 : i32 to vector<8x72xi32>
    %273 = arith.addi %262, %272 : vector<8x72xi32>
    %274 = arith.select %271, %273, %262 : vector<8x72xi1>, vector<8x72xi32>
    %c8_i32 = arith.constant 8 : i32
    %275 = vector.broadcast %c8_i32 : i32 to vector<8x72xi32>
    %276 = arith.cmpi slt, %274, %275 : vector<8x72xi32>
    %cst_309 = arith.constant 0.000000e+00 : f32
    %277 = vector.broadcast %cst_309 : f32 to vector<8x72xf32>
    %278 = arith.select %276, %257, %277 : vector<8x72xi1>, vector<8x72xf32>
    %c0_310 = arith.constant 0 : index
    %c0_311 = arith.constant 0 : index
    %279 = vector.load %arg11[%c0_310, %c0_311] : memref<8x1xf32, #tpu.memory_space<vmem>>, vector<8x1xf32>
    %cst_312 = arith.constant dense<0.000000e+00> : vector<8xf32>
    %280 = vector.multi_reduction <add>, %278, %cst_312 [1] : vector<8x72xf32> to vector<8xf32>
    %281 = vector.shape_cast %280 : vector<8xf32> to vector<8x1xf32>
    %282 = arith.addf %279, %281 : vector<8x1xf32>
    %c0_313 = arith.constant 0 : index
    %c0_314 = arith.constant 0 : index
    %283 = vector.load %arg11[%c0_313, %c0_314] : memref<8x1xf32, #tpu.memory_space<vmem>>, vector<8x1xf32>
    tpu.vector_store %arg11[%c0_313, %c0_314], %282 {strides = array<i32>} : memref<8x1xf32, #tpu.memory_space<vmem>>, vector<8x1xf32>,
    %c0_315 = arith.constant 0 : index
    %c0_316 = arith.constant 0 : index
    %284 = vector.load %arg12[%c0_315, %c0_316] : memref<8x1xf32, #tpu.memory_space<vmem>>, vector<8x1xf32>
    %285 = arith.mulf %278, %278 : vector<8x72xf32>
    %cst_317 = arith.constant dense<0.000000e+00> : vector<8xf32>
    %286 = vector.multi_reduction <add>, %285, %cst_317 [1] : vector<8x72xf32> to vector<8xf32>
    %287 = vector.shape_cast %286 : vector<8xf32> to vector<8x1xf32>
    %288 = arith.addf %284, %287 : vector<8x1xf32>
    %c0_318 = arith.constant 0 : index
    %c0_319 = arith.constant 0 : index
    %289 = vector.load %arg12[%c0_318, %c0_319] : memref<8x1xf32, #tpu.memory_space<vmem>>, vector<8x1xf32>
    tpu.vector_store %arg12[%c0_318, %c0_319], %288 {strides = array<i32>} : memref<8x1xf32, #tpu.memory_space<vmem>>, vector<8x1xf32>,
    %290 = arith.truncf %257 : vector<8x72xf32> to vector<8x72xbf16>
    %c0_320 = arith.constant 0 : index
    %c0_321 = arith.constant 0 : index
    %c0_322 = arith.constant 0 : index
    %c0_323 = arith.constant 0 : index
    %291 = vector.load %arg9[%c0_320, %c0_321, %c0_322, %c0_323] : memref<1x1x8x72xbf16, #tpu.memory_space<vmem>>, vector<1x1x8x72xbf16>
    %292 = vector.shape_cast %291 : vector<1x1x8x72xbf16> to vector<8x72xbf16>
    %293 = vector.shape_cast %290 : vector<8x72xbf16> to vector<1x1x8x72xbf16>
    tpu.vector_store %arg9[%c0_320, %c0_321, %c0_322, %c0_323], %293 {strides = array<i32>} : memref<1x1x8x72xbf16, #tpu.memory_space<vmem>>, vector<1x1x8x72xbf16>,
    %c0_i32_324 = arith.constant 0 : i32
    %294 = arith.cmpi eq, %arg1, %c0_i32_324 : i32
    %295 = arith.extui %294 : i1 to i32
    %c0_i32_325 = arith.constant 0 : i32
    %296 = arith.cmpi ne, %295, %c0_i32_325 : i32
    scf.if %296 {
      %c0_326 = arith.constant 0 : index
      %c0_327 = arith.constant 0 : index
      %297 = vector.load %arg11[%c0_326, %c0_327] : memref<8x1xf32, #tpu.memory_space<vmem>>, vector<8x1xf32>
      %cst_328 = arith.constant 1.562500e-02 : f32
      %298 = vector.broadcast %cst_328 : f32 to vector<8x1xf32>
      %299 = arith.mulf %297, %298 : vector<8x1xf32>
      %c0_329 = arith.constant 0 : index
      %c0_330 = arith.constant 0 : index
      %300 = vector.load %arg12[%c0_329, %c0_330] : memref<8x1xf32, #tpu.memory_space<vmem>>, vector<8x1xf32>
      %cst_331 = arith.constant 1.562500e-02 : f32
      %301 = vector.broadcast %cst_331 : f32 to vector<8x1xf32>
      %302 = arith.mulf %300, %301 : vector<8x1xf32>
      %303 = arith.mulf %299, %299 : vector<8x1xf32>
      %304 = arith.subf %302, %303 : vector<8x1xf32>
      %cst_332 = arith.constant 0.000000e+00 : f32
      %305 = vector.broadcast %cst_332 : f32 to vector<8x1xf32>
      %306 = arith.maximumf %304, %305 : vector<8x1xf32>
      %c0_333 = arith.constant 0 : index
      %c0_334 = arith.constant 0 : index
      %c0_335 = arith.constant 0 : index
      %307 = vector.load %arg10[%c0_333, %c0_334, %c0_335] : memref<1x8x2xf32, #tpu.memory_space<vmem>>, vector<1x8x1xf32>
      %308 = vector.shape_cast %307 : vector<1x8x1xf32> to vector<8x1xf32>
      %309 = vector.shape_cast %299 : vector<8x1xf32> to vector<1x8x1xf32>
      tpu.vector_store %arg10[%c0_333, %c0_334, %c0_335], %309 {strides = array<i32>} : memref<1x8x2xf32, #tpu.memory_space<vmem>>, vector<1x8x1xf32>,
      %cst_336 = arith.constant 9.99999974E-6 : f32
      %310 = vector.broadcast %cst_336 : f32 to vector<8x1xf32>
      %311 = arith.addf %306, %310 : vector<8x1xf32>
      %312 = math.rsqrt %311 : vector<8x1xf32>
      %c0_337 = arith.constant 0 : index
      %c0_338 = arith.constant 0 : index
      %c1_339 = arith.constant 1 : index
      %313 = vector.load %arg10[%c0_337, %c0_338, %c1_339] : memref<1x8x2xf32, #tpu.memory_space<vmem>>, vector<1x8x1xf32>
      %314 = vector.shape_cast %313 : vector<1x8x1xf32> to vector<8x1xf32>
      %315 = vector.shape_cast %312 : vector<8x1xf32> to vector<1x8x1xf32>
      tpu.vector_store %arg10[%c0_337, %c0_338, %c1_339], %315 {strides = array<i32>} : memref<1x8x2xf32, #tpu.memory_space<vmem>>, vector<1x8x1xf32>,
    } else {
    }
    return
  }
  func.func @transform_0(%arg0: i32, %arg1: i32) -> (i32, i32, i32, i32) {
    %c0_i32 = arith.constant 0 : i32
    %c0_i32_0 = arith.constant 0 : i32
    %c0_i32_1 = arith.constant 0 : i32
    return %arg0, %arg1, %c0_i32, %c0_i32_0 : i32, i32, i32, i32
  }
  func.func @transform_1(%arg0: i32, %arg1: i32) -> (i32, i32, i32, i32) {
    %c0_i32 = arith.constant 0 : i32
    %c0_i32_0 = arith.constant 0 : i32
    %c0_i32_1 = arith.constant 0 : i32
    return %arg0, %arg1, %c0_i32, %c0_i32_0 : i32, i32, i32, i32
  }
  func.func @transform_2(%arg0: i32, %arg1: i32) -> (i32, i32, i32, i32) {
    %c0_i32 = arith.constant 0 : i32
    %c0_i32_0 = arith.constant 0 : i32
    %c0_i32_1 = arith.constant 0 : i32
    return %arg0, %arg1, %c0_i32, %c0_i32_0 : i32, i32, i32, i32
  }
  func.func @transform_3(%arg0: i32, %arg1: i32) -> (i32, i32, i32, i32) {
    %c0_i32 = arith.constant 0 : i32
    %c0_i32_0 = arith.constant 0 : i32
    %c0_i32_1 = arith.constant 0 : i32
    return %arg0, %arg1, %c0_i32, %c0_i32_0 : i32, i32, i32, i32
  }
  func.func @transform_4(%arg0: i32, %arg1: i32) -> (i32, i32, i32) {
    %c0_i32 = arith.constant 0 : i32
    %c0_i32_0 = arith.constant 0 : i32
    %c0_i32_1 = arith.constant 0 : i32
    %c0_i32_2 = arith.constant 0 : i32
    return %c0_i32, %c0_i32_0, %c0_i32_1 : i32, i32, i32
  }
  func.func @transform_5(%arg0: i32, %arg1: i32) -> (i32, i32) {
    %c0_i32 = arith.constant 0 : i32
    %c0_i32_0 = arith.constant 0 : i32
    %c0_i32_1 = arith.constant 0 : i32
    return %c0_i32, %c0_i32_0 : i32, i32
  }
  func.func @transform_6(%arg0: i32, %arg1: i32) -> (i32, i32, i32) {
    %c0_i32 = arith.constant 0 : i32
    %c0_i32_0 = arith.constant 0 : i32
    %c0_i32_1 = arith.constant 0 : i32
    %c0_i32_2 = arith.constant 0 : i32
    return %c0_i32, %c0_i32_0, %c0_i32_1 : i32, i32, i32
  }
  func.func @transform_7(%arg0: i32, %arg1: i32) -> (i32, i32, i32, i32) {
    %c0_i32 = arith.constant 0 : i32
    %c0_i32_0 = arith.constant 0 : i32
    %c0_i32_1 = arith.constant 0 : i32
    return %arg0, %arg1, %c0_i32, %c0_i32_0 : i32, i32, i32, i32
  }
  func.func @transform_8(%arg0: i32, %arg1: i32) -> (i32, i32, i32) {
    %c0_i32 = arith.constant 0 : i32
    %c0_i32_0 = arith.constant 0 : i32
    %c0_i32_1 = arith.constant 0 : i32
    return %arg0, %c0_i32, %c0_i32_0 : i32, i32, i32
  }
}

</mosaic_0001>

<llo_original>
// kernel: encoder_block_pallas.3
$region0: #{encoder_block_pallas.3}
  #allocation0 [shape = 'u32[]', space=smem, size = 0x4, offset = 0x4, fixed_abs, tag = 'smem constant byte address 0x4 - core index']
  #allocation1 [shape = 'u32[144,128]{1,0:T(1,128)}', space=vmem, size = 0x12000, scoped, tag = 'internal scratch']
  %s0 = inlined_call_operand.vmem [shape: bf16[2,1,4,384], index: 0, kind: input, shape index: {}]
  %s1 = inlined_call_operand.vmem [shape: bf16[9,4,4], index: 1, kind: input, shape index: {}]
  %s2 = inlined_call_operand.vmem [shape: f32[4,1], index: 2, kind: input, shape index: {}]
  %s3 = inlined_call_operand.vmem [shape: bf16[2,1,4,288], index: 3, kind: output, shape index: {}]
  %s4 = sld [smem:[#allocation0]]
  $region45: #{encoder_block_pallas.3} parent=0
    _
  %s6 = ssub.s32 1, %s4
  %s7 = scalar_select 0, %s6, %s4
  loop: start=0, step=1, limit=4
  $region2: #{encoder_block_pallas.3} parent=0 // loop_pre_header
    _
  $region3: #{encoder_block_pallas.3} parent=0 // loop_header
    %s9 = sphi 0, %s13
    %p10 = scmp.ge.s32.totalorder %s9, 4
    %s16 = sphi 0, %s28
    %s17 = sphi 0, %s24
    %s18 = sphi 0, %s16
    %s19 = sphi 0, %s17
    %s20 = sphi 0, %s18
    %s21 = sphi 0, %s19
    %s33 = sphi 0, %s35
    %s36 = sphi 0, %s33
    %s37 = sphi 0, %s36
    %s53 = sphi 0, %s37
    %s57 = sphi 0, %s57
    %s59 = sphi 0, %s57
    %s60 = sphi 0, %s59
    %s74 = sphi 0, %s60
    %s78 = sphi 0, %s78
    %s80 = sphi 0, %s78
    %s81 = sphi 0, %s80
    %s95 = sphi 0, %s81
    %s103 = sphi 0, %s105
    %s106 = sphi 0, %s103
    %s107 = sphi 0, %s106
    %s123 = sphi 0, %s107
  $region4: #{encoder_block_pallas.3} parent=0 // loop_header_branch
    %12 = sbr.rel (%p10) target = $region8
  $region5: #{encoder_block_pallas.3} parent=0 // loop_body
    %s14 = ssub.s32 %s9, 1
    %s15 = ssub.s32 %s9, 2
    %s22 = sadd.s32 1, %s17
    %p23 = scmp.ge.s32.totalorder %s22, 1
    %s24 = scalar_select %p23, 0, %s22
    %s25 = sadd.s32 1, %s16
    %s26 = scalar_select %p23, %s25, %s16
    %p27 = scmp.ge.s32.totalorder %s26, 2
    %s28 = scalar_select %p27, 0, %s26
    %s29 = ssub.s32 %s16, %s28
    %s30 = ssub.s32 %s17, %s24
    %s31 = sor.u32 %s29, %s30
    %p32 = scmp.eq.s32.totalorder %s31, 0
    %s34 = sadd.s32 %s33, 1
    %s35 = scalar_select %p32, %s33, %s34
    %p38 = pneg %p32
    %p39 = scmp.eq.s32.totalorder %s9, 1
    %p40 = por %p38, %p39
    %p41 = scmp.ne.s32.totalorder %s33, %s36
    %p42 = scmp.eq.s32.totalorder %s9, 0
    %p43 = por %p41, %p42
    %p44 = scmp.ne.s32.totalorder %s33, %s36
    %p45 = scmp.eq.s32.totalorder %s14, 1
    %p46 = por %p44, %p45
    %p47 = scmp.ne.s32.totalorder %s36, %s37
    %p48 = scmp.eq.s32.totalorder %s14, 0
    %p49 = por %p47, %p48
    %p50 = scmp.ne.s32.totalorder %s36, %s37
    %p51 = scmp.eq.s32.totalorder %s15, 1
    %p52 = por %p50, %p51
    %p54 = scmp.ne.s32.totalorder %s37, %s53
    %p55 = scmp.eq.s32.totalorder %s15, 0
    %p56 = por %p54, %p55
    %s58 = sadd.s32 %s57, 1
    %p61 = scmp.eq.s32.totalorder %s9, 1
    %p62 = scmp.ne.s32.totalorder %s57, %s59
    %p63 = scmp.eq.s32.totalorder %s9, 0
    %p64 = por %p62, %p63
    %p65 = scmp.ne.s32.totalorder %s57, %s59
    %p66 = scmp.eq.s32.totalorder %s14, 1
    %p67 = por %p65, %p66
    %p68 = scmp.ne.s32.totalorder %s59, %s60
    %p69 = scmp.eq.s32.totalorder %s14, 0
    %p70 = por %p68, %p69
    %p71 = scmp.ne.s32.totalorder %s59, %s60
    %p72 = scmp.eq.s32.totalorder %s15, 1
    %p73 = por %p71, %p72
    %p75 = scmp.ne.s32.totalorder %s60, %s74
    %p76 = scmp.eq.s32.totalorder %s15, 0
    %p77 = por %p75, %p76
    %s79 = sadd.s32 %s78, 1
    %p82 = scmp.eq.s32.totalorder %s9, 1
    %p83 = scmp.ne.s32.totalorder %s78, %s80
    %p84 = scmp.eq.s32.totalorder %s9, 0
    %p85 = por %p83, %p84
    %p86 = scmp.ne.s32.totalorder %s78, %s80
    %p87 = scmp.eq.s32.totalorder %s14, 1
    %p88 = por %p86, %p87
    %p89 = scmp.ne.s32.totalorder %s80, %s81
    %p90 = scmp.eq.s32.totalorder %s14, 0
    %p91 = por %p89, %p90
    %p92 = scmp.ne.s32.totalorder %s80, %s81
    %p93 = scmp.eq.s32.totalorder %s15, 1
    %p94 = por %p92, %p93
    %p96 = scmp.ne.s32.totalorder %s81, %s95
    %p97 = scmp.eq.s32.totalorder %s15, 0
    %p98 = por %p96, %p97
    %s99 = ssub.s32 %s16, %s28
    %s100 = ssub.s32 %s17, %s24
    %s101 = sor.u32 %s99, %s100
    %p102 = scmp.eq.s32.totalorder %s101, 0
    %s104 = sadd.s32 %s103, 1
    %s105 = scalar_select %p102, %s103, %s104
    %p108 = pneg %p102
    %p109 = scmp.eq.s32.totalorder %s9, 1
    %p110 = por %p108, %p109
    %p111 = scmp.ne.s32.totalorder %s103, %s106
    %p112 = scmp.eq.s32.totalorder %s9, 0
    %p113 = por %p111, %p112
    %p114 = scmp.ne.s32.totalorder %s103, %s106
    %p115 = scmp.eq.s32.totalorder %s14, 1
    %p116 = por %p114, %p115
    %p117 = scmp.ne.s32.totalorder %s106, %s107
    %p118 = scmp.eq.s32.totalorder %s14, 0
    %p119 = por %p117, %p118
    %p120 = scmp.ne.s32.totalorder %s106, %s107
    %p121 = scmp.eq.s32.totalorder %s15, 1
    %p122 = por %p120, %p121
    %p124 = scmp.ne.s32.totalorder %s107, %s123
    %p125 = scmp.eq.s32.totalorder %s15, 0
    %p126 = por %p124, %p125
    %p127 = scmp.le.s32.totalorder 1, %s9
    %p128 = scmp.lt.s32.totalorder %s9, 3
    %p129 = pnand %p127, %p128
    %p130 = pneg %p129
    // Predicated region
    $region9: #{encoder_block_pallas.3} parent=5 // pred_check
      _
    $region10: #{encoder_block_pallas.3} parent=5 // pred_check_branch
      %132 = sbr.rel (%p129) target = $region12
    $region11: #{encoder_block_pallas.3} parent=5 // pred_region
      %s133 = ssub.s32 %s9, 1
      // Predicated region
      $region13: #{encoder_block_pallas.3} parent=11 // pred_check
        %p134 = pneg %p70
      $region14: #{encoder_block_pallas.3} parent=11 // pred_check_branch
        %136 = sbr.rel (%p134) target = $region16
      $region15: #{encoder_block_pallas.3} parent=11 // pred_region
        _
      $region16: #{encoder_block_pallas.3} parent=11 // pred_fallthru
        _
      // Predicated region
      $region17: #{encoder_block_pallas.3} parent=11 // pred_check
        %p137 = pneg %p91
      $region18: #{encoder_block_pallas.3} parent=11 // pred_check_branch
        %139 = sbr.rel (%p137) target = $region20
      $region19: #{encoder_block_pallas.3} parent=11 // pred_region
        _
      $region20: #{encoder_block_pallas.3} parent=11 // pred_fallthru
        _
    $region12: #{encoder_block_pallas.3} parent=5 // pred_fallthru
      _
    %p140 = scmp.lt.s32.totalorder %s9, 2
    // Predicated region
    $region21: #{encoder_block_pallas.3} parent=5 // pred_check
      %p141 = pneg %p140
    $region22: #{encoder_block_pallas.3} parent=5 // pred_check_branch
      %143 = sbr.rel (%p141) target = $region24
    $region23: #{encoder_block_pallas.3} parent=5 // pred_region
      // Predicated region
      $region25: #{encoder_block_pallas.3} parent=23 // pred_check
        %p144 = pneg %p43
      $region26: #{encoder_block_pallas.3} parent=23 // pred_check_branch
        %146 = sbr.rel (%p144) target = $region28
      $region27: #{encoder_block_pallas.3} parent=23 // pred_region
        %p147 = scmp.lt.s32.totalorder %s16, 1
        %s148 = scalar_select %p147, %s16, 1
        %p149 = scmp.lt.s32.totalorder %s17, 0
        %s150 = scalar_select %p149, %s17, 0
        %s151 = smul.addr %s150, 3
        %s152 = smul.addr %s148, 3
        %s153 = sadd.s32 %s151, %s152
        %s154 = smul.addr %s153, 2
        %s155 = scalar_lea.vmem %s0, %s154
      $region28: #{encoder_block_pallas.3} parent=23 // pred_fallthru
        _
    $region24: #{encoder_block_pallas.3} parent=5 // pred_fallthru
      _
    %p156 = scmp.le.s32.totalorder 1, %s9
    %p157 = scmp.lt.s32.totalorder %s9, 3
    %p158 = pnand %p156, %p157
    %p159 = pneg %p158
    // Predicated region
    $region29: #{encoder_block_pallas.3} parent=5 // pred_check
      _
    $region30: #{encoder_block_pallas.3} parent=5 // pred_check_branch
      %161 = sbr.rel (%p158) target = $region32
    $region31: #{encoder_block_pallas.3} parent=5 // pred_region
      %s162 = ssub.s32 %s9, 1
      %p163 = scmp.lt.s32.totalorder %s18, 1
      %s164 = scalar_select %p163, %s18, 1
      %p165 = scmp.lt.s32.totalorder %s19, 0
      %s166 = scalar_select %p165, %s19, 0
      %s167 = smul.addr %s166, 3
      %s168 = smul.addr %s164, 3
      %s169 = sadd.s32 %s167, %s168
      %s170 = smul.addr %s169, 2
      %s171 = scalar_lea.vmem %s0, %s170
      %p172 = pneg %p49
      %p173 = pneg %p46
      %p174 = pneg %p70
      %p175 = pneg %p67
      %p176 = pneg %p91
      %p177 = pneg %p88
      %p178 = pneg %p119
      %p179 = pneg %p116
      %p180 = scmp.lt.s32.totalorder %s18, 1
      %s181 = scalar_select %p180, %s18, 1
      %p182 = scmp.lt.s32.totalorder %s19, 0
      %s183 = scalar_select %p182, %s19, 0
      %s184 = smul.addr %s183, 3
      %s185 = smul.addr %s181, 3
      %s186 = sadd.s32 %s184, %s185
      %s187 = smul.addr %s186, 2
      %s188 = scalar_lea.vmem %s3, %s187
      %p189 = scmp.lt.s32.totalorder %s18, 1
      %s190 = scalar_select %p189, %s18, 1
      %p191 = scmp.lt.s32.totalorder %s19, 0
      %s192 = scalar_select %p191, %s19, 0
      %s193 = smul.addr %s192, 3
      %s194 = smul.addr %s190, 3
      %s195 = sadd.s32 %s193, %s194
      %s196 = smul.addr %s195, 2
      %s197 = scalar_lea.vmem %s0, %s196
      %p198 = scmp.lt.s32.totalorder %s18, 1
      %s199 = scalar_select %p198, %s18, 1
      %p200 = scmp.lt.s32.totalorder %s19, 0
      %s201 = scalar_select %p200, %s19, 0
      %s202 = smul.addr %s201, 3
      %s203 = smul.addr %s199, 3
      %s204 = sadd.s32 %s202, %s203
      %s205 = smul.addr %s204, 2
      %s206 = scalar_lea.vmem %s3, %s205
      %v208 = vld [vmem:[%s197] sm:$0x3f]
      %v209 = vld [vmem:[%s1] sm:$0x3]
      %s210 = scalar_lea.vmem %s1, 2
      %v211 = vld [vmem:[%s210] sm:$0x3]
      %v213 = vcombine.high %v208, %v208
      %v215 = vunpack.c.l.s4 1983009808
      %v216 = vunpack.c.0.s8 %v215
      %v217 = vlaneseq
      %v218 = vshrl.u32 %v217, 7
      %v219 = vsub.s32 %v216, %v218
      %v220 = vrot.slane %v208, %v219
      %v222 = vunpack.c.l.s4 1983009808
      %v223 = vunpack.c.0.s8 %v222
      %v224 = vlaneseq
      %v225 = vshrl.u32 %v224, 7
      %v226 = vsub.s32 %v223, %v225
      %v227 = vrot.slane %v213, %v226
      %v228 = vcombine.high %v220, %v220
      %229 = vrot.lane.b32.xlu0 %v220, 127
      %v230 = vpop.permute.xlu0 %229
      %231 = vrot.lane.b32.xlu0 %v228, 127
      %v232 = vpop.permute.xlu0 %231
      %233 = vrot.lane.b32.xlu0 %v227, 127
      %v234 = vpop.permute.xlu0 %233
      %vm235 = vcmask 1039360
      %v236 = vsel %vm235, %v230, %v232
      %v237 = vsel %vm235, %v232, %v234
      %vm238 = vcmask 31744
      %v240 = vsel %vm238, %v211, 0
      %vm242 = vcmask 1041408
      %v244 = vsel %vm242, %v236, 0
      %v247 = vsel %vm242, %v237, 0
      %v250 = vsel %vm242, %v234, 0
      %252 = vmatprep.subr.bf16.mxu0 %v247
      %253 = vmatpush1.bf16.msra.mxu0 %v244
      %254 = vmatprep.subr.bf16.mxu0 0
      %255 = vmatpush1.bf16.msra.mxu0 0
      %256 = vmatprep.subr.bf16.mxu0 0
      %257 = vmatpush1.bf16.msra.mxu0 0
      %258 = vmatprep.subr.bf16.mxu0 0
      %259 = vmatpush1.bf16.msra.mxu0 0
      %260 = vmatprep.subr.bf16.mxu0 0
      %261 = vmatpush1.bf16.msra.mxu0 0
      %262 = vmatprep.subr.bf16.mxu0 0
      %263 = vmatpush1.bf16.msra.mxu0 0
      %264 = vmatprep.subr.bf16.mxu0 0
      %265 = vmatpush1.bf16.msra.mxu0 0
      %266 = vmatprep.subr.bf16.mxu0 0
      %267 = vmatpush1.bf16.msra.mxu0 0
      %268 = vmatprep.subr.bf16.mxu0 0
      %269 = vmatpush1.bf16.msra.mxu0 0
      %270 = vmatprep.subr.bf16.mxu0 0
      %271 = vmatpush1.bf16.msra.mxu0 0
      %272 = vmatprep.subr.bf16.mxu0 0
      %273 = vmatpush1.bf16.msra.mxu0 0
      %274 = vmatprep.subr.bf16.mxu0 0
      %275 = vmatpush1.bf16.msra.mxu0 0
      %276 = vmatprep.subr.bf16.mxu0 0
      %277 = vmatpush1.bf16.msra.mxu0 0
      %278 = vmatprep.subr.bf16.mxu0 0
      %279 = vmatpush1.bf16.msra.mxu0 0
      %280 = vmatprep.subr.bf16.mxu0 0
      %281 = vmatpush1.bf16.msra.mxu0 0
      %282 = vmatprep.subr.bf16.mxu0 0
      %283 = vmatpush1.bf16.msra.mxu0 0
      %284 = vmatprep.mubr.bf16.mxu0 0
      %285 = vmatmul.mubr.bf16.gmra.mrb[0].mxu0 %v240
      %v286 = vpop.f32.mrb[0].mxu0
      %v287 = vadd.f32 0.0, %v286
      %v288 = vpop.f32.mrb[0].mxu0
      %v289 = vadd.f32 0.0, %v288
      %v290 = vpop.f32.mrb[0].mxu0
      %v291 = vpop.f32.mrb[0].mxu0
      %292 = vdwg.mxu0
      %293 = vmatprep.subr.bf16.mxu0 0
      %294 = vmatpush1.bf16.msra.mxu0 %v250
      %295 = vmatprep.subr.bf16.mxu0 0
      %296 = vmatpush1.bf16.msra.mxu0 0
      %297 = vmatprep.subr.bf16.mxu0 0
      %298 = vmatpush1.bf16.msra.mxu0 0
      %299 = vmatprep.subr.bf16.mxu0 0
      %300 = vmatpush1.bf16.msra.mxu0 0
      %301 = vmatprep.subr.bf16.mxu0 0
      %302 = vmatpush1.bf16.msra.mxu0 0
      %303 = vmatprep.subr.bf16.mxu0 0
      %304 = vmatpush1.bf16.msra.mxu0 0
      %305 = vmatprep.subr.bf16.mxu0 0
      %306 = vmatpush1.bf16.msra.mxu0 0
      %307 = vmatprep.subr.bf16.mxu0 0
      %308 = vmatpush1.bf16.msra.mxu0 0
      %309 = vmatprep.subr.bf16.mxu0 0
      %310 = vmatpush1.bf16.msra.mxu0 0
      %311 = vmatprep.subr.bf16.mxu0 0
      %312 = vmatpush1.bf16.msra.mxu0 0
      %313 = vmatprep.subr.bf16.mxu0 0
      %314 = vmatpush1.bf16.msra.mxu0 0
      %315 = vmatprep.subr.bf16.mxu0 0
      %316 = vmatpush1.bf16.msra.mxu0 0
      %317 = vmatprep.subr.bf16.mxu0 0
      %318 = vmatpush1.bf16.msra.mxu0 0
      %319 = vmatprep.subr.bf16.mxu0 0
      %320 = vmatpush1.bf16.msra.mxu0 0
      %321 = vmatprep.subr.bf16.mxu0 0
      %322 = vmatpush1.bf16.msra.mxu0 0
      %323 = vmatprep.subr.bf16.mxu0 0
      %324 = vmatpush1.bf16.msra.mxu0 0
      %325 = vmatprep.mubr.bf16.mxu0 0
      %326 = vmatmul.mubr.bf16.gmra.mrb[0].mxu0 %v240
      %v327 = vpop.f32.mrb[0].mxu0
      %v328 = vadd.f32 0.0, %v327
      %v329 = vpop.f32.mrb[0].mxu0
      %v330 = vpop.f32.mrb[0].mxu0
      %v331 = vpop.f32.mrb[0].mxu0
      %332 = vdwg.mxu0
      %v334 = vsel %vm238, %v209, 0
      %v337 = vsel %vm242, %v220, 0
      %v340 = vsel %vm242, %v228, 0
      %v343 = vsel %vm242, %v227, 0
      %345 = vmatprep.subr.bf16.mxu0 %v340
      %346 = vmatpush1.bf16.msra.mxu0 %v337
      %347 = vmatprep.subr.bf16.mxu0 0
      %348 = vmatpush1.bf16.msra.mxu0 0
      %349 = vmatprep.subr.bf16.mxu0 0
      %350 = vmatpush1.bf16.msra.mxu0 0
      %351 = vmatprep.subr.bf16.mxu0 0
      %352 = vmatpush1.bf16.msra.mxu0 0
      %353 = vmatprep.subr.bf16.mxu0 0
      %354 = vmatpush1.bf16.msra.mxu0 0
      %355 = vmatprep.subr.bf16.mxu0 0
      %356 = vmatpush1.bf16.msra.mxu0 0
      %357 = vmatprep.subr.bf16.mxu0 0
      %358 = vmatpush1.bf16.msra.mxu0 0
      %359 = vmatprep.subr.bf16.mxu0 0
      %360 = vmatpush1.bf16.msra.mxu0 0
      %361 = vmatprep.subr.bf16.mxu0 0
      %362 = vmatpush1.bf16.msra.mxu0 0
      %363 = vmatprep.subr.bf16.mxu0 0
      %364 = vmatpush1.bf16.msra.mxu0 0
      %365 = vmatprep.subr.bf16.mxu0 0
      %366 = vmatpush1.bf16.msra.mxu0 0
      %367 = vmatprep.subr.bf16.mxu0 0
      %368 = vmatpush1.bf16.msra.mxu0 0
      %369 = vmatprep.subr.bf16.mxu0 0
      %370 = vmatpush1.bf16.msra.mxu0 0
      %371 = vmatprep.subr.bf16.mxu0 0
      %372 = vmatpush1.bf16.msra.mxu0 0
      %373 = vmatprep.subr.bf16.mxu0 0
      %374 = vmatpush1.bf16.msra.mxu0 0
      %375 = vmatprep.subr.bf16.mxu0 0
      %376 = vmatpush1.bf16.msra.mxu0 0
      %377 = vmatprep.mubr.bf16.mxu0 0
      %378 = vmatmul.mubr.bf16.gmra.mrb[0].mxu0 %v334
      %v379 = vpop.f32.mrb[0].mxu0
      %v380 = vadd.f32 %v287, %v379
      %v381 = vpop.f32.mrb[0].mxu0
      %v382 = vadd.f32 %v289, %v381
      %v383 = vpop.f32.mrb[0].mxu0
      %v384 = vpop.f32.mrb[0].mxu0
      %385 = vdwg.mxu0
      %386 = vmatprep.subr.bf16.mxu0 0
      %387 = vmatpush1.bf16.msra.mxu0 %v343
      %388 = vmatprep.subr.bf16.mxu0 0
      %389 = vmatpush1.bf16.msra.mxu0 0
      %390 = vmatprep.subr.bf16.mxu0 0
      %391 = vmatpush1.bf16.msra.mxu0 0
      %392 = vmatprep.subr.bf16.mxu0 0
      %393 = vmatpush1.bf16.msra.mxu0 0
      %394 = vmatprep.subr.bf16.mxu0 0
      %395 = vmatpush1.bf16.msra.mxu0 0
      %396 = vmatprep.subr.bf16.mxu0 0
      %397 = vmatpush1.bf16.msra.mxu0 0
      %398 = vmatprep.subr.bf16.mxu0 0
      %399 = vmatpush1.bf16.msra.mxu0 0
      %400 = vmatprep.subr.bf16.mxu0 0
      %401 = vmatpush1.bf16.msra.mxu0 0
      %402 = vmatprep.subr.bf16.mxu0 0
      %403 = vmatpush1.bf16.msra.mxu0 0
      %404 = vmatprep.subr.bf16.mxu0 0
      %405 = vmatpush1.bf16.msra.mxu0 0
      %406 = vmatprep.subr.bf16.mxu0 0
      %407 = vmatpush1.bf16.msra.mxu0 0
      %408 = vmatprep.subr.bf16.mxu0 0
      %409 = vmatpush1.bf16.msra.mxu0 0
      %410 = vmatprep.subr.bf16.mxu0 0
      %411 = vmatpush1.bf16.msra.mxu0 0
      %412 = vmatprep.subr.bf16.mxu0 0
      %413 = vmatpush1.bf16.msra.mxu0 0
      %414 = vmatprep.subr.bf16.mxu0 0
      %415 = vmatpush1.bf16.msra.mxu0 0
      %416 = vmatprep.subr.bf16.mxu0 0
      %417 = vmatpush1.bf16.msra.mxu0 0
      %418 = vmatprep.mubr.bf16.mxu0 0
      %419 = vmatmul.mubr.bf16.gmra.mrb[0].mxu0 %v334
      %v420 = vpop.f32.mrb[0].mxu0
      %v421 = vadd.f32 %v328, %v420
      %v422 = vpop.f32.mrb[0].mxu0
      %v423 = vpop.f32.mrb[0].mxu0
      %v424 = vpop.f32.mrb[0].mxu0
      %425 = vdwg.mxu0
      %v426 = vld [vmem:[%s197] sm:$0x3f]
      %s427 = scalar_lea.vmem %s1, 4
      %v428 = vld [vmem:[%s427] sm:$0x3]
      %v430 = vcombine.high %v426, %v426
      %v432 = vunpack.c.l.s4 1983009808
      %v433 = vunpack.c.0.s8 %v432
      %v434 = vlaneseq
      %v435 = vshrl.u32 %v434, 7
      %v436 = vsub.s32 %v433, %v435
      %v437 = vrot.slane %v426, %v436
      %v439 = vunpack.c.l.s4 1983009808
      %v440 = vunpack.c.0.s8 %v439
      %v441 = vlaneseq
      %v442 = vshrl.u32 %v441, 7
      %v443 = vsub.s32 %v440, %v442
      %v444 = vrot.slane %v430, %v443
      %v445 = vcombine.high %v437, %v437
      %446 = vrot.lane.b32.xlu0 %v437, 126
      %v447 = vpop.permute.xlu0 %446
      %448 = vrot.lane.b32.xlu0 %v445, 126
      %v449 = vpop.permute.xlu0 %448
      %450 = vrot.lane.b32.xlu0 %v444, 126
      %v451 = vpop.permute.xlu0 %450
      %vm452 = vcmask 1031168
      %v453 = vsel %vm452, %v447, %v449
      %v454 = vsel %vm452, %v449, %v451
      %v456 = vsel %vm238, %v428, 0
      %v459 = vsel %vm242, %v453, 0
      %v462 = vsel %vm242, %v454, 0
      %v465 = vsel %vm242, %v451, 0
      %467 = vmatprep.subr.bf16.mxu0 %v462
      %468 = vmatpush1.bf16.msra.mxu0 %v459
      %469 = vmatprep.subr.bf16.mxu0 0
      %470 = vmatpush1.bf16.msra.mxu0 0
      %471 = vmatprep.subr.bf16.mxu0 0
      %472 = vmatpush1.bf16.msra.mxu0 0
      %473 = vmatprep.subr.bf16.mxu0 0
      %474 = vmatpush1.bf16.msra.mxu0 0
      %475 = vmatprep.subr.bf16.mxu0 0
      %476 = vmatpush1.bf16.msra.mxu0 0
      %477 = vmatprep.subr.bf16.mxu0 0
      %478 = vmatpush1.bf16.msra.mxu0 0
      %479 = vmatprep.subr.bf16.mxu0 0
      %480 = vmatpush1.bf16.msra.mxu0 0
      %481 = vmatprep.subr.bf16.mxu0 0
      %482 = vmatpush1.bf16.msra.mxu0 0
      %483 = vmatprep.subr.bf16.mxu0 0
      %484 = vmatpush1.bf16.msra.mxu0 0
      %485 = vmatprep.subr.bf16.mxu0 0
      %486 = vmatpush1.bf16.msra.mxu0 0
      %487 = vmatprep.subr.bf16.mxu0 0
      %488 = vmatpush1.bf16.msra.mxu0 0
      %489 = vmatprep.subr.bf16.mxu0 0
      %490 = vmatpush1.bf16.msra.mxu0 0
      %491 = vmatprep.subr.bf16.mxu0 0
      %492 = vmatpush1.bf16.msra.mxu0 0
      %493 = vmatprep.subr.bf16.mxu0 0
      %494 = vmatpush1.bf16.msra.mxu0 0
      %495 = vmatprep.subr.bf16.mxu0 0
      %496 = vmatpush1.bf16.msra.mxu0 0
      %497 = vmatprep.subr.bf16.mxu0 0
      %498 = vmatpush1.bf16.msra.mxu0 0
      %499 = vmatprep.mubr.bf16.mxu0 0
      %500 = vmatmul.mubr.bf16.gmra.mrb[0].mxu0 %v456
      %v501 = vpop.f32.mrb[0].mxu0
      %v502 = vadd.f32 0.0, %v501
      %v503 = vpop.f32.mrb[0].mxu0
      %v504 = vadd.f32 0.0, %v503
      %v505 = vpop.f32.mrb[0].mxu0
      %v506 = vpop.f32.mrb[0].mxu0
      %507 = vdwg.mxu0
      %508 = vmatprep.subr.bf16.mxu0 0
      %509 = vmatpush1.bf16.msra.mxu0 %v465
      %510 = vmatprep.subr.bf16.mxu0 0
      %511 = vmatpush1.bf16.msra.mxu0 0
      %512 = vmatprep.subr.bf16.mxu0 0
      %513 = vmatpush1.bf16.msra.mxu0 0
      %514 = vmatprep.subr.bf16.mxu0 0
      %515 = vmatpush1.bf16.msra.mxu0 0
      %516 = vmatprep.subr.bf16.mxu0 0
      %517 = vmatpush1.bf16.msra.mxu0 0
      %518 = vmatprep.subr.bf16.mxu0 0
      %519 = vmatpush1.bf16.msra.mxu0 0
      %520 = vmatprep.subr.bf16.mxu0 0
      %521 = vmatpush1.bf16.msra.mxu0 0
      %522 = vmatprep.subr.bf16.mxu0 0
      %523 = vmatpush1.bf16.msra.mxu0 0
      %524 = vmatprep.subr.bf16.mxu0 0
      %525 = vmatpush1.bf16.msra.mxu0 0
      %526 = vmatprep.subr.bf16.mxu0 0
      %527 = vmatpush1.bf16.msra.mxu0 0
      %528 = vmatprep.subr.bf16.mxu0 0
      %529 = vmatpush1.bf16.msra.mxu0 0
      %530 = vmatprep.subr.bf16.mxu0 0
      %531 = vmatpush1.bf16.msra.mxu0 0
      %532 = vmatprep.subr.bf16.mxu0 0
      %533 = vmatpush1.bf16.msra.mxu0 0
      %534 = vmatprep.subr.bf16.mxu0 0
      %535 = vmatpush1.bf16.msra.mxu0 0
      %536 = vmatprep.subr.bf16.mxu0 0
      %537 = vmatpush1.bf16.msra.mxu0 0
      %538 = vmatprep.subr.bf16.mxu0 0
      %539 = vmatpush1.bf16.msra.mxu0 0
      %540 = vmatprep.mubr.bf16.mxu0 0
      %541 = vmatmul.mubr.bf16.gmra.mrb[0].mxu0 %v456
      %v542 = vpop.f32.mrb[0].mxu0
      %v543 = vadd.f32 0.0, %v542
      %v544 = vpop.f32.mrb[0].mxu0
      %v545 = vpop.f32.mrb[0].mxu0
      %v546 = vpop.f32.mrb[0].mxu0
      %547 = vdwg.mxu0
      %v548 = vadd.f32 %v380, %v502
      %v549 = vadd.f32 %v382, %v504
      %v550 = vadd.f32 %v421, %v543
      %v551 = vld [vmem:[%s197] sm:$0x3f]
      %s552 = scalar_lea.vmem %s1, 6
      %v553 = vld [vmem:[%s552] sm:$0x3]
      %v555 = vcombine.high %v551, %v551
      %v557 = vunpack.c.l.s4 1983009808
      %v558 = vunpack.c.0.s8 %v557
      %v559 = vlaneseq
      %v560 = vshrl.u32 %v559, 7
      %v561 = vsub.s32 %v558, %v560
      %v562 = vrot.slane %v551, %v561
      %v564 = vunpack.c.l.s4 1983009808
      %v565 = vunpack.c.0.s8 %v564
      %v566 = vlaneseq
      %v567 = vshrl.u32 %v566, 7
      %v568 = vsub.s32 %v565, %v567
      %v569 = vrot.slane %v555, %v568
      %v570 = vcombine.high %v562, %v562
      %571 = vrot.lane.b32.xlu0 %v562, 110
      %v572 = vpop.permute.xlu0 %571
      %573 = vrot.lane.b32.xlu0 %v570, 110
      %v574 = vpop.permute.xlu0 %573
      %575 = vrot.lane.b32.xlu0 %v569, 110
      %v576 = vpop.permute.xlu0 %575
      %vm577 = vcmask 900096
      %v578 = vsel %vm577, %v572, %v574
      %v579 = vsel %vm577, %v574, %v576
      %v581 = vsel %vm238, %v553, 0
      %v584 = vsel %vm242, %v578, 0
      %v587 = vsel %vm242, %v579, 0
      %v590 = vsel %vm242, %v576, 0
      %592 = vmatprep.subr.bf16.mxu0 %v587
      %593 = vmatpush1.bf16.msra.mxu0 %v584
      %594 = vmatprep.subr.bf16.mxu0 0
      %595 = vmatpush1.bf16.msra.mxu0 0
      %596 = vmatprep.subr.bf16.mxu0 0
      %597 = vmatpush1.bf16.msra.mxu0 0
      %598 = vmatprep.subr.bf16.mxu0 0
      %599 = vmatpush1.bf16.msra.mxu0 0
      %600 = vmatprep.subr.bf16.mxu0 0
      %601 = vmatpush1.bf16.msra.mxu0 0
      %602 = vmatprep.subr.bf16.mxu0 0
      %603 = vmatpush1.bf16.msra.mxu0 0
      %604 = vmatprep.subr.bf16.mxu0 0
      %605 = vmatpush1.bf16.msra.mxu0 0
      %606 = vmatprep.subr.bf16.mxu0 0
      %607 = vmatpush1.bf16.msra.mxu0 0
      %608 = vmatprep.subr.bf16.mxu0 0
      %609 = vmatpush1.bf16.msra.mxu0 0
      %610 = vmatprep.subr.bf16.mxu0 0
      %611 = vmatpush1.bf16.msra.mxu0 0
      %612 = vmatprep.subr.bf16.mxu0 0
      %613 = vmatpush1.bf16.msra.mxu0 0
      %614 = vmatprep.subr.bf16.mxu0 0
      %615 = vmatpush1.bf16.msra.mxu0 0
      %616 = vmatprep.subr.bf16.mxu0 0
      %617 = vmatpush1.bf16.msra.mxu0 0
      %618 = vmatprep.subr.bf16.mxu0 0
      %619 = vmatpush1.bf16.msra.mxu0 0
      %620 = vmatprep.subr.bf16.mxu0 0
      %621 = vmatpush1.bf16.msra.mxu0 0
      %622 = vmatprep.subr.bf16.mxu0 0
      %623 = vmatpush1.bf16.msra.mxu0 0
      %624 = vmatprep.mubr.bf16.mxu0 0
      %625 = vmatmul.mubr.bf16.gmra.mrb[0].mxu0 %v581
      %v626 = vpop.f32.mrb[0].mxu0
      %v627 = vadd.f32 0.0, %v626
      %v628 = vpop.f32.mrb[0].mxu0
      %v629 = vadd.f32 0.0, %v628
      %v630 = vpop.f32.mrb[0].mxu0
      %v631 = vpop.f32.mrb[0].mxu0
      %632 = vdwg.mxu0
      %633 = vmatprep.subr.bf16.mxu0 0
      %634 = vmatpush1.bf16.msra.mxu0 %v590
      %635 = vmatprep.subr.bf16.mxu0 0
      %636 = vmatpush1.bf16.msra.mxu0 0
      %637 = vmatprep.subr.bf16.mxu0 0
      %638 = vmatpush1.bf16.msra.mxu0 0
      %639 = vmatprep.subr.bf16.mxu0 0
      %640 = vmatpush1.bf16.msra.mxu0 0
      %641 = vmatprep.subr.bf16.mxu0 0
      %642 = vmatpush1.bf16.msra.mxu0 0
      %643 = vmatprep.subr.bf16.mxu0 0
      %644 = vmatpush1.bf16.msra.mxu0 0
      %645 = vmatprep.subr.bf16.mxu0 0
      %646 = vmatpush1.bf16.msra.mxu0 0
      %647 = vmatprep.subr.bf16.mxu0 0
      %648 = vmatpush1.bf16.msra.mxu0 0
      %649 = vmatprep.subr.bf16.mxu0 0
      %650 = vmatpush1.bf16.msra.mxu0 0
      %651 = vmatprep.subr.bf16.mxu0 0
      %652 = vmatpush1.bf16.msra.mxu0 0
      %653 = vmatprep.subr.bf16.mxu0 0
      %654 = vmatpush1.bf16.msra.mxu0 0
      %655 = vmatprep.subr.bf16.mxu0 0
      %656 = vmatpush1.bf16.msra.mxu0 0
      %657 = vmatprep.subr.bf16.mxu0 0
      %658 = vmatpush1.bf16.msra.mxu0 0
      %659 = vmatprep.subr.bf16.mxu0 0
      %660 = vmatpush1.bf16.msra.mxu0 0
      %661 = vmatprep.subr.bf16.mxu0 0
      %662 = vmatpush1.bf16.msra.mxu0 0
      %663 = vmatprep.subr.bf16.mxu0 0
      %664 = vmatpush1.bf16.msra.mxu0 0
      %665 = vmatprep.mubr.bf16.mxu0 0
      %666 = vmatmul.mubr.bf16.gmra.mrb[0].mxu0 %v581
      %v667 = vpop.f32.mrb[0].mxu0
      %v668 = vadd.f32 0.0, %v667
      %v669 = vpop.f32.mrb[0].mxu0
      %v670 = vpop.f32.mrb[0].mxu0
      %v671 = vpop.f32.mrb[0].mxu0
      %672 = vdwg.mxu0
      %v673 = vadd.f32 %v548, %v627
      %v674 = vadd.f32 %v549, %v629
      %v675 = vadd.f32 %v550, %v668
      %v676 = vld [vmem:[%s197] sm:$0x3f]
      %s677 = scalar_lea.vmem %s1, 8
      %v678 = vld [vmem:[%s677] sm:$0x3]
      %v680 = vcombine.high %v676, %v676
      %v682 = vunpack.c.l.s4 1983009808
      %v683 = vunpack.c.0.s8 %v682
      %v684 = vlaneseq
      %v685 = vshrl.u32 %v684, 7
      %v686 = vsub.s32 %v683, %v685
      %v687 = vrot.slane %v676, %v686
      %v689 = vunpack.c.l.s4 1983009808
      %v690 = vunpack.c.0.s8 %v689
      %v691 = vlaneseq
      %v692 = vshrl.u32 %v691, 7
      %v693 = vsub.s32 %v690, %v692
      %v694 = vrot.slane %v680, %v693
      %v695 = vcombine.high %v687, %v687
      %696 = vrot.lane.b32.xlu0 %v687, 109
      %v697 = vpop.permute.xlu0 %696
      %698 = vrot.lane.b32.xlu0 %v695, 109
      %v699 = vpop.permute.xlu0 %698
      %700 = vrot.lane.b32.xlu0 %v694, 109
      %v701 = vpop.permute.xlu0 %700
      %vm702 = vcmask 891904
      %v703 = vsel %vm702, %v697, %v699
      %v704 = vsel %vm702, %v699, %v701
      %v706 = vsel %vm238, %v678, 0
      %v709 = vsel %vm242, %v703, 0
      %v712 = vsel %vm242, %v704, 0
      %v715 = vsel %vm242, %v701, 0
      %717 = vmatprep.subr.bf16.mxu0 %v712
      %718 = vmatpush1.bf16.msra.mxu0 %v709
      %719 = vmatprep.subr.bf16.mxu0 0
      %720 = vmatpush1.bf16.msra.mxu0 0
      %721 = vmatprep.subr.bf16.mxu0 0
      %722 = vmatpush1.bf16.msra.mxu0 0
      %723 = vmatprep.subr.bf16.mxu0 0
      %724 = vmatpush1.bf16.msra.mxu0 0
      %725 = vmatprep.subr.bf16.mxu0 0
      %726 = vmatpush1.bf16.msra.mxu0 0
      %727 = vmatprep.subr.bf16.mxu0 0
      %728 = vmatpush1.bf16.msra.mxu0 0
      %729 = vmatprep.subr.bf16.mxu0 0
      %730 = vmatpush1.bf16.msra.mxu0 0
      %731 = vmatprep.subr.bf16.mxu0 0
      %732 = vmatpush1.bf16.msra.mxu0 0
      %733 = vmatprep.subr.bf16.mxu0 0
      %734 = vmatpush1.bf16.msra.mxu0 0
      %735 = vmatprep.subr.bf16.mxu0 0
      %736 = vmatpush1.bf16.msra.mxu0 0
      %737 = vmatprep.subr.bf16.mxu0 0
      %738 = vmatpush1.bf16.msra.mxu0 0
      %739 = vmatprep.subr.bf16.mxu0 0
      %740 = vmatpush1.bf16.msra.mxu0 0
      %741 = vmatprep.subr.bf16.mxu0 0
      %742 = vmatpush1.bf16.msra.mxu0 0
      %743 = vmatprep.subr.bf16.mxu0 0
      %744 = vmatpush1.bf16.msra.mxu0 0
      %745 = vmatprep.subr.bf16.mxu0 0
      %746 = vmatpush1.bf16.msra.mxu0 0
      %747 = vmatprep.subr.bf16.mxu0 0
      %748 = vmatpush1.bf16.msra.mxu0 0
      %749 = vmatprep.mubr.bf16.mxu0 0
      %750 = vmatmul.mubr.bf16.gmra.mrb[0].mxu0 %v706
      %v751 = vpop.f32.mrb[0].mxu0
      %v752 = vadd.f32 0.0, %v751
      %v753 = vpop.f32.mrb[0].mxu0
      %v754 = vadd.f32 0.0, %v753
      %v755 = vpop.f32.mrb[0].mxu0
      %v756 = vpop.f32.mrb[0].mxu0
      %757 = vdwg.mxu0
      %758 = vmatprep.subr.bf16.mxu0 0
      %759 = vmatpush1.bf16.msra.mxu0 %v715
      %760 = vmatprep.subr.bf16.mxu0 0
      %761 = vmatpush1.bf16.msra.mxu0 0
      %762 = vmatprep.subr.bf16.mxu0 0
      %763 = vmatpush1.bf16.msra.mxu0 0
      %764 = vmatprep.subr.bf16.mxu0 0
      %765 = vmatpush1.bf16.msra.mxu0 0
      %766 = vmatprep.subr.bf16.mxu0 0
      %767 = vmatpush1.bf16.msra.mxu0 0
      %768 = vmatprep.subr.bf16.mxu0 0
      %769 = vmatpush1.bf16.msra.mxu0 0
      %770 = vmatprep.subr.bf16.mxu0 0
      %771 = vmatpush1.bf16.msra.mxu0 0
      %772 = vmatprep.subr.bf16.mxu0 0
      %773 = vmatpush1.bf16.msra.mxu0 0
      %774 = vmatprep.subr.bf16.mxu0 0
      %775 = vmatpush1.bf16.msra.mxu0 0
      %776 = vmatprep.subr.bf16.mxu0 0
      %777 = vmatpush1.bf16.msra.mxu0 0
      %778 = vmatprep.subr.bf16.mxu0 0
      %779 = vmatpush1.bf16.msra.mxu0 0
      %780 = vmatprep.subr.bf16.mxu0 0
      %781 = vmatpush1.bf16.msra.mxu0 0
      %782 = vmatprep.subr.bf16.mxu0 0
      %783 = vmatpush1.bf16.msra.mxu0 0
      %784 = vmatprep.subr.bf16.mxu0 0
      %785 = vmatpush1.bf16.msra.mxu0 0
      %786 = vmatprep.subr.bf16.mxu0 0
      %787 = vmatpush1.bf16.msra.mxu0 0
      %788 = vmatprep.subr.bf16.mxu0 0
      %789 = vmatpush1.bf16.msra.mxu0 0
      %790 = vmatprep.mubr.bf16.mxu0 0
      %791 = vmatmul.mubr.bf16.gmra.mrb[0].mxu0 %v706
      %v792 = vpop.f32.mrb[0].mxu0
      %v793 = vadd.f32 0.0, %v792
      %v794 = vpop.f32.mrb[0].mxu0
      %v795 = vpop.f32.mrb[0].mxu0
      %v796 = vpop.f32.mrb[0].mxu0
      %797 = vdwg.mxu0
      %v798 = vadd.f32 %v673, %v752
      %v799 = vadd.f32 %v674, %v754
      %v800 = vadd.f32 %v675, %v793
      %v801 = vld [vmem:[%s197] sm:$0x3f]
      %s802 = scalar_lea.vmem %s1, 10
      %v803 = vld [vmem:[%s802] sm:$0x3]
      %v805 = vcombine.high %v801, %v801
      %v807 = vunpack.c.l.s4 1983009808
      %v808 = vunpack.c.0.s8 %v807
      %v809 = vlaneseq
      %v810 = vshrl.u32 %v809, 7
      %v811 = vsub.s32 %v808, %v810
      %v812 = vrot.slane %v801, %v811
      %v814 = vunpack.c.l.s4 1983009808
      %v815 = vunpack.c.0.s8 %v814
      %v816 = vlaneseq
      %v817 = vshrl.u32 %v816, 7
      %v818 = vsub.s32 %v815, %v817
      %v819 = vrot.slane %v805, %v818
      %v820 = vcombine.high %v812, %v812
      %821 = vrot.lane.b32.xlu0 %v812, 108
      %v822 = vpop.permute.xlu0 %821
      %823 = vrot.lane.b32.xlu0 %v820, 108
      %v824 = vpop.permute.xlu0 %823
      %825 = vrot.lane.b32.xlu0 %v819, 108
      %v826 = vpop.permute.xlu0 %825
      %vm827 = vcmask 883712
      %v828 = vsel %vm827, %v822, %v824
      %v829 = vsel %vm827, %v824, %v826
      %v831 = vsel %vm238, %v803, 0
      %v834 = vsel %vm242, %v828, 0
      %v837 = vsel %vm242, %v829, 0
      %v840 = vsel %vm242, %v826, 0
      %842 = vmatprep.subr.bf16.mxu0 %v837
      %843 = vmatpush1.bf16.msra.mxu0 %v834
      %844 = vmatprep.subr.bf16.mxu0 0
      %845 = vmatpush1.bf16.msra.mxu0 0
      %846 = vmatprep.subr.bf16.mxu0 0
      %847 = vmatpush1.bf16.msra.mxu0 0
      %848 = vmatprep.subr.bf16.mxu0 0
      %849 = vmatpush1.bf16.msra.mxu0 0
      %850 = vmatprep.subr.bf16.mxu0 0
      %851 = vmatpush1.bf16.msra.mxu0 0
      %852 = vmatprep.subr.bf16.mxu0 0
      %853 = vmatpush1.bf16.msra.mxu0 0
      %854 = vmatprep.subr.bf16.mxu0 0
      %855 = vmatpush1.bf16.msra.mxu0 0
      %856 = vmatprep.subr.bf16.mxu0 0
      %857 = vmatpush1.bf16.msra.mxu0 0
      %858 = vmatprep.subr.bf16.mxu0 0
      %859 = vmatpush1.bf16.msra.mxu0 0
      %860 = vmatprep.subr.bf16.mxu0 0
      %861 = vmatpush1.bf16.msra.mxu0 0
      %862 = vmatprep.subr.bf16.mxu0 0
      %863 = vmatpush1.bf16.msra.mxu0 0
      %864 = vmatprep.subr.bf16.mxu0 0
      %865 = vmatpush1.bf16.msra.mxu0 0
      %866 = vmatprep.subr.bf16.mxu0 0
      %867 = vmatpush1.bf16.msra.mxu0 0
      %868 = vmatprep.subr.bf16.mxu0 0
      %869 = vmatpush1.bf16.msra.mxu0 0
      %870 = vmatprep.subr.bf16.mxu0 0
      %871 = vmatpush1.bf16.msra.mxu0 0
      %872 = vmatprep.subr.bf16.mxu0 0
      %873 = vmatpush1.bf16.msra.mxu0 0
      %874 = vmatprep.mubr.bf16.mxu0 0
      %875 = vmatmul.mubr.bf16.gmra.mrb[0].mxu0 %v831
      %v876 = vpop.f32.mrb[0].mxu0
      %v877 = vadd.f32 0.0, %v876
      %v878 = vpop.f32.mrb[0].mxu0
      %v879 = vadd.f32 0.0, %v878
      %v880 = vpop.f32.mrb[0].mxu0
      %v881 = vpop.f32.mrb[0].mxu0
      %882 = vdwg.mxu0
      %883 = vmatprep.subr.bf16.mxu0 0
      %884 = vmatpush1.bf16.msra.mxu0 %v840
      %885 = vmatprep.subr.bf16.mxu0 0
      %886 = vmatpush1.bf16.msra.mxu0 0
      %887 = vmatprep.subr.bf16.mxu0 0
      %888 = vmatpush1.bf16.msra.mxu0 0
      %889 = vmatprep.subr.bf16.mxu0 0
      %890 = vmatpush1.bf16.msra.mxu0 0
      %891 = vmatprep.subr.bf16.mxu0 0
      %892 = vmatpush1.bf16.msra.mxu0 0
      %893 = vmatprep.subr.bf16.mxu0 0
      %894 = vmatpush1.bf16.msra.mxu0 0
      %895 = vmatprep.subr.bf16.mxu0 0
      %896 = vmatpush1.bf16.msra.mxu0 0
      %897 = vmatprep.subr.bf16.mxu0 0
      %898 = vmatpush1.bf16.msra.mxu0 0
      %899 = vmatprep.subr.bf16.mxu0 0
      %900 = vmatpush1.bf16.msra.mxu0 0
      %901 = vmatprep.subr.bf16.mxu0 0
      %902 = vmatpush1.bf16.msra.mxu0 0
      %903 = vmatprep.subr.bf16.mxu0 0
      %904 = vmatpush1.bf16.msra.mxu0 0
      %905 = vmatprep.subr.bf16.mxu0 0
      %906 = vmatpush1.bf16.msra.mxu0 0
      %907 = vmatprep.subr.bf16.mxu0 0
      %908 = vmatpush1.bf16.msra.mxu0 0
      %909 = vmatprep.subr.bf16.mxu0 0
      %910 = vmatpush1.bf16.msra.mxu0 0
      %911 = vmatprep.subr.bf16.mxu0 0
      %912 = vmatpush1.bf16.msra.mxu0 0
      %913 = vmatprep.subr.bf16.mxu0 0
      %914 = vmatpush1.bf16.msra.mxu0 0
      %915 = vmatprep.mubr.bf16.mxu0 0
      %916 = vmatmul.mubr.bf16.gmra.mrb[0].mxu0 %v831
      %v917 = vpop.f32.mrb[0].mxu0
      %v918 = vadd.f32 0.0, %v917
      %v919 = vpop.f32.mrb[0].mxu0
      %v920 = vpop.f32.mrb[0].mxu0
      %v921 = vpop.f32.mrb[0].mxu0
      %922 = vdwg.mxu0
      %v923 = vadd.f32 %v798, %v877
      %v924 = vadd.f32 %v799, %v879
      %v925 = vadd.f32 %v800, %v918
      %v926 = vld [vmem:[%s197] sm:$0x3f]
      %s927 = scalar_lea.vmem %s1, 12
      %v928 = vld [vmem:[%s927] sm:$0x3]
      %v930 = vcombine.high %v926, %v926
      %v932 = vunpack.c.l.s4 1983009808
      %v933 = vunpack.c.0.s8 %v932
      %v934 = vlaneseq
      %v935 = vshrl.u32 %v934, 7
      %v936 = vsub.s32 %v933, %v935
      %v937 = vrot.slane %v926, %v936
      %v939 = vunpack.c.l.s4 1983009808
      %v940 = vunpack.c.0.s8 %v939
      %v941 = vlaneseq
      %v942 = vshrl.u32 %v941, 7
      %v943 = vsub.s32 %v940, %v942
      %v944 = vrot.slane %v930, %v943
      %v945 = vcombine.high %v937, %v937
      %946 = vrot.lane.b32.xlu0 %v937, 92
      %v947 = vpop.permute.xlu0 %946
      %948 = vrot.lane.b32.xlu0 %v945, 92
      %v949 = vpop.permute.xlu0 %948
      %950 = vrot.lane.b32.xlu0 %v944, 92
      %v951 = vpop.permute.xlu0 %950
      %vm952 = vcmask 752640
      %v953 = vsel %vm952, %v947, %v949
      %v954 = vsel %vm952, %v949, %v951
      %v956 = vsel %vm238, %v928, 0
      %v959 = vsel %vm242, %v953, 0
      %v962 = vsel %vm242, %v954, 0
      %v965 = vsel %vm242, %v951, 0
      %967 = vmatprep.subr.bf16.mxu0 %v962
      %968 = vmatpush1.bf16.msra.mxu0 %v959
      %969 = vmatprep.subr.bf16.mxu0 0
      %970 = vmatpush1.bf16.msra.mxu0 0
      %971 = vmatprep.subr.bf16.mxu0 0
      %972 = vmatpush1.bf16.msra.mxu0 0
      %973 = vmatprep.subr.bf16.mxu0 0
      %974 = vmatpush1.bf16.msra.mxu0 0
      %975 = vmatprep.subr.bf16.mxu0 0
      %976 = vmatpush1.bf16.msra.mxu0 0
      %977 = vmatprep.subr.bf16.mxu0 0
      %978 = vmatpush1.bf16.msra.mxu0 0
      %979 = vmatprep.subr.bf16.mxu0 0
      %980 = vmatpush1.bf16.msra.mxu0 0
      %981 = vmatprep.subr.bf16.mxu0 0
      %982 = vmatpush1.bf16.msra.mxu0 0
      %983 = vmatprep.subr.bf16.mxu0 0
      %984 = vmatpush1.bf16.msra.mxu0 0
      %985 = vmatprep.subr.bf16.mxu0 0
      %986 = vmatpush1.bf16.msra.mxu0 0
      %987 = vmatprep.subr.bf16.mxu0 0
      %988 = vmatpush1.bf16.msra.mxu0 0
      %989 = vmatprep.subr.bf16.mxu0 0
      %990 = vmatpush1.bf16.msra.mxu0 0
      %991 = vmatprep.subr.bf16.mxu0 0
      %992 = vmatpush1.bf16.msra.mxu0 0
      %993 = vmatprep.subr.bf16.mxu0 0
      %994 = vmatpush1.bf16.msra.mxu0 0
      %995 = vmatprep.subr.bf16.mxu0 0
      %996 = vmatpush1.bf16.msra.mxu0 0
      %997 = vmatprep.subr.bf16.mxu0 0
      %998 = vmatpush1.bf16.msra.mxu0 0
      %999 = vmatprep.mubr.bf16.mxu0 0
      %1000 = vmatmul.mubr.bf16.gmra.mrb[0].mxu0 %v956
      %v1001 = vpop.f32.mrb[0].mxu0
      %v1002 = vadd.f32 0.0, %v1001
      %v1003 = vpop.f32.mrb[0].mxu0
      %v1004 = vadd.f32 0.0, %v1003
      %v1005 = vpop.f32.mrb[0].mxu0
      %v1006 = vpop.f32.mrb[0].mxu0
      %1007 = vdwg.mxu0
      %1008 = vmatprep.subr.bf16.mxu0 0
      %1009 = vmatpush1.bf16.msra.mxu0 %v965
      %1010 = vmatprep.subr.bf16.mxu0 0
      %1011 = vmatpush1.bf16.msra.mxu0 0
      %1012 = vmatprep.subr.bf16.mxu0 0
      %1013 = vmatpush1.bf16.msra.mxu0 0
      %1014 = vmatprep.subr.bf16.mxu0 0
      %1015 = vmatpush1.bf16.msra.mxu0 0
      %1016 = vmatprep.subr.bf16.mxu0 0
      %1017 = vmatpush1.bf16.msra.mxu0 0
      %1018 = vmatprep.subr.bf16.mxu0 0
      %1019 = vmatpush1.bf16.msra.mxu0 0
      %1020 = vmatprep.subr.bf16.mxu0 0
      %1021 = vmatpush1.bf16.msra.mxu0 0
      %1022 = vmatprep.subr.bf16.mxu0 0
      %1023 = vmatpush1.bf16.msra.mxu0 0
      %1024 = vmatprep.subr.bf16.mxu0 0
      %1025 = vmatpush1.bf16.msra.mxu0 0
      %1026 = vmatprep.subr.bf16.mxu0 0
      %1027 = vmatpush1.bf16.msra.mxu0 0
      %1028 = vmatprep.subr.bf16.mxu0 0
      %1029 = vmatpush1.bf16.msra.mxu0 0
      %1030 = vmatprep.subr.bf16.mxu0 0
      %1031 = vmatpush1.bf16.msra.mxu0 0
      %1032 = vmatprep.subr.bf16.mxu0 0
      %1033 = vmatpush1.bf16.msra.mxu0 0
      %1034 = vmatprep.subr.bf16.mxu0 0
      %1035 = vmatpush1.bf16.msra.mxu0 0
      %1036 = vmatprep.subr.bf16.mxu0 0
      %1037 = vmatpush1.bf16.msra.mxu0 0
      %1038 = vmatprep.subr.bf16.mxu0 0
      %1039 = vmatpush1.bf16.msra.mxu0 0
      %1040 = vmatprep.mubr.bf16.mxu0 0
      %1041 = vmatmul.mubr.bf16.gmra.mrb[0].mxu0 %v956
      %v1042 = vpop.f32.mrb[0].mxu0
      %v1043 = vadd.f32 0.0, %v1042
      %v1044 = vpop.f32.mrb[0].mxu0
      %v1045 = vpop.f32.mrb[0].mxu0
      %v1046 = vpop.f32.mrb[0].mxu0
      %1047 = vdwg.mxu0
      %v1048 = vadd.f32 %v923, %v1002
      %v1049 = vadd.f32 %v924, %v1004
      %v1050 = vadd.f32 %v925, %v1043
      %v1051 = vld [vmem:[%s197] sm:$0x3f]
      %s1052 = scalar_lea.vmem %s1, 14
      %v1053 = vld [vmem:[%s1052] sm:$0x3]
      %v1055 = vcombine.high %v1051, %v1051
      %v1057 = vunpack.c.l.s4 1983009808
      %v1058 = vunpack.c.0.s8 %v1057
      %v1059 = vlaneseq
      %v1060 = vshrl.u32 %v1059, 7
      %v1061 = vsub.s32 %v1058, %v1060
      %v1062 = vrot.slane %v1051, %v1061
      %v1064 = vunpack.c.l.s4 1983009808
      %v1065 = vunpack.c.0.s8 %v1064
      %v1066 = vlaneseq
      %v1067 = vshrl.u32 %v1066, 7
      %v1068 = vsub.s32 %v1065, %v1067
      %v1069 = vrot.slane %v1055, %v1068
      %v1070 = vcombine.high %v1062, %v1062
      %1071 = vrot.lane.b32.xlu0 %v1062, 91
      %v1072 = vpop.permute.xlu0 %1071
      %1073 = vrot.lane.b32.xlu0 %v1070, 91
      %v1074 = vpop.permute.xlu0 %1073
      %1075 = vrot.lane.b32.xlu0 %v1069, 91
      %v1076 = vpop.permute.xlu0 %1075
      %vm1077 = vcmask 744448
      %v1078 = vsel %vm1077, %v1072, %v1074
      %v1079 = vsel %vm1077, %v1074, %v1076
      %v1081 = vsel %vm238, %v1053, 0
      %v1084 = vsel %vm242, %v1078, 0
      %v1087 = vsel %vm242, %v1079, 0
      %v1090 = vsel %vm242, %v1076, 0
      %1092 = vmatprep.subr.bf16.mxu0 %v1087
      %1093 = vmatpush1.bf16.msra.mxu0 %v1084
      %1094 = vmatprep.subr.bf16.mxu0 0
      %1095 = vmatpush1.bf16.msra.mxu0 0
      %1096 = vmatprep.subr.bf16.mxu0 0
      %1097 = vmatpush1.bf16.msra.mxu0 0
      %1098 = vmatprep.subr.bf16.mxu0 0
      %1099 = vmatpush1.bf16.msra.mxu0 0
      %1100 = vmatprep.subr.bf16.mxu0 0
      %1101 = vmatpush1.bf16.msra.mxu0 0
      %1102 = vmatprep.subr.bf16.mxu0 0
      %1103 = vmatpush1.bf16.msra.mxu0 0
      %1104 = vmatprep.subr.bf16.mxu0 0
      %1105 = vmatpush1.bf16.msra.mxu0 0
      %1106 = vmatprep.subr.bf16.mxu0 0
      %1107 = vmatpush1.bf16.msra.mxu0 0
      %1108 = vmatprep.subr.bf16.mxu0 0
      %1109 = vmatpush1.bf16.msra.mxu0 0
      %1110 = vmatprep.subr.bf16.mxu0 0
      %1111 = vmatpush1.bf16.msra.mxu0 0
      %1112 = vmatprep.subr.bf16.mxu0 0
      %1113 = vmatpush1.bf16.msra.mxu0 0
      %1114 = vmatprep.subr.bf16.mxu0 0
      %1115 = vmatpush1.bf16.msra.mxu0 0
      %1116 = vmatprep.subr.bf16.mxu0 0
      %1117 = vmatpush1.bf16.msra.mxu0 0
      %1118 = vmatprep.subr.bf16.mxu0 0
      %1119 = vmatpush1.bf16.msra.mxu0 0
      %1120 = vmatprep.subr.bf16.mxu0 0
      %1121 = vmatpush1.bf16.msra.mxu0 0
      %1122 = vmatprep.subr.bf16.mxu0 0
      %1123 = vmatpush1.bf16.msra.mxu0 0
      %1124 = vmatprep.mubr.bf16.mxu0 0
      %1125 = vmatmul.mubr.bf16.gmra.mrb[0].mxu0 %v1081
      %v1126 = vpop.f32.mrb[0].mxu0
      %v1127 = vadd.f32 0.0, %v1126
      %v1128 = vpop.f32.mrb[0].mxu0
      %v1129 = vadd.f32 0.0, %v1128
      %v1130 = vpop.f32.mrb[0].mxu0
      %v1131 = vpop.f32.mrb[0].mxu0
      %1132 = vdwg.mxu0
      %1133 = vmatprep.subr.bf16.mxu0 0
      %1134 = vmatpush1.bf16.msra.mxu0 %v1090
      %1135 = vmatprep.subr.bf16.mxu0 0
      %1136 = vmatpush1.bf16.msra.mxu0 0
      %1137 = vmatprep.subr.bf16.mxu0 0
      %1138 = vmatpush1.bf16.msra.mxu0 0
      %1139 = vmatprep.subr.bf16.mxu0 0
      %1140 = vmatpush1.bf16.msra.mxu0 0
      %1141 = vmatprep.subr.bf16.mxu0 0
      %1142 = vmatpush1.bf16.msra.mxu0 0
      %1143 = vmatprep.subr.bf16.mxu0 0
      %1144 = vmatpush1.bf16.msra.mxu0 0
      %1145 = vmatprep.subr.bf16.mxu0 0
      %1146 = vmatpush1.bf16.msra.mxu0 0
      %1147 = vmatprep.subr.bf16.mxu0 0
      %1148 = vmatpush1.bf16.msra.mxu0 0
      %1149 = vmatprep.subr.bf16.mxu0 0
      %1150 = vmatpush1.bf16.msra.mxu0 0
      %1151 = vmatprep.subr.bf16.mxu0 0
      %1152 = vmatpush1.bf16.msra.mxu0 0
      %1153 = vmatprep.subr.bf16.mxu0 0
      %1154 = vmatpush1.bf16.msra.mxu0 0
      %1155 = vmatprep.subr.bf16.mxu0 0
      %1156 = vmatpush1.bf16.msra.mxu0 0
      %1157 = vmatprep.subr.bf16.mxu0 0
      %1158 = vmatpush1.bf16.msra.mxu0 0
      %1159 = vmatprep.subr.bf16.mxu0 0
      %1160 = vmatpush1.bf16.msra.mxu0 0
      %1161 = vmatprep.subr.bf16.mxu0 0
      %1162 = vmatpush1.bf16.msra.mxu0 0
      %1163 = vmatprep.subr.bf16.mxu0 0
      %1164 = vmatpush1.bf16.msra.mxu0 0
      %1165 = vmatprep.mubr.bf16.mxu0 0
      %1166 = vmatmul.mubr.bf16.gmra.mrb[0].mxu0 %v1081
      %v1167 = vpop.f32.mrb[0].mxu0
      %v1168 = vadd.f32 0.0, %v1167
      %v1169 = vpop.f32.mrb[0].mxu0
      %v1170 = vpop.f32.mrb[0].mxu0
      %v1171 = vpop.f32.mrb[0].mxu0
      %1172 = vdwg.mxu0
      %v1173 = vadd.f32 %v1048, %v1127
      %v1174 = vadd.f32 %v1049, %v1129
      %v1175 = vadd.f32 %v1050, %v1168
      %v1176 = vld [vmem:[%s197] sm:$0x3f]
      %s1177 = scalar_lea.vmem %s1, 16
      %v1178 = vld [vmem:[%s1177] sm:$0x3]
      %v1180 = vcombine.high %v1176, %v1176
      %v1182 = vunpack.c.l.s4 1983009808
      %v1183 = vunpack.c.0.s8 %v1182
      %v1184 = vlaneseq
      %v1185 = vshrl.u32 %v1184, 7
      %v1186 = vsub.s32 %v1183, %v1185
      %v1187 = vrot.slane %v1176, %v1186
      %v1189 = vunpack.c.l.s4 1983009808
      %v1190 = vunpack.c.0.s8 %v1189
      %v1191 = vlaneseq
      %v1192 = vshrl.u32 %v1191, 7
      %v1193 = vsub.s32 %v1190, %v1192
      %v1194 = vrot.slane %v1180, %v1193
      %v1195 = vcombine.high %v1187, %v1187
      %1196 = vrot.lane.b32.xlu0 %v1187, 90
      %v1197 = vpop.permute.xlu0 %1196
      %1198 = vrot.lane.b32.xlu0 %v1195, 90
      %v1199 = vpop.permute.xlu0 %1198
      %1200 = vrot.lane.b32.xlu0 %v1194, 90
      %v1201 = vpop.permute.xlu0 %1200
      %vm1202 = vcmask 736256
      %v1203 = vsel %vm1202, %v1197, %v1199
      %v1204 = vsel %vm1202, %v1199, %v1201
      %v1206 = vsel %vm238, %v1178, 0
      %v1209 = vsel %vm242, %v1203, 0
      %v1212 = vsel %vm242, %v1204, 0
      %v1215 = vsel %vm242, %v1201, 0
      %1217 = vmatprep.subr.bf16.mxu0 %v1212
      %1218 = vmatpush1.bf16.msra.mxu0 %v1209
      %1219 = vmatprep.subr.bf16.mxu0 0
      %1220 = vmatpush1.bf16.msra.mxu0 0
      %1221 = vmatprep.subr.bf16.mxu0 0
      %1222 = vmatpush1.bf16.msra.mxu0 0
      %1223 = vmatprep.subr.bf16.mxu0 0
      %1224 = vmatpush1.bf16.msra.mxu0 0
      %1225 = vmatprep.subr.bf16.mxu0 0
      %1226 = vmatpush1.bf16.msra.mxu0 0
      %1227 = vmatprep.subr.bf16.mxu0 0
      %1228 = vmatpush1.bf16.msra.mxu0 0
      %1229 = vmatprep.subr.bf16.mxu0 0
      %1230 = vmatpush1.bf16.msra.mxu0 0
      %1231 = vmatprep.subr.bf16.mxu0 0
      %1232 = vmatpush1.bf16.msra.mxu0 0
      %1233 = vmatprep.subr.bf16.mxu0 0
      %1234 = vmatpush1.bf16.msra.mxu0 0
      %1235 = vmatprep.subr.bf16.mxu0 0
      %1236 = vmatpush1.bf16.msra.mxu0 0
      %1237 = vmatprep.subr.bf16.mxu0 0
      %1238 = vmatpush1.bf16.msra.mxu0 0
      %1239 = vmatprep.subr.bf16.mxu0 0
      %1240 = vmatpush1.bf16.msra.mxu0 0
      %1241 = vmatprep.subr.bf16.mxu0 0
      %1242 = vmatpush1.bf16.msra.mxu0 0
      %1243 = vmatprep.subr.bf16.mxu0 0
      %1244 = vmatpush1.bf16.msra.mxu0 0
      %1245 = vmatprep.subr.bf16.mxu0 0
      %1246 = vmatpush1.bf16.msra.mxu0 0
      %1247 = vmatprep.subr.bf16.mxu0 0
      %1248 = vmatpush1.bf16.msra.mxu0 0
      %1249 = vmatprep.mubr.bf16.mxu0 0
      %1250 = vmatmul.mubr.bf16.gmra.mrb[0].mxu0 %v1206
      %v1251 = vpop.f32.mrb[0].mxu0
      %v1252 = vadd.f32 0.0, %v1251
      %v1253 = vpop.f32.mrb[0].mxu0
      %v1254 = vadd.f32 0.0, %v1253
      %v1255 = vpop.f32.mrb[0].mxu0
      %v1256 = vpop.f32.mrb[0].mxu0
      %1257 = vdwg.mxu0
      %1258 = vmatprep.subr.bf16.mxu0 0
      %1259 = vmatpush1.bf16.msra.mxu0 %v1215
      %1260 = vmatprep.subr.bf16.mxu0 0
      %1261 = vmatpush1.bf16.msra.mxu0 0
      %1262 = vmatprep.subr.bf16.mxu0 0
      %1263 = vmatpush1.bf16.msra.mxu0 0
      %1264 = vmatprep.subr.bf16.mxu0 0
      %1265 = vmatpush1.bf16.msra.mxu0 0
      %1266 = vmatprep.subr.bf16.mxu0 0
      %1267 = vmatpush1.bf16.msra.mxu0 0
      %1268 = vmatprep.subr.bf16.mxu0 0
      %1269 = vmatpush1.bf16.msra.mxu0 0
      %1270 = vmatprep.subr.bf16.mxu0 0
      %1271 = vmatpush1.bf16.msra.mxu0 0
      %1272 = vmatprep.subr.bf16.mxu0 0
      %1273 = vmatpush1.bf16.msra.mxu0 0
      %1274 = vmatprep.subr.bf16.mxu0 0
      %1275 = vmatpush1.bf16.msra.mxu0 0
      %1276 = vmatprep.subr.bf16.mxu0 0
      %1277 = vmatpush1.bf16.msra.mxu0 0
      %1278 = vmatprep.subr.bf16.mxu0 0
      %1279 = vmatpush1.bf16.msra.mxu0 0
      %1280 = vmatprep.subr.bf16.mxu0 0
      %1281 = vmatpush1.bf16.msra.mxu0 0
      %1282 = vmatprep.subr.bf16.mxu0 0
      %1283 = vmatpush1.bf16.msra.mxu0 0
      %1284 = vmatprep.subr.bf16.mxu0 0
      %1285 = vmatpush1.bf16.msra.mxu0 0
      %1286 = vmatprep.subr.bf16.mxu0 0
      %1287 = vmatpush1.bf16.msra.mxu0 0
      %1288 = vmatprep.subr.bf16.mxu0 0
      %1289 = vmatpush1.bf16.msra.mxu0 0
      %1290 = vmatprep.mubr.bf16.mxu0 0
      %1291 = vmatmul.mubr.bf16.gmra.mrb[0].mxu0 %v1206
      %v1292 = vpop.f32.mrb[0].mxu0
      %v1293 = vadd.f32 0.0, %v1292
      %v1294 = vpop.f32.mrb[0].mxu0
      %v1295 = vpop.f32.mrb[0].mxu0
      %v1296 = vpop.f32.mrb[0].mxu0
      %1297 = vdwg.mxu0
      %v1298 = vadd.f32 %v1173, %v1252
      %v1299 = vadd.f32 %v1174, %v1254
      %v1300 = vadd.f32 %v1175, %v1293
      %v1301 = vld [vmem:[%s2] sm:$0xf]
      %1303 = vset.pattern.permute.xlu0 0
      %1304 = vperm.xlu0 %1303, %v1301
      %v1305 = vpop.permute.xlu0 %1304
      %v1307 = vadd.f32 %v1298, %v1305
      %v1308 = vadd.f32 %v1299, %v1305
      %v1309 = vadd.f32 %v1300, %v1305
      %v1310 = vmul.f32 %v1307, 0.2
      %v1311 = vmul.f32 %v1308, 0.2
      %v1312 = vmul.f32 %v1309, 0.2
      %v1313 = vmax.f32 %v1307, %v1310
      %v1314 = vmax.f32 %v1308, %v1311
      %v1315 = vmax.f32 %v1309, %v1312
      %v1316 = vpack.c.bf16 %v1313, %v1313
      %v1317 = vpack.c.bf16 %v1314, %v1314
      %v1318 = vpack.c.bf16 %v1315, %v1315
      %v1322 = vcombine.low %v1316, %v1317
      %v1324 = vunpack.c.l.s4 1983009808
      %v1325 = vunpack.c.0.s8 %v1324
      %v1326 = vlaneseq
      %v1327 = vshrl.u32 %v1326, 7
      %v1328 = vsub.s32 %v1325, %v1327
      %v1329 = vrot.slane %v1322, %v1328
      %v1331 = vunpack.c.l.s4 1983009808
      %v1332 = vunpack.c.0.s8 %v1331
      %v1333 = vlaneseq
      %v1334 = vshrl.u32 %v1333, 7
      %v1335 = vsub.s32 %v1332, %v1334
      %v1336 = vrot.slane %v1318, %v1335
      %v1337 = vcombine.low %v1329, %v1336
      %vm1339 = vcmask 1043458
      %vm1340 = vmor %vm1339, %vm242
      %vm1341 = vcmask 259076
      %vm1342 = vmor %vm1341, %vm1340
      %1343 = vst.msk [vmem:[%s206] sm:$0x3f] %vm1342, %v1337
      %p1344 = scmp.lt.s32.totalorder %s18, 1
      %s1345 = scalar_select %p1344, %s18, 1
      %p1346 = scmp.lt.s32.totalorder %s19, 0
      %s1347 = scalar_select %p1346, %s19, 0
      %s1348 = smul.addr %s1347, 3
      %s1349 = smul.addr %s1345, 3
      %s1350 = sadd.s32 %s1348, %s1349
      %s1351 = smul.addr %s1350, 2
      %s1352 = scalar_lea.vmem %s3, %s1351
      // Predicated region
      $region33: #{encoder_block_pallas.3} parent=31 // pred_check
        %p1353 = pneg %p116
      $region34: #{encoder_block_pallas.3} parent=31 // pred_check_branch
        %1355 = sbr.rel (%p1353) target = $region36
      $region35: #{encoder_block_pallas.3} parent=31 // pred_region
        _
      $region36: #{encoder_block_pallas.3} parent=31 // pred_fallthru
        _
    $region32: #{encoder_block_pallas.3} parent=5 // pred_fallthru
      _
    %p1356 = scmp.le.s32.totalorder 2, %s9
    // Predicated region
    $region37: #{encoder_block_pallas.3} parent=5 // pred_check
      %p1357 = pneg %p1356
    $region38: #{encoder_block_pallas.3} parent=5 // pred_check_branch
      %1359 = sbr.rel (%p1357) target = $region40
    $region39: #{encoder_block_pallas.3} parent=5 // pred_region
      %s1360 = ssub.s32 %s9, 2
      // Predicated region
      $region41: #{encoder_block_pallas.3} parent=39 // pred_check
        %p1361 = pneg %p122
      $region42: #{encoder_block_pallas.3} parent=39 // pred_check_branch
        %1363 = sbr.rel (%p1361) target = $region44
      $region43: #{encoder_block_pallas.3} parent=39 // pred_region
        %p1364 = scmp.lt.s32.totalorder %s20, 1
        %s1365 = scalar_select %p1364, %s20, 1
        %p1366 = scmp.lt.s32.totalorder %s21, 0
        %s1367 = scalar_select %p1366, %s21, 0
        %s1368 = smul.addr %s1367, 3
        %s1369 = smul.addr %s1365, 3
        %s1370 = sadd.s32 %s1368, %s1369
        %s1371 = smul.addr %s1370, 2
        %s1372 = scalar_lea.vmem %s3, %s1371
      $region44: #{encoder_block_pallas.3} parent=39 // pred_fallthru
        _
    $region40: #{encoder_block_pallas.3} parent=5 // pred_fallthru
      _
  $region6: #{encoder_block_pallas.3} parent=0 // loop_footer
    %s13 = sadd.s32 1, %s9
  $region7: #{encoder_block_pallas.3} parent=0 // loop_footer_branch
    %8 = sbr.rel target = $region3
  $region8: #{encoder_block_pallas.3} parent=0 // loop_exit
    _

// kernel: encoder_block_pallas.5
$region0: #{encoder_block_pallas.5}
  #allocation0 [shape = 'u32[]', space=smem, size = 0x4, offset = 0x4, fixed_abs, tag = 'smem constant byte address 0x4 - core index']
  #allocation1 [shape = 'u32[144,128]{1,0:T(1,128)}', space=vmem, size = 0x12000, scoped, tag = 'internal scratch']
  %s0 = inlined_call_operand.vmem [shape: bf16[2,1,8,72], index: 0, kind: input, shape index: {}]
  %s1 = inlined_call_operand.vmem [shape: f32[2,8,2], index: 1, kind: input, shape index: {}]
  %s2 = inlined_call_operand.vmem [shape: f32[2,1,8,72], index: 2, kind: output, shape index: {}]
  %s3 = sld [smem:[#allocation0]]
  $region41: #{encoder_block_pallas.5} parent=0
    _
  %s5 = ssub.s32 1, %s3
  %s6 = scalar_select 0, %s5, %s3
  loop: start=0, step=1, limit=4
  $region2: #{encoder_block_pallas.5} parent=0 // loop_pre_header
    _
  $region3: #{encoder_block_pallas.5} parent=0 // loop_header
    %s8 = sphi 0, %s12
    %p9 = scmp.ge.s32.totalorder %s8, 4
    %s15 = sphi 0, %s27
    %s16 = sphi 0, %s23
    %s17 = sphi 0, %s15
    %s18 = sphi 0, %s16
    %s19 = sphi 0, %s17
    %s20 = sphi 0, %s18
    %s32 = sphi 0, %s34
    %s35 = sphi 0, %s32
    %s36 = sphi 0, %s35
    %s52 = sphi 0, %s36
    %s58 = sphi 0, %s60
    %s61 = sphi 0, %s58
    %s62 = sphi 0, %s61
    %s78 = sphi 0, %s62
    %s86 = sphi 0, %s88
    %s89 = sphi 0, %s86
    %s90 = sphi 0, %s89
    %s106 = sphi 0, %s90
  $region4: #{encoder_block_pallas.5} parent=0 // loop_header_branch
    %11 = sbr.rel (%p9) target = $region8
  $region5: #{encoder_block_pallas.5} parent=0 // loop_body
    %s13 = ssub.s32 %s8, 1
    %s14 = ssub.s32 %s8, 2
    %s21 = sadd.s32 1, %s16
    %p22 = scmp.ge.s32.totalorder %s21, 1
    %s23 = scalar_select %p22, 0, %s21
    %s24 = sadd.s32 1, %s15
    %s25 = scalar_select %p22, %s24, %s15
    %p26 = scmp.ge.s32.totalorder %s25, 2
    %s27 = scalar_select %p26, 0, %s25
    %s28 = ssub.s32 %s15, %s27
    %s29 = ssub.s32 %s16, %s23
    %s30 = sor.u32 %s28, %s29
    %p31 = scmp.eq.s32.totalorder %s30, 0
    %s33 = sadd.s32 %s32, 1
    %s34 = scalar_select %p31, %s32, %s33
    %p37 = pneg %p31
    %p38 = scmp.eq.s32.totalorder %s8, 1
    %p39 = por %p37, %p38
    %p40 = scmp.ne.s32.totalorder %s32, %s35
    %p41 = scmp.eq.s32.totalorder %s8, 0
    %p42 = por %p40, %p41
    %p43 = scmp.ne.s32.totalorder %s32, %s35
    %p44 = scmp.eq.s32.totalorder %s13, 1
    %p45 = por %p43, %p44
    %p46 = scmp.ne.s32.totalorder %s35, %s36
    %p47 = scmp.eq.s32.totalorder %s13, 0
    %p48 = por %p46, %p47
    %p49 = scmp.ne.s32.totalorder %s35, %s36
    %p50 = scmp.eq.s32.totalorder %s14, 1
    %p51 = por %p49, %p50
    %p53 = scmp.ne.s32.totalorder %s36, %s52
    %p54 = scmp.eq.s32.totalorder %s14, 0
    %p55 = por %p53, %p54
    %s56 = ssub.s32 %s15, %s27
    %p57 = scmp.eq.s32.totalorder %s56, 0
    %s59 = sadd.s32 %s58, 1
    %s60 = scalar_select %p57, %s58, %s59
    %p63 = pneg %p57
    %p64 = scmp.eq.s32.totalorder %s8, 1
    %p65 = por %p63, %p64
    %p66 = scmp.ne.s32.totalorder %s58, %s61
    %p67 = scmp.eq.s32.totalorder %s8, 0
    %p68 = por %p66, %p67
    %p69 = scmp.ne.s32.totalorder %s58, %s61
    %p70 = scmp.eq.s32.totalorder %s13, 1
    %p71 = por %p69, %p70
    %p72 = scmp.ne.s32.totalorder %s61, %s62
    %p73 = scmp.eq.s32.totalorder %s13, 0
    %p74 = por %p72, %p73
    %p75 = scmp.ne.s32.totalorder %s61, %s62
    %p76 = scmp.eq.s32.totalorder %s14, 1
    %p77 = por %p75, %p76
    %p79 = scmp.ne.s32.totalorder %s62, %s78
    %p80 = scmp.eq.s32.totalorder %s14, 0
    %p81 = por %p79, %p80
    %s82 = ssub.s32 %s15, %s27
    %s83 = ssub.s32 %s16, %s23
    %s84 = sor.u32 %s82, %s83
    %p85 = scmp.eq.s32.totalorder %s84, 0
    %s87 = sadd.s32 %s86, 1
    %s88 = scalar_select %p85, %s86, %s87
    %p91 = pneg %p85
    %p92 = scmp.eq.s32.totalorder %s8, 1
    %p93 = por %p91, %p92
    %p94 = scmp.ne.s32.totalorder %s86, %s89
    %p95 = scmp.eq.s32.totalorder %s8, 0
    %p96 = por %p94, %p95
    %p97 = scmp.ne.s32.totalorder %s86, %s89
    %p98 = scmp.eq.s32.totalorder %s13, 1
    %p99 = por %p97, %p98
    %p100 = scmp.ne.s32.totalorder %s89, %s90
    %p101 = scmp.eq.s32.totalorder %s13, 0
    %p102 = por %p100, %p101
    %p103 = scmp.ne.s32.totalorder %s89, %s90
    %p104 = scmp.eq.s32.totalorder %s14, 1
    %p105 = por %p103, %p104
    %p107 = scmp.ne.s32.totalorder %s90, %s106
    %p108 = scmp.eq.s32.totalorder %s14, 0
    %p109 = por %p107, %p108
    %p110 = scmp.le.s32.totalorder 1, %s8
    %p111 = scmp.lt.s32.totalorder %s8, 3
    %p112 = pnand %p110, %p111
    %p113 = pneg %p112
    // Predicated region
    $region9: #{encoder_block_pallas.5} parent=5 // pred_check
      _
    $region10: #{encoder_block_pallas.5} parent=5 // pred_check_branch
      %115 = sbr.rel (%p112) target = $region12
    $region11: #{encoder_block_pallas.5} parent=5 // pred_region
      %s116 = ssub.s32 %s8, 1
    $region12: #{encoder_block_pallas.5} parent=5 // pred_fallthru
      _
    %p117 = scmp.lt.s32.totalorder %s8, 2
    // Predicated region
    $region13: #{encoder_block_pallas.5} parent=5 // pred_check
      %p118 = pneg %p117
    $region14: #{encoder_block_pallas.5} parent=5 // pred_check_branch
      %120 = sbr.rel (%p118) target = $region16
    $region15: #{encoder_block_pallas.5} parent=5 // pred_region
      // Predicated region
      $region17: #{encoder_block_pallas.5} parent=15 // pred_check
        %p121 = pneg %p42
      $region18: #{encoder_block_pallas.5} parent=15 // pred_check_branch
        %123 = sbr.rel (%p121) target = $region20
      $region19: #{encoder_block_pallas.5} parent=15 // pred_region
        %p124 = scmp.lt.s32.totalorder %s15, 1
        %s125 = scalar_select %p124, %s15, 1
        %p126 = scmp.lt.s32.totalorder %s16, 0
        %s127 = scalar_select %p126, %s16, 0
        %s128 = sadd.s32 %s127, %s125
        %s129 = smul.addr %s128, 4
        %s130 = scalar_lea.vmem %s0, %s129
      $region20: #{encoder_block_pallas.5} parent=15 // pred_fallthru
        _
      // Predicated region
      $region21: #{encoder_block_pallas.5} parent=15 // pred_check
        %p131 = pneg %p68
      $region22: #{encoder_block_pallas.5} parent=15 // pred_check_branch
        %133 = sbr.rel (%p131) target = $region24
      $region23: #{encoder_block_pallas.5} parent=15 // pred_region
        %p134 = scmp.lt.s32.totalorder %s15, 1
        %s135 = scalar_select %p134, %s15, 1
        %s136 = smul.addr %s135, 8
        %s137 = scalar_lea.vmem %s1, %s136
      $region24: #{encoder_block_pallas.5} parent=15 // pred_fallthru
        _
    $region16: #{encoder_block_pallas.5} parent=5 // pred_fallthru
      _
    %p138 = scmp.le.s32.totalorder 1, %s8
    %p139 = scmp.lt.s32.totalorder %s8, 3
    %p140 = pnand %p138, %p139
    %p141 = pneg %p140
    // Predicated region
    $region25: #{encoder_block_pallas.5} parent=5 // pred_check
      _
    $region26: #{encoder_block_pallas.5} parent=5 // pred_check_branch
      %143 = sbr.rel (%p140) target = $region28
    $region27: #{encoder_block_pallas.5} parent=5 // pred_region
      %s144 = ssub.s32 %s8, 1
      %p145 = scmp.lt.s32.totalorder %s17, 1
      %s146 = scalar_select %p145, %s17, 1
      %p147 = scmp.lt.s32.totalorder %s18, 0
      %s148 = scalar_select %p147, %s18, 0
      %s149 = sadd.s32 %s148, %s146
      %s150 = smul.addr %s149, 4
      %s151 = scalar_lea.vmem %s0, %s150
      %p152 = pneg %p48
      %p153 = pneg %p45
      %p154 = scmp.lt.s32.totalorder %s17, 1
      %s155 = scalar_select %p154, %s17, 1
      %s156 = smul.addr %s155, 8
      %s157 = scalar_lea.vmem %s1, %s156
      %p158 = pneg %p74
      %p159 = pneg %p71
      %p160 = pneg %p102
      %p161 = pneg %p99
      %p162 = scmp.lt.s32.totalorder %s17, 1
      %s163 = scalar_select %p162, %s17, 1
      %p164 = scmp.lt.s32.totalorder %s18, 0
      %s165 = scalar_select %p164, %s18, 0
      %s166 = sadd.s32 %s165, %s163
      %s167 = smul.addr %s166, 8
      %s168 = scalar_lea.vmem %s2, %s167
      %p169 = scmp.lt.s32.totalorder %s17, 1
      %s170 = scalar_select %p169, %s17, 1
      %p171 = scmp.lt.s32.totalorder %s18, 0
      %s172 = scalar_select %p171, %s18, 0
      %s173 = sadd.s32 %s172, %s170
      %s174 = smul.addr %s173, 4
      %s175 = scalar_lea.vmem %s0, %s174
      %p176 = scmp.lt.s32.totalorder %s17, 1
      %s177 = scalar_select %p176, %s17, 1
      %s178 = smul.addr %s177, 8
      %s179 = scalar_lea.vmem %s1, %s178
      %p180 = scmp.lt.s32.totalorder %s17, 1
      %s181 = scalar_select %p180, %s17, 1
      %p182 = scmp.lt.s32.totalorder %s18, 0
      %s183 = scalar_select %p182, %s18, 0
      %s184 = sadd.s32 %s183, %s181
      %s185 = smul.addr %s184, 8
      %s186 = scalar_lea.vmem %s2, %s185
      %v187 = vld [vmem:[%s179] sm:$0xff]
      %v188 = vld [vmem:[%s175] sm:$0xf]
      %v189 = vunpack.c.l.bf16 %v188
      %191 = vset.pattern.permute.xlu0 0
      %192 = vperm.xlu0 %191, %v187
      %v193 = vpop.permute.xlu0 %192
      %v195 = vsub.f32 %v189, %v193
      %196 = vset.pattern.permute.xlu0 1
      %197 = vperm.xlu0 %196, %v187
      %v198 = vpop.permute.xlu0 %197
      %v200 = vmul.f32 %v195, %v198
      %v201 = vmul.f32 %v200, 0.2
      %v202 = vmax.f32 %v200, %v201
      %vm203 = vcmask 588800
      %204 = vst.msk [vmem:[%s186] sm:$0xff] %vm203, %v202
      %p205 = scmp.lt.s32.totalorder %s17, 1
      %s206 = scalar_select %p205, %s17, 1
      %p207 = scmp.lt.s32.totalorder %s18, 0
      %s208 = scalar_select %p207, %s18, 0
      %s209 = sadd.s32 %s208, %s206
      %s210 = smul.addr %s209, 8
      %s211 = scalar_lea.vmem %s2, %s210
      // Predicated region
      $region29: #{encoder_block_pallas.5} parent=27 // pred_check
        %p212 = pneg %p99
      $region30: #{encoder_block_pallas.5} parent=27 // pred_check_branch
        %214 = sbr.rel (%p212) target = $region32
      $region31: #{encoder_block_pallas.5} parent=27 // pred_region
        _
      $region32: #{encoder_block_pallas.5} parent=27 // pred_fallthru
        _
    $region28: #{encoder_block_pallas.5} parent=5 // pred_fallthru
      _
    %p215 = scmp.le.s32.totalorder 2, %s8
    // Predicated region
    $region33: #{encoder_block_pallas.5} parent=5 // pred_check
      %p216 = pneg %p215
    $region34: #{encoder_block_pallas.5} parent=5 // pred_check_branch
      %218 = sbr.rel (%p216) target = $region36
    $region35: #{encoder_block_pallas.5} parent=5 // pred_region
      %s219 = ssub.s32 %s8, 2
      // Predicated region
      $region37: #{encoder_block_pallas.5} parent=35 // pred_check
        %p220 = pneg %p105
      $region38: #{encoder_block_pallas.5} parent=35 // pred_check_branch
        %222 = sbr.rel (%p220) target = $region40
      $region39: #{encoder_block_pallas.5} parent=35 // pred_region
        %p223 = scmp.lt.s32.totalorder %s19, 1
        %s224 = scalar_select %p223, %s19, 1
        %p225 = scmp.lt.s32.totalorder %s20, 0
        %s226 = scalar_select %p225, %s20, 0
        %s227 = sadd.s32 %s226, %s224
        %s228 = smul.addr %s227, 8
        %s229 = scalar_lea.vmem %s2, %s228
      $region40: #{encoder_block_pallas.5} parent=35 // pred_fallthru
        _
    $region36: #{encoder_block_pallas.5} parent=5 // pred_fallthru
      _
  $region6: #{encoder_block_pallas.5} parent=0 // loop_footer
    %s12 = sadd.s32 1, %s8
  $region7: #{encoder_block_pallas.5} parent=0 // loop_footer_branch
    %7 = sbr.rel target = $region3
  $region8: #{encoder_block_pallas.5} parent=0 // loop_exit
    _

// kernel: encoder_block_pallas.4
$region0: #{encoder_block_pallas.4}
  #allocation0 [shape = 'u32[]', space=smem, size = 0x4, offset = 0x4, fixed_abs, tag = 'smem constant byte address 0x4 - core index']
  #allocation1 [shape = 'u32[144,128]{1,0:T(1,128)}', space=vmem, size = 0x12000, scoped, tag = 'internal scratch']
  #allocation2 [shape = 'f32[8,1]{1,0:T(8,128)}', space=vmem, size = 0x1000, scoped, tag = 'scratch operand']
  #allocation3 [shape = 'f32[8,1]{1,0:T(8,128)}', space=vmem, size = 0x1000, scoped, tag = 'scratch operand']
  %s0 = inlined_call_operand.vmem [shape: bf16[2,1,4,128], index: 0, kind: input, shape index: {}]
  %s1 = inlined_call_operand.vmem [shape: bf16[2,1,4,128], index: 1, kind: input, shape index: {}]
  %s2 = inlined_call_operand.vmem [shape: bf16[2,1,4,128], index: 2, kind: input, shape index: {}]
  %s3 = inlined_call_operand.vmem [shape: bf16[2,1,4,128], index: 3, kind: input, shape index: {}]
  %s4 = inlined_call_operand.vmem [shape: bf16[9,8,4], index: 4, kind: input, shape index: {}]
  %s5 = inlined_call_operand.vmem [shape: f32[8,1], index: 5, kind: input, shape index: {}]
  %s6 = inlined_call_operand.vmem [shape: bf16[4,8,8], index: 6, kind: input, shape index: {}]
  %s7 = inlined_call_operand.vmem [shape: bf16[2,1,8,72], index: 7, kind: output, shape index: {0}]
  %s8 = inlined_call_operand.vmem [shape: f32[2,8,2], index: 8, kind: output, shape index: {1}]
  %9 = xla_tuple %s7, %s8
  %s10 = sld [smem:[#allocation0]]
  $region77: #{encoder_block_pallas.4} parent=0
    _
  %s12 = ssub.s32 1, %s10
  %s13 = scalar_select 0, %s12, %s10
  loop: start=0, step=1, limit=4
  $region2: #{encoder_block_pallas.4} parent=0 // loop_pre_header
    _
  $region3: #{encoder_block_pallas.4} parent=0 // loop_header
    %s15 = sphi 0, %s19
    %p16 = scmp.ge.s32.totalorder %s15, 4
    %s22 = sphi 0, %s34
    %s23 = sphi 0, %s30
    %s24 = sphi 0, %s22
    %s25 = sphi 0, %s23
    %s26 = sphi 0, %s24
    %s27 = sphi 0, %s25
    %s39 = sphi 0, %s41
    %s42 = sphi 0, %s39
    %s43 = sphi 0, %s42
    %s59 = sphi 0, %s43
    %s67 = sphi 0, %s69
    %s70 = sphi 0, %s67
    %s71 = sphi 0, %s70
    %s87 = sphi 0, %s71
    %s95 = sphi 0, %s97
    %s98 = sphi 0, %s95
    %s99 = sphi 0, %s98
    %s115 = sphi 0, %s99
    %s123 = sphi 0, %s125
    %s126 = sphi 0, %s123
    %s127 = sphi 0, %s126
    %s143 = sphi 0, %s127
    %s147 = sphi 0, %s147
    %s149 = sphi 0, %s147
    %s150 = sphi 0, %s149
    %s164 = sphi 0, %s150
    %s168 = sphi 0, %s168
    %s170 = sphi 0, %s168
    %s171 = sphi 0, %s170
    %s185 = sphi 0, %s171
    %s189 = sphi 0, %s189
    %s191 = sphi 0, %s189
    %s192 = sphi 0, %s191
    %s206 = sphi 0, %s192
    %s214 = sphi 0, %s216
    %s217 = sphi 0, %s214
    %s218 = sphi 0, %s217
    %s234 = sphi 0, %s218
    %s240 = sphi 0, %s242
    %s243 = sphi 0, %s240
    %s244 = sphi 0, %s243
    %s260 = sphi 0, %s244
  $region4: #{encoder_block_pallas.4} parent=0 // loop_header_branch
    %18 = sbr.rel (%p16) target = $region8
  $region5: #{encoder_block_pallas.4} parent=0 // loop_body
    %s20 = ssub.s32 %s15, 1
    %s21 = ssub.s32 %s15, 2
    %s28 = sadd.s32 1, %s23
    %p29 = scmp.ge.s32.totalorder %s28, 1
    %s30 = scalar_select %p29, 0, %s28
    %s31 = sadd.s32 1, %s22
    %s32 = scalar_select %p29, %s31, %s22
    %p33 = scmp.ge.s32.totalorder %s32, 2
    %s34 = scalar_select %p33, 0, %s32
    %s35 = ssub.s32 %s22, %s34
    %s36 = ssub.s32 %s23, %s30
    %s37 = sor.u32 %s35, %s36
    %p38 = scmp.eq.s32.totalorder %s37, 0
    %s40 = sadd.s32 %s39, 1
    %s41 = scalar_select %p38, %s39, %s40
    %p44 = pneg %p38
    %p45 = scmp.eq.s32.totalorder %s15, 1
    %p46 = por %p44, %p45
    %p47 = scmp.ne.s32.totalorder %s39, %s42
    %p48 = scmp.eq.s32.totalorder %s15, 0
    %p49 = por %p47, %p48
    %p50 = scmp.ne.s32.totalorder %s39, %s42
    %p51 = scmp.eq.s32.totalorder %s20, 1
    %p52 = por %p50, %p51
    %p53 = scmp.ne.s32.totalorder %s42, %s43
    %p54 = scmp.eq.s32.totalorder %s20, 0
    %p55 = por %p53, %p54
    %p56 = scmp.ne.s32.totalorder %s42, %s43
    %p57 = scmp.eq.s32.totalorder %s21, 1
    %p58 = por %p56, %p57
    %p60 = scmp.ne.s32.totalorder %s43, %s59
    %p61 = scmp.eq.s32.totalorder %s21, 0
    %p62 = por %p60, %p61
    %s63 = ssub.s32 %s22, %s34
    %s64 = ssub.s32 %s23, %s30
    %s65 = sor.u32 %s63, %s64
    %p66 = scmp.eq.s32.totalorder %s65, 0
    %s68 = sadd.s32 %s67, 1
    %s69 = scalar_select %p66, %s67, %s68
    %p72 = pneg %p66
    %p73 = scmp.eq.s32.totalorder %s15, 1
    %p74 = por %p72, %p73
    %p75 = scmp.ne.s32.totalorder %s67, %s70
    %p76 = scmp.eq.s32.totalorder %s15, 0
    %p77 = por %p75, %p76
    %p78 = scmp.ne.s32.totalorder %s67, %s70
    %p79 = scmp.eq.s32.totalorder %s20, 1
    %p80 = por %p78, %p79
    %p81 = scmp.ne.s32.totalorder %s70, %s71
    %p82 = scmp.eq.s32.totalorder %s20, 0
    %p83 = por %p81, %p82
    %p84 = scmp.ne.s32.totalorder %s70, %s71
    %p85 = scmp.eq.s32.totalorder %s21, 1
    %p86 = por %p84, %p85
    %p88 = scmp.ne.s32.totalorder %s71, %s87
    %p89 = scmp.eq.s32.totalorder %s21, 0
    %p90 = por %p88, %p89
    %s91 = ssub.s32 %s22, %s34
    %s92 = ssub.s32 %s23, %s30
    %s93 = sor.u32 %s91, %s92
    %p94 = scmp.eq.s32.totalorder %s93, 0
    %s96 = sadd.s32 %s95, 1
    %s97 = scalar_select %p94, %s95, %s96
    %p100 = pneg %p94
    %p101 = scmp.eq.s32.totalorder %s15, 1
    %p102 = por %p100, %p101
    %p103 = scmp.ne.s32.totalorder %s95, %s98
    %p104 = scmp.eq.s32.totalorder %s15, 0
    %p105 = por %p103, %p104
    %p106 = scmp.ne.s32.totalorder %s95, %s98
    %p107 = scmp.eq.s32.totalorder %s20, 1
    %p108 = por %p106, %p107
    %p109 = scmp.ne.s32.totalorder %s98, %s99
    %p110 = scmp.eq.s32.totalorder %s20, 0
    %p111 = por %p109, %p110
    %p112 = scmp.ne.s32.totalorder %s98, %s99
    %p113 = scmp.eq.s32.totalorder %s21, 1
    %p114 = por %p112, %p113
    %p116 = scmp.ne.s32.totalorder %s99, %s115
    %p117 = scmp.eq.s32.totalorder %s21, 0
    %p118 = por %p116, %p117
    %s119 = ssub.s32 %s22, %s34
    %s120 = ssub.s32 %s23, %s30
    %s121 = sor.u32 %s119, %s120
    %p122 = scmp.eq.s32.totalorder %s121, 0
    %s124 = sadd.s32 %s123, 1
    %s125 = scalar_select %p122, %s123, %s124
    %p128 = pneg %p122
    %p129 = scmp.eq.s32.totalorder %s15, 1
    %p130 = por %p128, %p129
    %p131 = scmp.ne.s32.totalorder %s123, %s126
    %p132 = scmp.eq.s32.totalorder %s15, 0
    %p133 = por %p131, %p132
    %p134 = scmp.ne.s32.totalorder %s123, %s126
    %p135 = scmp.eq.s32.totalorder %s20, 1
    %p136 = por %p134, %p135
    %p137 = scmp.ne.s32.totalorder %s126, %s127
    %p138 = scmp.eq.s32.totalorder %s20, 0
    %p139 = por %p137, %p138
    %p140 = scmp.ne.s32.totalorder %s126, %s127
    %p141 = scmp.eq.s32.totalorder %s21, 1
    %p142 = por %p140, %p141
    %p144 = scmp.ne.s32.totalorder %s127, %s143
    %p145 = scmp.eq.s32.totalorder %s21, 0
    %p146 = por %p144, %p145
    %s148 = sadd.s32 %s147, 1
    %p151 = scmp.eq.s32.totalorder %s15, 1
    %p152 = scmp.ne.s32.totalorder %s147, %s149
    %p153 = scmp.eq.s32.totalorder %s15, 0
    %p154 = por %p152, %p153
    %p155 = scmp.ne.s32.totalorder %s147, %s149
    %p156 = scmp.eq.s32.totalorder %s20, 1
    %p157 = por %p155, %p156
    %p158 = scmp.ne.s32.totalorder %s149, %s150
    %p159 = scmp.eq.s32.totalorder %s20, 0
    %p160 = por %p158, %p159
    %p161 = scmp.ne.s32.totalorder %s149, %s150
    %p162 = scmp.eq.s32.totalorder %s21, 1
    %p163 = por %p161, %p162
    %p165 = scmp.ne.s32.totalorder %s150, %s164
    %p166 = scmp.eq.s32.totalorder %s21, 0
    %p167 = por %p165, %p166
    %s169 = sadd.s32 %s168, 1
    %p172 = scmp.eq.s32.totalorder %s15, 1
    %p173 = scmp.ne.s32.totalorder %s168, %s170
    %p174 = scmp.eq.s32.totalorder %s15, 0
    %p175 = por %p173, %p174
    %p176 = scmp.ne.s32.totalorder %s168, %s170
    %p177 = scmp.eq.s32.totalorder %s20, 1
    %p178 = por %p176, %p177
    %p179 = scmp.ne.s32.totalorder %s170, %s171
    %p180 = scmp.eq.s32.totalorder %s20, 0
    %p181 = por %p179, %p180
    %p182 = scmp.ne.s32.totalorder %s170, %s171
    %p183 = scmp.eq.s32.totalorder %s21, 1
    %p184 = por %p182, %p183
    %p186 = scmp.ne.s32.totalorder %s171, %s185
    %p187 = scmp.eq.s32.totalorder %s21, 0
    %p188 = por %p186, %p187
    %s190 = sadd.s32 %s189, 1
    %p193 = scmp.eq.s32.totalorder %s15, 1
    %p194 = scmp.ne.s32.totalorder %s189, %s191
    %p195 = scmp.eq.s32.totalorder %s15, 0
    %p196 = por %p194, %p195
    %p197 = scmp.ne.s32.totalorder %s189, %s191
    %p198 = scmp.eq.s32.totalorder %s20, 1
    %p199 = por %p197, %p198
    %p200 = scmp.ne.s32.totalorder %s191, %s192
    %p201 = scmp.eq.s32.totalorder %s20, 0
    %p202 = por %p200, %p201
    %p203 = scmp.ne.s32.totalorder %s191, %s192
    %p204 = scmp.eq.s32.totalorder %s21, 1
    %p205 = por %p203, %p204
    %p207 = scmp.ne.s32.totalorder %s192, %s206
    %p208 = scmp.eq.s32.totalorder %s21, 0
    %p209 = por %p207, %p208
    %s210 = ssub.s32 %s22, %s34
    %s211 = ssub.s32 %s23, %s30
    %s212 = sor.u32 %s210, %s211
    %p213 = scmp.eq.s32.totalorder %s212, 0
    %s215 = sadd.s32 %s214, 1
    %s216 = scalar_select %p213, %s214, %s215
    %p219 = pneg %p213
    %p220 = scmp.eq.s32.totalorder %s15, 1
    %p221 = por %p219, %p220
    %p222 = scmp.ne.s32.totalorder %s214, %s217
    %p223 = scmp.eq.s32.totalorder %s15, 0
    %p224 = por %p222, %p223
    %p225 = scmp.ne.s32.totalorder %s214, %s217
    %p226 = scmp.eq.s32.totalorder %s20, 1
    %p227 = por %p225, %p226
    %p228 = scmp.ne.s32.totalorder %s217, %s218
    %p229 = scmp.eq.s32.totalorder %s20, 0
    %p230 = por %p228, %p229
    %p231 = scmp.ne.s32.totalorder %s217, %s218
    %p232 = scmp.eq.s32.totalorder %s21, 1
    %p233 = por %p231, %p232
    %p235 = scmp.ne.s32.totalorder %s218, %s234
    %p236 = scmp.eq.s32.totalorder %s21, 0
    %p237 = por %p235, %p236
    %s238 = ssub.s32 %s22, %s34
    %p239 = scmp.eq.s32.totalorder %s238, 0
    %s241 = sadd.s32 %s240, 1
    %s242 = scalar_select %p239, %s240, %s241
    %p245 = pneg %p239
    %p246 = scmp.eq.s32.totalorder %s15, 1
    %p247 = por %p245, %p246
    %p248 = scmp.ne.s32.totalorder %s240, %s243
    %p249 = scmp.eq.s32.totalorder %s15, 0
    %p250 = por %p248, %p249
    %p251 = scmp.ne.s32.totalorder %s240, %s243
    %p252 = scmp.eq.s32.totalorder %s20, 1
    %p253 = por %p251, %p252
    %p254 = scmp.ne.s32.totalorder %s243, %s244
    %p255 = scmp.eq.s32.totalorder %s20, 0
    %p256 = por %p254, %p255
    %p257 = scmp.ne.s32.totalorder %s243, %s244
    %p258 = scmp.eq.s32.totalorder %s21, 1
    %p259 = por %p257, %p258
    %p261 = scmp.ne.s32.totalorder %s244, %s260
    %p262 = scmp.eq.s32.totalorder %s21, 0
    %p263 = por %p261, %p262
    %p264 = scmp.le.s32.totalorder 1, %s15
    %p265 = scmp.lt.s32.totalorder %s15, 3
    %p266 = pnand %p264, %p265
    %p267 = pneg %p266
    // Predicated region
    $region9: #{encoder_block_pallas.4} parent=5 // pred_check
      _
    $region10: #{encoder_block_pallas.4} parent=5 // pred_check_branch
      %269 = sbr.rel (%p266) target = $region12
    $region11: #{encoder_block_pallas.4} parent=5 // pred_region
      %s270 = ssub.s32 %s15, 1
      // Predicated region
      $region13: #{encoder_block_pallas.4} parent=11 // pred_check
        %p271 = pneg %p160
      $region14: #{encoder_block_pallas.4} parent=11 // pred_check_branch
        %273 = sbr.rel (%p271) target = $region16
      $region15: #{encoder_block_pallas.4} parent=11 // pred_region
        _
      $region16: #{encoder_block_pallas.4} parent=11 // pred_fallthru
        _
      // Predicated region
      $region17: #{encoder_block_pallas.4} parent=11 // pred_check
        %p274 = pneg %p181
      $region18: #{encoder_block_pallas.4} parent=11 // pred_check_branch
        %276 = sbr.rel (%p274) target = $region20
      $region19: #{encoder_block_pallas.4} parent=11 // pred_region
        _
      $region20: #{encoder_block_pallas.4} parent=11 // pred_fallthru
        _
      // Predicated region
      $region21: #{encoder_block_pallas.4} parent=11 // pred_check
        %p277 = pneg %p202
      $region22: #{encoder_block_pallas.4} parent=11 // pred_check_branch
        %279 = sbr.rel (%p277) target = $region24
      $region23: #{encoder_block_pallas.4} parent=11 // pred_region
        _
      $region24: #{encoder_block_pallas.4} parent=11 // pred_fallthru
        _
    $region12: #{encoder_block_pallas.4} parent=5 // pred_fallthru
      _
    %p280 = scmp.lt.s32.totalorder %s15, 2
    // Predicated region
    $region25: #{encoder_block_pallas.4} parent=5 // pred_check
      %p281 = pneg %p280
    $region26: #{encoder_block_pallas.4} parent=5 // pred_check_branch
      %283 = sbr.rel (%p281) target = $region28
    $region27: #{encoder_block_pallas.4} parent=5 // pred_region
      // Predicated region
      $region29: #{encoder_block_pallas.4} parent=27 // pred_check
        %p284 = pneg %p49
      $region30: #{encoder_block_pallas.4} parent=27 // pred_check_branch
        %286 = sbr.rel (%p284) target = $region32
      $region31: #{encoder_block_pallas.4} parent=27 // pred_region
        %p287 = scmp.lt.s32.totalorder %s22, 1
        %s288 = scalar_select %p287, %s22, 1
        %p289 = scmp.lt.s32.totalorder %s23, 0
        %s290 = scalar_select %p289, %s23, 0
        %s291 = sadd.s32 %s290, %s288
        %s292 = smul.addr %s291, 2
        %s293 = scalar_lea.vmem %s0, %s292
      $region32: #{encoder_block_pallas.4} parent=27 // pred_fallthru
        _
      // Predicated region
      $region33: #{encoder_block_pallas.4} parent=27 // pred_check
        %p294 = pneg %p77
      $region34: #{encoder_block_pallas.4} parent=27 // pred_check_branch
        %296 = sbr.rel (%p294) target = $region36
      $region35: #{encoder_block_pallas.4} parent=27 // pred_region
        %p297 = scmp.lt.s32.totalorder %s22, 1
        %s298 = scalar_select %p297, %s22, 1
        %p299 = scmp.lt.s32.totalorder %s23, 0
        %s300 = scalar_select %p299, %s23, 0
        %s301 = sadd.s32 %s300, %s298
        %s302 = smul.addr %s301, 2
        %s303 = scalar_lea.vmem %s1, %s302
      $region36: #{encoder_block_pallas.4} parent=27 // pred_fallthru
        _
      // Predicated region
      $region37: #{encoder_block_pallas.4} parent=27 // pred_check
        %p304 = pneg %p105
      $region38: #{encoder_block_pallas.4} parent=27 // pred_check_branch
        %306 = sbr.rel (%p304) target = $region40
      $region39: #{encoder_block_pallas.4} parent=27 // pred_region
        %p307 = scmp.lt.s32.totalorder %s22, 1
        %s308 = scalar_select %p307, %s22, 1
        %p309 = scmp.lt.s32.totalorder %s23, 0
        %s310 = scalar_select %p309, %s23, 0
        %s311 = sadd.s32 %s310, %s308
        %s312 = smul.addr %s311, 2
        %s313 = scalar_lea.vmem %s2, %s312
      $region40: #{encoder_block_pallas.4} parent=27 // pred_fallthru
        _
      // Predicated region
      $region41: #{encoder_block_pallas.4} parent=27 // pred_check
        %p314 = pneg %p133
      $region42: #{encoder_block_pallas.4} parent=27 // pred_check_branch
        %316 = sbr.rel (%p314) target = $region44
      $region43: #{encoder_block_pallas.4} parent=27 // pred_region
        %p317 = scmp.lt.s32.totalorder %s22, 1
        %s318 = scalar_select %p317, %s22, 1
        %p319 = scmp.lt.s32.totalorder %s23, 0
        %s320 = scalar_select %p319, %s23, 0
        %s321 = sadd.s32 %s320, %s318
        %s322 = smul.addr %s321, 2
        %s323 = scalar_lea.vmem %s3, %s322
      $region44: #{encoder_block_pallas.4} parent=27 // pred_fallthru
        _
    $region28: #{encoder_block_pallas.4} parent=5 // pred_fallthru
      _
    %p324 = scmp.le.s32.totalorder 1, %s15
    %p325 = scmp.lt.s32.totalorder %s15, 3
    %p326 = pnand %p324, %p325
    %p327 = pneg %p326
    // Predicated region
    $region45: #{encoder_block_pallas.4} parent=5 // pred_check
      _
    $region46: #{encoder_block_pallas.4} parent=5 // pred_check_branch
      %329 = sbr.rel (%p326) target = $region48
    $region47: #{encoder_block_pallas.4} parent=5 // pred_region
      %s330 = ssub.s32 %s15, 1
      %p331 = scmp.lt.s32.totalorder %s24, 1
      %s332 = scalar_select %p331, %s24, 1
      %p333 = scmp.lt.s32.totalorder %s25, 0
      %s334 = scalar_select %p333, %s25, 0
      %s335 = sadd.s32 %s334, %s332
      %s336 = smul.addr %s335, 2
      %s337 = scalar_lea.vmem %s0, %s336
      %p338 = pneg %p55
      %p339 = pneg %p52
      %p340 = scmp.lt.s32.totalorder %s24, 1
      %s341 = scalar_select %p340, %s24, 1
      %p342 = scmp.lt.s32.totalorder %s25, 0
      %s343 = scalar_select %p342, %s25, 0
      %s344 = sadd.s32 %s343, %s341
      %s345 = smul.addr %s344, 2
      %s346 = scalar_lea.vmem %s1, %s345
      %p347 = pneg %p83
      %p348 = pneg %p80
      %p349 = scmp.lt.s32.totalorder %s24, 1
      %s350 = scalar_select %p349, %s24, 1
      %p351 = scmp.lt.s32.totalorder %s25, 0
      %s352 = scalar_select %p351, %s25, 0
      %s353 = sadd.s32 %s352, %s350
      %s354 = smul.addr %s353, 2
      %s355 = scalar_lea.vmem %s2, %s354
      %p356 = pneg %p111
      %p357 = pneg %p108
      %p358 = scmp.lt.s32.totalorder %s24, 1
      %s359 = scalar_select %p358, %s24, 1
      %p360 = scmp.lt.s32.totalorder %s25, 0
      %s361 = scalar_select %p360, %s25, 0
      %s362 = sadd.s32 %s361, %s359
      %s363 = smul.addr %s362, 2
      %s364 = scalar_lea.vmem %s3, %s363
      %p365 = pneg %p139
      %p366 = pneg %p136
      %p367 = pneg %p160
      %p368 = pneg %p157
      %p369 = pneg %p181
      %p370 = pneg %p178
      %p371 = pneg %p202
      %p372 = pneg %p199
      %p373 = pneg %p230
      %p374 = pneg %p227
      %p375 = scmp.lt.s32.totalorder %s24, 1
      %s376 = scalar_select %p375, %s24, 1
      %p377 = scmp.lt.s32.totalorder %s25, 0
      %s378 = scalar_select %p377, %s25, 0
      %s379 = sadd.s32 %s378, %s376
      %s380 = smul.addr %s379, 4
      %s381 = scalar_lea.vmem %s7, %s380
      %p382 = pneg %p256
      %p383 = pneg %p253
      %p384 = scmp.lt.s32.totalorder %s24, 1
      %s385 = scalar_select %p384, %s24, 1
      %s386 = smul.addr %s385, 8
      %s387 = scalar_lea.vmem %s8, %s386
      %p388 = scmp.lt.s32.totalorder %s24, 1
      %s389 = scalar_select %p388, %s24, 1
      %p390 = scmp.lt.s32.totalorder %s25, 0
      %s391 = scalar_select %p390, %s25, 0
      %s392 = sadd.s32 %s391, %s389
      %s393 = smul.addr %s392, 2
      %s394 = scalar_lea.vmem %s0, %s393
      %p395 = scmp.lt.s32.totalorder %s24, 1
      %s396 = scalar_select %p395, %s24, 1
      %p397 = scmp.lt.s32.totalorder %s25, 0
      %s398 = scalar_select %p397, %s25, 0
      %s399 = sadd.s32 %s398, %s396
      %s400 = smul.addr %s399, 2
      %s401 = scalar_lea.vmem %s1, %s400
      %p402 = scmp.lt.s32.totalorder %s24, 1
      %s403 = scalar_select %p402, %s24, 1
      %p404 = scmp.lt.s32.totalorder %s25, 0
      %s405 = scalar_select %p404, %s25, 0
      %s406 = sadd.s32 %s405, %s403
      %s407 = smul.addr %s406, 2
      %s408 = scalar_lea.vmem %s2, %s407
      %p409 = scmp.lt.s32.totalorder %s24, 1
      %s410 = scalar_select %p409, %s24, 1
      %p411 = scmp.lt.s32.totalorder %s25, 0
      %s412 = scalar_select %p411, %s25, 0
      %s413 = sadd.s32 %s412, %s410
      %s414 = smul.addr %s413, 2
      %s415 = scalar_lea.vmem %s3, %s414
      %p416 = scmp.lt.s32.totalorder %s24, 1
      %s417 = scalar_select %p416, %s24, 1
      %p418 = scmp.lt.s32.totalorder %s25, 0
      %s419 = scalar_select %p418, %s25, 0
      %s420 = sadd.s32 %s419, %s417
      %s421 = smul.addr %s420, 4
      %s422 = scalar_lea.vmem %s7, %s421
      %p423 = scmp.lt.s32.totalorder %s24, 1
      %s424 = scalar_select %p423, %s24, 1
      %s425 = smul.addr %s424, 8
      %s426 = scalar_lea.vmem %s8, %s425
      %p428 = scmp.eq.s32.totalorder %s25, 0
      // Predicated region
      $region49: #{encoder_block_pallas.4} parent=47 // pred_check
        %p429 = pneg %p428
      $region50: #{encoder_block_pallas.4} parent=47 // pred_check_branch
        %431 = sbr.rel (%p429) target = $region52
      $region51: #{encoder_block_pallas.4} parent=47 // pred_region
        %vm432 = vcmask 7168
        %433 = vst.msk [vmem:[#allocation2] sm:$0xff] %vm432, 0.0
        %434 = vst.msk [vmem:[#allocation3] sm:$0xff] %vm432, 0.0
      $region52: #{encoder_block_pallas.4} parent=47 // pred_fallthru
        _
      %v435 = vld [vmem:[%s394] sm:$0x3]
      %v436 = vld [vmem:[%s4] sm:$0xf]
      %v437 = vld [vmem:[%s401] sm:$0x3]
      %s438 = scalar_lea.vmem %s4, 4
      %v439 = vld [vmem:[%s438] sm:$0xf]
      %vm440 = vcmask 31744
      %v442 = vsel %vm440, %v439, 0
      %vm444 = vcmask 1041408
      %v446 = vsel %vm444, %v437, 0
      %448 = vmatprep.subr.bf16.mxu0 0
      %449 = vmatpush1.bf16.msra.mxu0 %v446
      %450 = vmatprep.subr.bf16.mxu0 0
      %451 = vmatpush1.bf16.msra.mxu0 0
      %452 = vmatprep.subr.bf16.mxu0 0
      %453 = vmatpush1.bf16.msra.mxu0 0
      %454 = vmatprep.subr.bf16.mxu0 0
      %455 = vmatpush1.bf16.msra.mxu0 0
      %456 = vmatprep.subr.bf16.mxu0 0
      %457 = vmatpush1.bf16.msra.mxu0 0
      %458 = vmatprep.subr.bf16.mxu0 0
      %459 = vmatpush1.bf16.msra.mxu0 0
      %460 = vmatprep.subr.bf16.mxu0 0
      %461 = vmatpush1.bf16.msra.mxu0 0
      %462 = vmatprep.subr.bf16.mxu0 0
      %463 = vmatpush1.bf16.msra.mxu0 0
      %464 = vmatprep.subr.bf16.mxu0 0
      %465 = vmatpush1.bf16.msra.mxu0 0
      %466 = vmatprep.subr.bf16.mxu0 0
      %467 = vmatpush1.bf16.msra.mxu0 0
      %468 = vmatprep.subr.bf16.mxu0 0
      %469 = vmatpush1.bf16.msra.mxu0 0
      %470 = vmatprep.subr.bf16.mxu0 0
      %471 = vmatpush1.bf16.msra.mxu0 0
      %472 = vmatprep.subr.bf16.mxu0 0
      %473 = vmatpush1.bf16.msra.mxu0 0
      %474 = vmatprep.subr.bf16.mxu0 0
      %475 = vmatpush1.bf16.msra.mxu0 0
      %476 = vmatprep.subr.bf16.mxu0 0
      %477 = vmatpush1.bf16.msra.mxu0 0
      %478 = vmatprep.subr.bf16.mxu0 0
      %479 = vmatpush1.bf16.msra.mxu0 0
      %480 = vmatprep.mubr.bf16.mxu0 0
      %481 = vmatmul.mubr.bf16.gmra.mrb[0].mxu0 %v442
      %v482 = vpop.f32.mrb[0].mxu0
      %v483 = vadd.f32 0.0, %v482
      %v484 = vpop.f32.mrb[0].mxu0
      %v485 = vpop.f32.mrb[0].mxu0
      %v486 = vpop.f32.mrb[0].mxu0
      %487 = vdwg.mxu0
      %v489 = vsel %vm440, %v436, 0
      %v492 = vsel %vm444, %v435, 0
      %494 = vmatprep.subr.bf16.mxu0 0
      %495 = vmatpush1.bf16.msra.mxu0 %v492
      %496 = vmatprep.subr.bf16.mxu0 0
      %497 = vmatpush1.bf16.msra.mxu0 0
      %498 = vmatprep.subr.bf16.mxu0 0
      %499 = vmatpush1.bf16.msra.mxu0 0
      %500 = vmatprep.subr.bf16.mxu0 0
      %501 = vmatpush1.bf16.msra.mxu0 0
      %502 = vmatprep.subr.bf16.mxu0 0
      %503 = vmatpush1.bf16.msra.mxu0 0
      %504 = vmatprep.subr.bf16.mxu0 0
      %505 = vmatpush1.bf16.msra.mxu0 0
      %506 = vmatprep.subr.bf16.mxu0 0
      %507 = vmatpush1.bf16.msra.mxu0 0
      %508 = vmatprep.subr.bf16.mxu0 0
      %509 = vmatpush1.bf16.msra.mxu0 0
      %510 = vmatprep.subr.bf16.mxu0 0
      %511 = vmatpush1.bf16.msra.mxu0 0
      %512 = vmatprep.subr.bf16.mxu0 0
      %513 = vmatpush1.bf16.msra.mxu0 0
      %514 = vmatprep.subr.bf16.mxu0 0
      %515 = vmatpush1.bf16.msra.mxu0 0
      %516 = vmatprep.subr.bf16.mxu0 0
      %517 = vmatpush1.bf16.msra.mxu0 0
      %518 = vmatprep.subr.bf16.mxu0 0
      %519 = vmatpush1.bf16.msra.mxu0 0
      %520 = vmatprep.subr.bf16.mxu0 0
      %521 = vmatpush1.bf16.msra.mxu0 0
      %522 = vmatprep.subr.bf16.mxu0 0
      %523 = vmatpush1.bf16.msra.mxu0 0
      %524 = vmatprep.subr.bf16.mxu0 0
      %525 = vmatpush1.bf16.msra.mxu0 0
      %526 = vmatprep.mubr.bf16.mxu0 0
      %527 = vmatmul.mubr.bf16.gmra.mrb[0].mxu0 %v489
      %v528 = vpop.f32.mrb[0].mxu0
      %v529 = vadd.f32 %v483, %v528
      %v530 = vpop.f32.mrb[0].mxu0
      %v531 = vpop.f32.mrb[0].mxu0
      %v532 = vpop.f32.mrb[0].mxu0
      %533 = vdwg.mxu0
      %s534 = scalar_lea.vmem %s4, 8
      %v535 = vld [vmem:[%s534] sm:$0xf]
      %v538 = vunpack.c.l.s4 1983009808
      %v539 = vunpack.c.0.s8 %v538
      %v540 = vlaneseq
      %v541 = vshrl.u32 %v540, 7
      %v542 = vsub.s32 %v539, %v541
      %v543 = vrot.slane %v435, %v542
      %544 = vrot.lane.b32.xlu0 %v543, 127
      %v545 = vpop.permute.xlu0 %544
      %v547 = vsel %vm440, %v535, 0
      %v550 = vsel %vm444, %v545, 0
      %552 = vmatprep.subr.bf16.mxu0 0
      %553 = vmatpush1.bf16.msra.mxu0 %v550
      %554 = vmatprep.subr.bf16.mxu0 0
      %555 = vmatpush1.bf16.msra.mxu0 0
      %556 = vmatprep.subr.bf16.mxu0 0
      %557 = vmatpush1.bf16.msra.mxu0 0
      %558 = vmatprep.subr.bf16.mxu0 0
      %559 = vmatpush1.bf16.msra.mxu0 0
      %560 = vmatprep.subr.bf16.mxu0 0
      %561 = vmatpush1.bf16.msra.mxu0 0
      %562 = vmatprep.subr.bf16.mxu0 0
      %563 = vmatpush1.bf16.msra.mxu0 0
      %564 = vmatprep.subr.bf16.mxu0 0
      %565 = vmatpush1.bf16.msra.mxu0 0
      %566 = vmatprep.subr.bf16.mxu0 0
      %567 = vmatpush1.bf16.msra.mxu0 0
      %568 = vmatprep.subr.bf16.mxu0 0
      %569 = vmatpush1.bf16.msra.mxu0 0
      %570 = vmatprep.subr.bf16.mxu0 0
      %571 = vmatpush1.bf16.msra.mxu0 0
      %572 = vmatprep.subr.bf16.mxu0 0
      %573 = vmatpush1.bf16.msra.mxu0 0
      %574 = vmatprep.subr.bf16.mxu0 0
      %575 = vmatpush1.bf16.msra.mxu0 0
      %576 = vmatprep.subr.bf16.mxu0 0
      %577 = vmatpush1.bf16.msra.mxu0 0
      %578 = vmatprep.subr.bf16.mxu0 0
      %579 = vmatpush1.bf16.msra.mxu0 0
      %580 = vmatprep.subr.bf16.mxu0 0
      %581 = vmatpush1.bf16.msra.mxu0 0
      %582 = vmatprep.subr.bf16.mxu0 0
      %583 = vmatpush1.bf16.msra.mxu0 0
      %584 = vmatprep.mubr.bf16.mxu0 0
      %585 = vmatmul.mubr.bf16.gmra.mrb[0].mxu0 %v547
      %v586 = vpop.f32.mrb[0].mxu0
      %v587 = vadd.f32 0.0, %v586
      %v588 = vpop.f32.mrb[0].mxu0
      %v589 = vpop.f32.mrb[0].mxu0
      %v590 = vpop.f32.mrb[0].mxu0
      %591 = vdwg.mxu0
      %v592 = vadd.f32 %v529, %v587
      %v593 = vld [vmem:[%s408] sm:$0x3]
      %s594 = scalar_lea.vmem %s4, 12
      %v595 = vld [vmem:[%s594] sm:$0xf]
      %v597 = vsel %vm440, %v595, 0
      %v600 = vsel %vm444, %v593, 0
      %602 = vmatprep.subr.bf16.mxu0 0
      %603 = vmatpush1.bf16.msra.mxu0 %v600
      %604 = vmatprep.subr.bf16.mxu0 0
      %605 = vmatpush1.bf16.msra.mxu0 0
      %606 = vmatprep.subr.bf16.mxu0 0
      %607 = vmatpush1.bf16.msra.mxu0 0
      %608 = vmatprep.subr.bf16.mxu0 0
      %609 = vmatpush1.bf16.msra.mxu0 0
      %610 = vmatprep.subr.bf16.mxu0 0
      %611 = vmatpush1.bf16.msra.mxu0 0
      %612 = vmatprep.subr.bf16.mxu0 0
      %613 = vmatpush1.bf16.msra.mxu0 0
      %614 = vmatprep.subr.bf16.mxu0 0
      %615 = vmatpush1.bf16.msra.mxu0 0
      %616 = vmatprep.subr.bf16.mxu0 0
      %617 = vmatpush1.bf16.msra.mxu0 0
      %618 = vmatprep.subr.bf16.mxu0 0
      %619 = vmatpush1.bf16.msra.mxu0 0
      %620 = vmatprep.subr.bf16.mxu0 0
      %621 = vmatpush1.bf16.msra.mxu0 0
      %622 = vmatprep.subr.bf16.mxu0 0
      %623 = vmatpush1.bf16.msra.mxu0 0
      %624 = vmatprep.subr.bf16.mxu0 0
      %625 = vmatpush1.bf16.msra.mxu0 0
      %626 = vmatprep.subr.bf16.mxu0 0
      %627 = vmatpush1.bf16.msra.mxu0 0
      %628 = vmatprep.subr.bf16.mxu0 0
      %629 = vmatpush1.bf16.msra.mxu0 0
      %630 = vmatprep.subr.bf16.mxu0 0
      %631 = vmatpush1.bf16.msra.mxu0 0
      %632 = vmatprep.subr.bf16.mxu0 0
      %633 = vmatpush1.bf16.msra.mxu0 0
      %634 = vmatprep.mubr.bf16.mxu0 0
      %635 = vmatmul.mubr.bf16.gmra.mrb[0].mxu0 %v597
      %v636 = vpop.f32.mrb[0].mxu0
      %v637 = vadd.f32 0.0, %v636
      %v638 = vpop.f32.mrb[0].mxu0
      %v639 = vpop.f32.mrb[0].mxu0
      %v640 = vpop.f32.mrb[0].mxu0
      %641 = vdwg.mxu0
      %v642 = vadd.f32 %v592, %v637
      %v643 = vld [vmem:[%s415] sm:$0x3]
      %s644 = scalar_lea.vmem %s4, 16
      %v645 = vld [vmem:[%s644] sm:$0xf]
      %v647 = vsel %vm440, %v645, 0
      %v650 = vsel %vm444, %v643, 0
      %652 = vmatprep.subr.bf16.mxu0 0
      %653 = vmatpush1.bf16.msra.mxu0 %v650
      %654 = vmatprep.subr.bf16.mxu0 0
      %655 = vmatpush1.bf16.msra.mxu0 0
      %656 = vmatprep.subr.bf16.mxu0 0
      %657 = vmatpush1.bf16.msra.mxu0 0
      %658 = vmatprep.subr.bf16.mxu0 0
      %659 = vmatpush1.bf16.msra.mxu0 0
      %660 = vmatprep.subr.bf16.mxu0 0
      %661 = vmatpush1.bf16.msra.mxu0 0
      %662 = vmatprep.subr.bf16.mxu0 0
      %663 = vmatpush1.bf16.msra.mxu0 0
      %664 = vmatprep.subr.bf16.mxu0 0
      %665 = vmatpush1.bf16.msra.mxu0 0
      %666 = vmatprep.subr.bf16.mxu0 0
      %667 = vmatpush1.bf16.msra.mxu0 0
      %668 = vmatprep.subr.bf16.mxu0 0
      %669 = vmatpush1.bf16.msra.mxu0 0
      %670 = vmatprep.subr.bf16.mxu0 0
      %671 = vmatpush1.bf16.msra.mxu0 0
      %672 = vmatprep.subr.bf16.mxu0 0
      %673 = vmatpush1.bf16.msra.mxu0 0
      %674 = vmatprep.subr.bf16.mxu0 0
      %675 = vmatpush1.bf16.msra.mxu0 0
      %676 = vmatprep.subr.bf16.mxu0 0
      %677 = vmatpush1.bf16.msra.mxu0 0
      %678 = vmatprep.subr.bf16.mxu0 0
      %679 = vmatpush1.bf16.msra.mxu0 0
      %680 = vmatprep.subr.bf16.mxu0 0
      %681 = vmatpush1.bf16.msra.mxu0 0
      %682 = vmatprep.subr.bf16.mxu0 0
      %683 = vmatpush1.bf16.msra.mxu0 0
      %684 = vmatprep.mubr.bf16.mxu0 0
      %685 = vmatmul.mubr.bf16.gmra.mrb[0].mxu0 %v647
      %v686 = vpop.f32.mrb[0].mxu0
      %v687 = vadd.f32 0.0, %v686
      %v688 = vpop.f32.mrb[0].mxu0
      %v689 = vpop.f32.mrb[0].mxu0
      %v690 = vpop.f32.mrb[0].mxu0
      %691 = vdwg.mxu0
      %v692 = vadd.f32 %v642, %v687
      %s693 = scalar_lea.vmem %s4, 20
      %v694 = vld [vmem:[%s693] sm:$0xf]
      %v697 = vunpack.c.l.s4 1983009808
      %v698 = vunpack.c.0.s8 %v697
      %v699 = vlaneseq
      %v700 = vshrl.u32 %v699, 7
      %v701 = vsub.s32 %v698, %v700
      %v702 = vrot.slane %v593, %v701
      %703 = vrot.lane.b32.xlu0 %v702, 127
      %v704 = vpop.permute.xlu0 %703
      %v706 = vsel %vm440, %v694, 0
      %v709 = vsel %vm444, %v704, 0
      %711 = vmatprep.subr.bf16.mxu0 0
      %712 = vmatpush1.bf16.msra.mxu0 %v709
      %713 = vmatprep.subr.bf16.mxu0 0
      %714 = vmatpush1.bf16.msra.mxu0 0
      %715 = vmatprep.subr.bf16.mxu0 0
      %716 = vmatpush1.bf16.msra.mxu0 0
      %717 = vmatprep.subr.bf16.mxu0 0
      %718 = vmatpush1.bf16.msra.mxu0 0
      %719 = vmatprep.subr.bf16.mxu0 0
      %720 = vmatpush1.bf16.msra.mxu0 0
      %721 = vmatprep.subr.bf16.mxu0 0
      %722 = vmatpush1.bf16.msra.mxu0 0
      %723 = vmatprep.subr.bf16.mxu0 0
      %724 = vmatpush1.bf16.msra.mxu0 0
      %725 = vmatprep.subr.bf16.mxu0 0
      %726 = vmatpush1.bf16.msra.mxu0 0
      %727 = vmatprep.subr.bf16.mxu0 0
      %728 = vmatpush1.bf16.msra.mxu0 0
      %729 = vmatprep.subr.bf16.mxu0 0
      %730 = vmatpush1.bf16.msra.mxu0 0
      %731 = vmatprep.subr.bf16.mxu0 0
      %732 = vmatpush1.bf16.msra.mxu0 0
      %733 = vmatprep.subr.bf16.mxu0 0
      %734 = vmatpush1.bf16.msra.mxu0 0
      %735 = vmatprep.subr.bf16.mxu0 0
      %736 = vmatpush1.bf16.msra.mxu0 0
      %737 = vmatprep.subr.bf16.mxu0 0
      %738 = vmatpush1.bf16.msra.mxu0 0
      %739 = vmatprep.subr.bf16.mxu0 0
      %740 = vmatpush1.bf16.msra.mxu0 0
      %741 = vmatprep.subr.bf16.mxu0 0
      %742 = vmatpush1.bf16.msra.mxu0 0
      %743 = vmatprep.mubr.bf16.mxu0 0
      %744 = vmatmul.mubr.bf16.gmra.mrb[0].mxu0 %v706
      %v745 = vpop.f32.mrb[0].mxu0
      %v746 = vadd.f32 0.0, %v745
      %v747 = vpop.f32.mrb[0].mxu0
      %v748 = vpop.f32.mrb[0].mxu0
      %v749 = vpop.f32.mrb[0].mxu0
      %750 = vdwg.mxu0
      %v751 = vadd.f32 %v692, %v746
      %v752 = vld [vmem:[%s394] sm:$0x3]
      %s753 = scalar_lea.vmem %s4, 24
      %v754 = vld [vmem:[%s753] sm:$0xf]
      %v757 = vunpack.c.l.s4 1983009808
      %v758 = vunpack.c.0.s8 %v757
      %v759 = vlaneseq
      %v760 = vshrl.u32 %v759, 7
      %v761 = vsub.s32 %v758, %v760
      %v762 = vrot.slane %v752, %v761
      %763 = vrot.lane.b32.xlu0 %v762, 119
      %v764 = vpop.permute.xlu0 %763
      %v766 = vsel %vm440, %v754, 0
      %v769 = vsel %vm444, %v764, 0
      %771 = vmatprep.subr.bf16.mxu0 0
      %772 = vmatpush1.bf16.msra.mxu0 %v769
      %773 = vmatprep.subr.bf16.mxu0 0
      %774 = vmatpush1.bf16.msra.mxu0 0
      %775 = vmatprep.subr.bf16.mxu0 0
      %776 = vmatpush1.bf16.msra.mxu0 0
      %777 = vmatprep.subr.bf16.mxu0 0
      %778 = vmatpush1.bf16.msra.mxu0 0
      %779 = vmatprep.subr.bf16.mxu0 0
      %780 = vmatpush1.bf16.msra.mxu0 0
      %781 = vmatprep.subr.bf16.mxu0 0
      %782 = vmatpush1.bf16.msra.mxu0 0
      %783 = vmatprep.subr.bf16.mxu0 0
      %784 = vmatpush1.bf16.msra.mxu0 0
      %785 = vmatprep.subr.bf16.mxu0 0
      %786 = vmatpush1.bf16.msra.mxu0 0
      %787 = vmatprep.subr.bf16.mxu0 0
      %788 = vmatpush1.bf16.msra.mxu0 0
      %789 = vmatprep.subr.bf16.mxu0 0
      %790 = vmatpush1.bf16.msra.mxu0 0
      %791 = vmatprep.subr.bf16.mxu0 0
      %792 = vmatpush1.bf16.msra.mxu0 0
      %793 = vmatprep.subr.bf16.mxu0 0
      %794 = vmatpush1.bf16.msra.mxu0 0
      %795 = vmatprep.subr.bf16.mxu0 0
      %796 = vmatpush1.bf16.msra.mxu0 0
      %797 = vmatprep.subr.bf16.mxu0 0
      %798 = vmatpush1.bf16.msra.mxu0 0
      %799 = vmatprep.subr.bf16.mxu0 0
      %800 = vmatpush1.bf16.msra.mxu0 0
      %801 = vmatprep.subr.bf16.mxu0 0
      %802 = vmatpush1.bf16.msra.mxu0 0
      %803 = vmatprep.mubr.bf16.mxu0 0
      %804 = vmatmul.mubr.bf16.gmra.mrb[0].mxu0 %v766
      %v805 = vpop.f32.mrb[0].mxu0
      %v806 = vadd.f32 0.0, %v805
      %v807 = vpop.f32.mrb[0].mxu0
      %v808 = vpop.f32.mrb[0].mxu0
      %v809 = vpop.f32.mrb[0].mxu0
      %810 = vdwg.mxu0
      %v811 = vadd.f32 %v751, %v806
      %v812 = vld [vmem:[%s401] sm:$0x3]
      %s813 = scalar_lea.vmem %s4, 28
      %v814 = vld [vmem:[%s813] sm:$0xf]
      %v817 = vunpack.c.l.s4 1983009808
      %v818 = vunpack.c.0.s8 %v817
      %v819 = vlaneseq
      %v820 = vshrl.u32 %v819, 7
      %v821 = vsub.s32 %v818, %v820
      %v822 = vrot.slane %v812, %v821
      %823 = vrot.lane.b32.xlu0 %v822, 119
      %v824 = vpop.permute.xlu0 %823
      %v826 = vsel %vm440, %v814, 0
      %v829 = vsel %vm444, %v824, 0
      %831 = vmatprep.subr.bf16.mxu0 0
      %832 = vmatpush1.bf16.msra.mxu0 %v829
      %833 = vmatprep.subr.bf16.mxu0 0
      %834 = vmatpush1.bf16.msra.mxu0 0
      %835 = vmatprep.subr.bf16.mxu0 0
      %836 = vmatpush1.bf16.msra.mxu0 0
      %837 = vmatprep.subr.bf16.mxu0 0
      %838 = vmatpush1.bf16.msra.mxu0 0
      %839 = vmatprep.subr.bf16.mxu0 0
      %840 = vmatpush1.bf16.msra.mxu0 0
      %841 = vmatprep.subr.bf16.mxu0 0
      %842 = vmatpush1.bf16.msra.mxu0 0
      %843 = vmatprep.subr.bf16.mxu0 0
      %844 = vmatpush1.bf16.msra.mxu0 0
      %845 = vmatprep.subr.bf16.mxu0 0
      %846 = vmatpush1.bf16.msra.mxu0 0
      %847 = vmatprep.subr.bf16.mxu0 0
      %848 = vmatpush1.bf16.msra.mxu0 0
      %849 = vmatprep.subr.bf16.mxu0 0
      %850 = vmatpush1.bf16.msra.mxu0 0
      %851 = vmatprep.subr.bf16.mxu0 0
      %852 = vmatpush1.bf16.msra.mxu0 0
      %853 = vmatprep.subr.bf16.mxu0 0
      %854 = vmatpush1.bf16.msra.mxu0 0
      %855 = vmatprep.subr.bf16.mxu0 0
      %856 = vmatpush1.bf16.msra.mxu0 0
      %857 = vmatprep.subr.bf16.mxu0 0
      %858 = vmatpush1.bf16.msra.mxu0 0
      %859 = vmatprep.subr.bf16.mxu0 0
      %860 = vmatpush1.bf16.msra.mxu0 0
      %861 = vmatprep.subr.bf16.mxu0 0
      %862 = vmatpush1.bf16.msra.mxu0 0
      %863 = vmatprep.mubr.bf16.mxu0 0
      %864 = vmatmul.mubr.bf16.gmra.mrb[0].mxu0 %v826
      %v865 = vpop.f32.mrb[0].mxu0
      %v866 = vadd.f32 0.0, %v865
      %v867 = vpop.f32.mrb[0].mxu0
      %v868 = vpop.f32.mrb[0].mxu0
      %v869 = vpop.f32.mrb[0].mxu0
      %870 = vdwg.mxu0
      %v871 = vadd.f32 %v811, %v866
      %v872 = vld [vmem:[%s394] sm:$0x3]
      %s873 = scalar_lea.vmem %s4, 32
      %v874 = vld [vmem:[%s873] sm:$0xf]
      %v877 = vunpack.c.l.s4 1983009808
      %v878 = vunpack.c.0.s8 %v877
      %v879 = vlaneseq
      %v880 = vshrl.u32 %v879, 7
      %v881 = vsub.s32 %v878, %v880
      %v882 = vrot.slane %v872, %v881
      %883 = vrot.lane.b32.xlu0 %v882, 118
      %v884 = vpop.permute.xlu0 %883
      %v886 = vsel %vm440, %v874, 0
      %v889 = vsel %vm444, %v884, 0
      %891 = vmatprep.subr.bf16.mxu0 0
      %892 = vmatpush1.bf16.msra.mxu0 %v889
      %893 = vmatprep.subr.bf16.mxu0 0
      %894 = vmatpush1.bf16.msra.mxu0 0
      %895 = vmatprep.subr.bf16.mxu0 0
      %896 = vmatpush1.bf16.msra.mxu0 0
      %897 = vmatprep.subr.bf16.mxu0 0
      %898 = vmatpush1.bf16.msra.mxu0 0
      %899 = vmatprep.subr.bf16.mxu0 0
      %900 = vmatpush1.bf16.msra.mxu0 0
      %901 = vmatprep.subr.bf16.mxu0 0
      %902 = vmatpush1.bf16.msra.mxu0 0
      %903 = vmatprep.subr.bf16.mxu0 0
      %904 = vmatpush1.bf16.msra.mxu0 0
      %905 = vmatprep.subr.bf16.mxu0 0
      %906 = vmatpush1.bf16.msra.mxu0 0
      %907 = vmatprep.subr.bf16.mxu0 0
      %908 = vmatpush1.bf16.msra.mxu0 0
      %909 = vmatprep.subr.bf16.mxu0 0
      %910 = vmatpush1.bf16.msra.mxu0 0
      %911 = vmatprep.subr.bf16.mxu0 0
      %912 = vmatpush1.bf16.msra.mxu0 0
      %913 = vmatprep.subr.bf16.mxu0 0
      %914 = vmatpush1.bf16.msra.mxu0 0
      %915 = vmatprep.subr.bf16.mxu0 0
      %916 = vmatpush1.bf16.msra.mxu0 0
      %917 = vmatprep.subr.bf16.mxu0 0
      %918 = vmatpush1.bf16.msra.mxu0 0
      %919 = vmatprep.subr.bf16.mxu0 0
      %920 = vmatpush1.bf16.msra.mxu0 0
      %921 = vmatprep.subr.bf16.mxu0 0
      %922 = vmatpush1.bf16.msra.mxu0 0
      %923 = vmatprep.mubr.bf16.mxu0 0
      %924 = vmatmul.mubr.bf16.gmra.mrb[0].mxu0 %v886
      %v925 = vpop.f32.mrb[0].mxu0
      %v926 = vadd.f32 0.0, %v925
      %v927 = vpop.f32.mrb[0].mxu0
      %v928 = vpop.f32.mrb[0].mxu0
      %v929 = vpop.f32.mrb[0].mxu0
      %930 = vdwg.mxu0
      %v931 = vadd.f32 %v871, %v926
      %v932 = vld [vmem:[%s5] sm:$0xff]
      %934 = vset.pattern.permute.xlu0 0
      %935 = vperm.xlu0 %934, %v932
      %v936 = vpop.permute.xlu0 %935
      %v938 = vadd.f32 %v931, %v936
      %v939 = vmul.f32 %v938, 0.2
      %v940 = vmax.f32 %v938, %v939
      %v941 = vpack.c.bf16 %v940, %v940
      %v942 = vld [vmem:[%s6] sm:$0xf]
      %943 = vmatprep.subr.bf16.mxu0 0
      %944 = vmatpush1.bf16.msra.mxu0 %v550
      %945 = vmatprep.subr.bf16.mxu0 0
      %946 = vmatpush1.bf16.msra.mxu0 0
      %947 = vmatprep.subr.bf16.mxu0 0
      %948 = vmatpush1.bf16.msra.mxu0 0
      %949 = vmatprep.subr.bf16.mxu0 0
      %950 = vmatpush1.bf16.msra.mxu0 0
      %951 = vmatprep.subr.bf16.mxu0 0
      %952 = vmatpush1.bf16.msra.mxu0 0
      %953 = vmatprep.subr.bf16.mxu0 0
      %954 = vmatpush1.bf16.msra.mxu0 0
      %955 = vmatprep.subr.bf16.mxu0 0
      %956 = vmatpush1.bf16.msra.mxu0 0
      %957 = vmatprep.subr.bf16.mxu0 0
      %958 = vmatpush1.bf16.msra.mxu0 0
      %959 = vmatprep.subr.bf16.mxu0 0
      %960 = vmatpush1.bf16.msra.mxu0 0
      %961 = vmatprep.subr.bf16.mxu0 0
      %962 = vmatpush1.bf16.msra.mxu0 0
      %963 = vmatprep.subr.bf16.mxu0 0
      %964 = vmatpush1.bf16.msra.mxu0 0
      %965 = vmatprep.subr.bf16.mxu0 0
      %966 = vmatpush1.bf16.msra.mxu0 0
      %967 = vmatprep.subr.bf16.mxu0 0
      %968 = vmatpush1.bf16.msra.mxu0 0
      %969 = vmatprep.subr.bf16.mxu0 0
      %970 = vmatpush1.bf16.msra.mxu0 0
      %971 = vmatprep.subr.bf16.mxu0 0
      %972 = vmatpush1.bf16.msra.mxu0 0
      %973 = vmatprep.subr.bf16.mxu0 0
      %974 = vmatpush1.bf16.msra.mxu0 0
      %975 = vmatprep.mubr.bf16.mxu0 0
      %976 = vmatmul.mubr.bf16.gmra.mrb[0].mxu0 %v442
      %v977 = vpop.f32.mrb[0].mxu0
      %v978 = vadd.f32 0.0, %v977
      %v979 = vpop.f32.mrb[0].mxu0
      %v980 = vpop.f32.mrb[0].mxu0
      %v981 = vpop.f32.mrb[0].mxu0
      %982 = vdwg.mxu0
      %983 = vmatprep.subr.bf16.mxu0 0
      %984 = vmatpush1.bf16.msra.mxu0 %v446
      %985 = vmatprep.subr.bf16.mxu0 0
      %986 = vmatpush1.bf16.msra.mxu0 0
      %987 = vmatprep.subr.bf16.mxu0 0
      %988 = vmatpush1.bf16.msra.mxu0 0
      %989 = vmatprep.subr.bf16.mxu0 0
      %990 = vmatpush1.bf16.msra.mxu0 0
      %991 = vmatprep.subr.bf16.mxu0 0
      %992 = vmatpush1.bf16.msra.mxu0 0
      %993 = vmatprep.subr.bf16.mxu0 0
      %994 = vmatpush1.bf16.msra.mxu0 0
      %995 = vmatprep.subr.bf16.mxu0 0
      %996 = vmatpush1.bf16.msra.mxu0 0
      %997 = vmatprep.subr.bf16.mxu0 0
      %998 = vmatpush1.bf16.msra.mxu0 0
      %999 = vmatprep.subr.bf16.mxu0 0
      %1000 = vmatpush1.bf16.msra.mxu0 0
      %1001 = vmatprep.subr.bf16.mxu0 0
      %1002 = vmatpush1.bf16.msra.mxu0 0
      %1003 = vmatprep.subr.bf16.mxu0 0
      %1004 = vmatpush1.bf16.msra.mxu0 0
      %1005 = vmatprep.subr.bf16.mxu0 0
      %1006 = vmatpush1.bf16.msra.mxu0 0
      %1007 = vmatprep.subr.bf16.mxu0 0
      %1008 = vmatpush1.bf16.msra.mxu0 0
      %1009 = vmatprep.subr.bf16.mxu0 0
      %1010 = vmatpush1.bf16.msra.mxu0 0
      %1011 = vmatprep.subr.bf16.mxu0 0
      %1012 = vmatpush1.bf16.msra.mxu0 0
      %1013 = vmatprep.subr.bf16.mxu0 0
      %1014 = vmatpush1.bf16.msra.mxu0 0
      %1015 = vmatprep.mubr.bf16.mxu0 0
      %1016 = vmatmul.mubr.bf16.gmra.mrb[0].mxu0 %v489
      %v1017 = vpop.f32.mrb[0].mxu0
      %v1018 = vadd.f32 %v978, %v1017
      %v1019 = vpop.f32.mrb[0].mxu0
      %v1020 = vpop.f32.mrb[0].mxu0
      %v1021 = vpop.f32.mrb[0].mxu0
      %1022 = vdwg.mxu0
      %v1023 = vld [vmem:[%s401] sm:$0x3]
      %v1026 = vunpack.c.l.s4 1983009808
      %v1027 = vunpack.c.0.s8 %v1026
      %v1028 = vlaneseq
      %v1029 = vshrl.u32 %v1028, 7
      %v1030 = vsub.s32 %v1027, %v1029
      %v1031 = vrot.slane %v1023, %v1030
      %1032 = vrot.lane.b32.xlu0 %v1031, 127
      %v1033 = vpop.permute.xlu0 %1032
      %v1035 = vsel %vm444, %v1033, 0
      %1037 = vmatprep.subr.bf16.mxu0 0
      %1038 = vmatpush1.bf16.msra.mxu0 %v1035
      %1039 = vmatprep.subr.bf16.mxu0 0
      %1040 = vmatpush1.bf16.msra.mxu0 0
      %1041 = vmatprep.subr.bf16.mxu0 0
      %1042 = vmatpush1.bf16.msra.mxu0 0
      %1043 = vmatprep.subr.bf16.mxu0 0
      %1044 = vmatpush1.bf16.msra.mxu0 0
      %1045 = vmatprep.subr.bf16.mxu0 0
      %1046 = vmatpush1.bf16.msra.mxu0 0
      %1047 = vmatprep.subr.bf16.mxu0 0
      %1048 = vmatpush1.bf16.msra.mxu0 0
      %1049 = vmatprep.subr.bf16.mxu0 0
      %1050 = vmatpush1.bf16.msra.mxu0 0
      %1051 = vmatprep.subr.bf16.mxu0 0
      %1052 = vmatpush1.bf16.msra.mxu0 0
      %1053 = vmatprep.subr.bf16.mxu0 0
      %1054 = vmatpush1.bf16.msra.mxu0 0
      %1055 = vmatprep.subr.bf16.mxu0 0
      %1056 = vmatpush1.bf16.msra.mxu0 0
      %1057 = vmatprep.subr.bf16.mxu0 0
      %1058 = vmatpush1.bf16.msra.mxu0 0
      %1059 = vmatprep.subr.bf16.mxu0 0
      %1060 = vmatpush1.bf16.msra.mxu0 0
      %1061 = vmatprep.subr.bf16.mxu0 0
      %1062 = vmatpush1.bf16.msra.mxu0 0
      %1063 = vmatprep.subr.bf16.mxu0 0
      %1064 = vmatpush1.bf16.msra.mxu0 0
      %1065 = vmatprep.subr.bf16.mxu0 0
      %1066 = vmatpush1.bf16.msra.mxu0 0
      %1067 = vmatprep.subr.bf16.mxu0 0
      %1068 = vmatpush1.bf16.msra.mxu0 0
      %1069 = vmatprep.mubr.bf16.mxu0 0
      %1070 = vmatmul.mubr.bf16.gmra.mrb[0].mxu0 %v547
      %v1071 = vpop.f32.mrb[0].mxu0
      %v1072 = vadd.f32 0.0, %v1071
      %v1073 = vpop.f32.mrb[0].mxu0
      %v1074 = vpop.f32.mrb[0].mxu0
      %v1075 = vpop.f32.mrb[0].mxu0
      %1076 = vdwg.mxu0
      %v1077 = vadd.f32 %v1018, %v1072
      %1078 = vmatprep.subr.bf16.mxu0 0
      %1079 = vmatpush1.bf16.msra.mxu0 %v650
      %1080 = vmatprep.subr.bf16.mxu0 0
      %1081 = vmatpush1.bf16.msra.mxu0 0
      %1082 = vmatprep.subr.bf16.mxu0 0
      %1083 = vmatpush1.bf16.msra.mxu0 0
      %1084 = vmatprep.subr.bf16.mxu0 0
      %1085 = vmatpush1.bf16.msra.mxu0 0
      %1086 = vmatprep.subr.bf16.mxu0 0
      %1087 = vmatpush1.bf16.msra.mxu0 0
      %1088 = vmatprep.subr.bf16.mxu0 0
      %1089 = vmatpush1.bf16.msra.mxu0 0
      %1090 = vmatprep.subr.bf16.mxu0 0
      %1091 = vmatpush1.bf16.msra.mxu0 0
      %1092 = vmatprep.subr.bf16.mxu0 0
      %1093 = vmatpush1.bf16.msra.mxu0 0
      %1094 = vmatprep.subr.bf16.mxu0 0
      %1095 = vmatpush1.bf16.msra.mxu0 0
      %1096 = vmatprep.subr.bf16.mxu0 0
      %1097 = vmatpush1.bf16.msra.mxu0 0
      %1098 = vmatprep.subr.bf16.mxu0 0
      %1099 = vmatpush1.bf16.msra.mxu0 0
      %1100 = vmatprep.subr.bf16.mxu0 0
      %1101 = vmatpush1.bf16.msra.mxu0 0
      %1102 = vmatprep.subr.bf16.mxu0 0
      %1103 = vmatpush1.bf16.msra.mxu0 0
      %1104 = vmatprep.subr.bf16.mxu0 0
      %1105 = vmatpush1.bf16.msra.mxu0 0
      %1106 = vmatprep.subr.bf16.mxu0 0
      %1107 = vmatpush1.bf16.msra.mxu0 0
      %1108 = vmatprep.subr.bf16.mxu0 0
      %1109 = vmatpush1.bf16.msra.mxu0 0
      %1110 = vmatprep.mubr.bf16.mxu0 0
      %1111 = vmatmul.mubr.bf16.gmra.mrb[0].mxu0 %v597
      %v1112 = vpop.f32.mrb[0].mxu0
      %v1113 = vadd.f32 0.0, %v1112
      %v1114 = vpop.f32.mrb[0].mxu0
      %v1115 = vpop.f32.mrb[0].mxu0
      %v1116 = vpop.f32.mrb[0].mxu0
      %1117 = vdwg.mxu0
      %v1118 = vadd.f32 %v1077, %v1113
      %1119 = vmatprep.subr.bf16.mxu0 0
      %1120 = vmatpush1.bf16.msra.mxu0 %v709
      %1121 = vmatprep.subr.bf16.mxu0 0
      %1122 = vmatpush1.bf16.msra.mxu0 0
      %1123 = vmatprep.subr.bf16.mxu0 0
      %1124 = vmatpush1.bf16.msra.mxu0 0
      %1125 = vmatprep.subr.bf16.mxu0 0
      %1126 = vmatpush1.bf16.msra.mxu0 0
      %1127 = vmatprep.subr.bf16.mxu0 0
      %1128 = vmatpush1.bf16.msra.mxu0 0
      %1129 = vmatprep.subr.bf16.mxu0 0
      %1130 = vmatpush1.bf16.msra.mxu0 0
      %1131 = vmatprep.subr.bf16.mxu0 0
      %1132 = vmatpush1.bf16.msra.mxu0 0
      %1133 = vmatprep.subr.bf16.mxu0 0
      %1134 = vmatpush1.bf16.msra.mxu0 0
      %1135 = vmatprep.subr.bf16.mxu0 0
      %1136 = vmatpush1.bf16.msra.mxu0 0
      %1137 = vmatprep.subr.bf16.mxu0 0
      %1138 = vmatpush1.bf16.msra.mxu0 0
      %1139 = vmatprep.subr.bf16.mxu0 0
      %1140 = vmatpush1.bf16.msra.mxu0 0
      %1141 = vmatprep.subr.bf16.mxu0 0
      %1142 = vmatpush1.bf16.msra.mxu0 0
      %1143 = vmatprep.subr.bf16.mxu0 0
      %1144 = vmatpush1.bf16.msra.mxu0 0
      %1145 = vmatprep.subr.bf16.mxu0 0
      %1146 = vmatpush1.bf16.msra.mxu0 0
      %1147 = vmatprep.subr.bf16.mxu0 0
      %1148 = vmatpush1.bf16.msra.mxu0 0
      %1149 = vmatprep.subr.bf16.mxu0 0
      %1150 = vmatpush1.bf16.msra.mxu0 0
      %1151 = vmatprep.mubr.bf16.mxu0 0
      %1152 = vmatmul.mubr.bf16.gmra.mrb[0].mxu0 %v647
      %v1153 = vpop.f32.mrb[0].mxu0
      %v1154 = vadd.f32 0.0, %v1153
      %v1155 = vpop.f32.mrb[0].mxu0
      %v1156 = vpop.f32.mrb[0].mxu0
      %v1157 = vpop.f32.mrb[0].mxu0
      %1158 = vdwg.mxu0
      %v1159 = vadd.f32 %v1118, %v1154
      %v1160 = vld [vmem:[%s415] sm:$0x3]
      %v1163 = vunpack.c.l.s4 1983009808
      %v1164 = vunpack.c.0.s8 %v1163
      %v1165 = vlaneseq
      %v1166 = vshrl.u32 %v1165, 7
      %v1167 = vsub.s32 %v1164, %v1166
      %v1168 = vrot.slane %v1160, %v1167
      %1169 = vrot.lane.b32.xlu0 %v1168, 127
      %v1170 = vpop.permute.xlu0 %1169
      %v1172 = vsel %vm444, %v1170, 0
      %1174 = vmatprep.subr.bf16.mxu0 0
      %1175 = vmatpush1.bf16.msra.mxu0 %v1172
      %1176 = vmatprep.subr.bf16.mxu0 0
      %1177 = vmatpush1.bf16.msra.mxu0 0
      %1178 = vmatprep.subr.bf16.mxu0 0
      %1179 = vmatpush1.bf16.msra.mxu0 0
      %1180 = vmatprep.subr.bf16.mxu0 0
      %1181 = vmatpush1.bf16.msra.mxu0 0
      %1182 = vmatprep.subr.bf16.mxu0 0
      %1183 = vmatpush1.bf16.msra.mxu0 0
      %1184 = vmatprep.subr.bf16.mxu0 0
      %1185 = vmatpush1.bf16.msra.mxu0 0
      %1186 = vmatprep.subr.bf16.mxu0 0
      %1187 = vmatpush1.bf16.msra.mxu0 0
      %1188 = vmatprep.subr.bf16.mxu0 0
      %1189 = vmatpush1.bf16.msra.mxu0 0
      %1190 = vmatprep.subr.bf16.mxu0 0
      %1191 = vmatpush1.bf16.msra.mxu0 0
      %1192 = vmatprep.subr.bf16.mxu0 0
      %1193 = vmatpush1.bf16.msra.mxu0 0
      %1194 = vmatprep.subr.bf16.mxu0 0
      %1195 = vmatpush1.bf16.msra.mxu0 0
      %1196 = vmatprep.subr.bf16.mxu0 0
      %1197 = vmatpush1.bf16.msra.mxu0 0
      %1198 = vmatprep.subr.bf16.mxu0 0
      %1199 = vmatpush1.bf16.msra.mxu0 0
      %1200 = vmatprep.subr.bf16.mxu0 0
      %1201 = vmatpush1.bf16.msra.mxu0 0
      %1202 = vmatprep.subr.bf16.mxu0 0
      %1203 = vmatpush1.bf16.msra.mxu0 0
      %1204 = vmatprep.subr.bf16.mxu0 0
      %1205 = vmatpush1.bf16.msra.mxu0 0
      %1206 = vmatprep.mubr.bf16.mxu0 0
      %1207 = vmatmul.mubr.bf16.gmra.mrb[0].mxu0 %v706
      %v1208 = vpop.f32.mrb[0].mxu0
      %v1209 = vadd.f32 0.0, %v1208
      %v1210 = vpop.f32.mrb[0].mxu0
      %v1211 = vpop.f32.mrb[0].mxu0
      %v1212 = vpop.f32.mrb[0].mxu0
      %1213 = vdwg.mxu0
      %v1214 = vadd.f32 %v1159, %v1209
      %1215 = vmatprep.subr.bf16.mxu0 0
      %1216 = vmatpush1.bf16.msra.mxu0 %v829
      %1217 = vmatprep.subr.bf16.mxu0 0
      %1218 = vmatpush1.bf16.msra.mxu0 0
      %1219 = vmatprep.subr.bf16.mxu0 0
      %1220 = vmatpush1.bf16.msra.mxu0 0
      %1221 = vmatprep.subr.bf16.mxu0 0
      %1222 = vmatpush1.bf16.msra.mxu0 0
      %1223 = vmatprep.subr.bf16.mxu0 0
      %1224 = vmatpush1.bf16.msra.mxu0 0
      %1225 = vmatprep.subr.bf16.mxu0 0
      %1226 = vmatpush1.bf16.msra.mxu0 0
      %1227 = vmatprep.subr.bf16.mxu0 0
      %1228 = vmatpush1.bf16.msra.mxu0 0
      %1229 = vmatprep.subr.bf16.mxu0 0
      %1230 = vmatpush1.bf16.msra.mxu0 0
      %1231 = vmatprep.subr.bf16.mxu0 0
      %1232 = vmatpush1.bf16.msra.mxu0 0
      %1233 = vmatprep.subr.bf16.mxu0 0
      %1234 = vmatpush1.bf16.msra.mxu0 0
      %1235 = vmatprep.subr.bf16.mxu0 0
      %1236 = vmatpush1.bf16.msra.mxu0 0
      %1237 = vmatprep.subr.bf16.mxu0 0
      %1238 = vmatpush1.bf16.msra.mxu0 0
      %1239 = vmatprep.subr.bf16.mxu0 0
      %1240 = vmatpush1.bf16.msra.mxu0 0
      %1241 = vmatprep.subr.bf16.mxu0 0
      %1242 = vmatpush1.bf16.msra.mxu0 0
      %1243 = vmatprep.subr.bf16.mxu0 0
      %1244 = vmatpush1.bf16.msra.mxu0 0
      %1245 = vmatprep.subr.bf16.mxu0 0
      %1246 = vmatpush1.bf16.msra.mxu0 0
      %1247 = vmatprep.mubr.bf16.mxu0 0
      %1248 = vmatmul.mubr.bf16.gmra.mrb[0].mxu0 %v766
      %v1249 = vpop.f32.mrb[0].mxu0
      %v1250 = vadd.f32 0.0, %v1249
      %v1251 = vpop.f32.mrb[0].mxu0
      %v1252 = vpop.f32.mrb[0].mxu0
      %v1253 = vpop.f32.mrb[0].mxu0
      %1254 = vdwg.mxu0
      %v1255 = vadd.f32 %v1214, %v1250
      %1256 = vmatprep.subr.bf16.mxu0 0
      %1257 = vmatpush1.bf16.msra.mxu0 %v889
      %1258 = vmatprep.subr.bf16.mxu0 0
      %1259 = vmatpush1.bf16.msra.mxu0 0
      %1260 = vmatprep.subr.bf16.mxu0 0
      %1261 = vmatpush1.bf16.msra.mxu0 0
      %1262 = vmatprep.subr.bf16.mxu0 0
      %1263 = vmatpush1.bf16.msra.mxu0 0
      %1264 = vmatprep.subr.bf16.mxu0 0
      %1265 = vmatpush1.bf16.msra.mxu0 0
      %1266 = vmatprep.subr.bf16.mxu0 0
      %1267 = vmatpush1.bf16.msra.mxu0 0
      %1268 = vmatprep.subr.bf16.mxu0 0
      %1269 = vmatpush1.bf16.msra.mxu0 0
      %1270 = vmatprep.subr.bf16.mxu0 0
      %1271 = vmatpush1.bf16.msra.mxu0 0
      %1272 = vmatprep.subr.bf16.mxu0 0
      %1273 = vmatpush1.bf16.msra.mxu0 0
      %1274 = vmatprep.subr.bf16.mxu0 0
      %1275 = vmatpush1.bf16.msra.mxu0 0
      %1276 = vmatprep.subr.bf16.mxu0 0
      %1277 = vmatpush1.bf16.msra.mxu0 0
      %1278 = vmatprep.subr.bf16.mxu0 0
      %1279 = vmatpush1.bf16.msra.mxu0 0
      %1280 = vmatprep.subr.bf16.mxu0 0
      %1281 = vmatpush1.bf16.msra.mxu0 0
      %1282 = vmatprep.subr.bf16.mxu0 0
      %1283 = vmatpush1.bf16.msra.mxu0 0
      %1284 = vmatprep.subr.bf16.mxu0 0
      %1285 = vmatpush1.bf16.msra.mxu0 0
      %1286 = vmatprep.subr.bf16.mxu0 0
      %1287 = vmatpush1.bf16.msra.mxu0 0
      %1288 = vmatprep.mubr.bf16.mxu0 0
      %1289 = vmatmul.mubr.bf16.gmra.mrb[0].mxu0 %v826
      %v1290 = vpop.f32.mrb[0].mxu0
      %v1291 = vadd.f32 0.0, %v1290
      %v1292 = vpop.f32.mrb[0].mxu0
      %v1293 = vpop.f32.mrb[0].mxu0
      %v1294 = vpop.f32.mrb[0].mxu0
      %1295 = vdwg.mxu0
      %v1296 = vadd.f32 %v1255, %v1291
      %v1297 = vld [vmem:[%s401] sm:$0x3]
      %v1300 = vunpack.c.l.s4 1983009808
      %v1301 = vunpack.c.0.s8 %v1300
      %v1302 = vlaneseq
      %v1303 = vshrl.u32 %v1302, 7
      %v1304 = vsub.s32 %v1301, %v1303
      %v1305 = vrot.slane %v1297, %v1304
      %1306 = vrot.lane.b32.xlu0 %v1305, 118
      %v1307 = vpop.permute.xlu0 %1306
      %v1309 = vsel %vm444, %v1307, 0
      %1311 = vmatprep.subr.bf16.mxu0 0
      %1312 = vmatpush1.bf16.msra.mxu0 %v1309
      %1313 = vmatprep.subr.bf16.mxu0 0
      %1314 = vmatpush1.bf16.msra.mxu0 0
      %1315 = vmatprep.subr.bf16.mxu0 0
      %1316 = vmatpush1.bf16.msra.mxu0 0
      %1317 = vmatprep.subr.bf16.mxu0 0
      %1318 = vmatpush1.bf16.msra.mxu0 0
      %1319 = vmatprep.subr.bf16.mxu0 0
      %1320 = vmatpush1.bf16.msra.mxu0 0
      %1321 = vmatprep.subr.bf16.mxu0 0
      %1322 = vmatpush1.bf16.msra.mxu0 0
      %1323 = vmatprep.subr.bf16.mxu0 0
      %1324 = vmatpush1.bf16.msra.mxu0 0
      %1325 = vmatprep.subr.bf16.mxu0 0
      %1326 = vmatpush1.bf16.msra.mxu0 0
      %1327 = vmatprep.subr.bf16.mxu0 0
      %1328 = vmatpush1.bf16.msra.mxu0 0
      %1329 = vmatprep.subr.bf16.mxu0 0
      %1330 = vmatpush1.bf16.msra.mxu0 0
      %1331 = vmatprep.subr.bf16.mxu0 0
      %1332 = vmatpush1.bf16.msra.mxu0 0
      %1333 = vmatprep.subr.bf16.mxu0 0
      %1334 = vmatpush1.bf16.msra.mxu0 0
      %1335 = vmatprep.subr.bf16.mxu0 0
      %1336 = vmatpush1.bf16.msra.mxu0 0
      %1337 = vmatprep.subr.bf16.mxu0 0
      %1338 = vmatpush1.bf16.msra.mxu0 0
      %1339 = vmatprep.subr.bf16.mxu0 0
      %1340 = vmatpush1.bf16.msra.mxu0 0
      %1341 = vmatprep.subr.bf16.mxu0 0
      %1342 = vmatpush1.bf16.msra.mxu0 0
      %1343 = vmatprep.mubr.bf16.mxu0 0
      %1344 = vmatmul.mubr.bf16.gmra.mrb[0].mxu0 %v886
      %v1345 = vpop.f32.mrb[0].mxu0
      %v1346 = vadd.f32 0.0, %v1345
      %v1347 = vpop.f32.mrb[0].mxu0
      %v1348 = vpop.f32.mrb[0].mxu0
      %v1349 = vpop.f32.mrb[0].mxu0
      %1350 = vdwg.mxu0
      %v1351 = vadd.f32 %v1296, %v1346
      %v1352 = vadd.f32 %v1351, %v936
      %v1353 = vmul.f32 %v1352, 0.2
      %v1354 = vmax.f32 %v1352, %v1353
      %v1355 = vpack.c.bf16 %v1354, %v1354
      %s1356 = scalar_lea.vmem %s6, 4
      %v1357 = vld [vmem:[%s1356] sm:$0xf]
      %vm1358 = vcmask 64512
      %v1360 = vsel %vm1358, %v1357, 0
      %vm1362 = vcmask 1043456
      %v1364 = vsel %vm1362, %v1355, 0
      %1366 = vmatprep.subr.bf16.mxu0 0
      %1367 = vmatpush1.bf16.msra.mxu0 %v1364
      %1368 = vmatprep.subr.bf16.mxu0 0
      %1369 = vmatpush1.bf16.msra.mxu0 0
      %1370 = vmatprep.subr.bf16.mxu0 0
      %1371 = vmatpush1.bf16.msra.mxu0 0
      %1372 = vmatprep.subr.bf16.mxu0 0
      %1373 = vmatpush1.bf16.msra.mxu0 0
      %1374 = vmatprep.subr.bf16.mxu0 0
      %1375 = vmatpush1.bf16.msra.mxu0 0
      %1376 = vmatprep.subr.bf16.mxu0 0
      %1377 = vmatpush1.bf16.msra.mxu0 0
      %1378 = vmatprep.subr.bf16.mxu0 0
      %1379 = vmatpush1.bf16.msra.mxu0 0
      %1380 = vmatprep.subr.bf16.mxu0 0
      %1381 = vmatpush1.bf16.msra.mxu0 0
      %1382 = vmatprep.subr.bf16.mxu0 0
      %1383 = vmatpush1.bf16.msra.mxu0 0
      %1384 = vmatprep.subr.bf16.mxu0 0
      %1385 = vmatpush1.bf16.msra.mxu0 0
      %1386 = vmatprep.subr.bf16.mxu0 0
      %1387 = vmatpush1.bf16.msra.mxu0 0
      %1388 = vmatprep.subr.bf16.mxu0 0
      %1389 = vmatpush1.bf16.msra.mxu0 0
      %1390 = vmatprep.subr.bf16.mxu0 0
      %1391 = vmatpush1.bf16.msra.mxu0 0
      %1392 = vmatprep.subr.bf16.mxu0 0
      %1393 = vmatpush1.bf16.msra.mxu0 0
      %1394 = vmatprep.subr.bf16.mxu0 0
      %1395 = vmatpush1.bf16.msra.mxu0 0
      %1396 = vmatprep.subr.bf16.mxu0 0
      %1397 = vmatpush1.bf16.msra.mxu0 0
      %1398 = vmatprep.mubr.bf16.mxu0 0
      %1399 = vmatmul.mubr.bf16.gmra.mrb[0].mxu0 %v1360
      %v1400 = vpop.f32.mrb[0].mxu0
      %v1401 = vadd.f32 0.0, %v1400
      %v1402 = vpop.f32.mrb[0].mxu0
      %v1403 = vpop.f32.mrb[0].mxu0
      %v1404 = vpop.f32.mrb[0].mxu0
      %1405 = vdwg.mxu0
      %v1407 = vsel %vm1358, %v942, 0
      %v1410 = vsel %vm1362, %v941, 0
      %1412 = vmatprep.subr.bf16.mxu0 0
      %1413 = vmatpush1.bf16.msra.mxu0 %v1410
      %1414 = vmatprep.subr.bf16.mxu0 0
      %1415 = vmatpush1.bf16.msra.mxu0 0
      %1416 = vmatprep.subr.bf16.mxu0 0
      %1417 = vmatpush1.bf16.msra.mxu0 0
      %1418 = vmatprep.subr.bf16.mxu0 0
      %1419 = vmatpush1.bf16.msra.mxu0 0
      %1420 = vmatprep.subr.bf16.mxu0 0
      %1421 = vmatpush1.bf16.msra.mxu0 0
      %1422 = vmatprep.subr.bf16.mxu0 0
      %1423 = vmatpush1.bf16.msra.mxu0 0
      %1424 = vmatprep.subr.bf16.mxu0 0
      %1425 = vmatpush1.bf16.msra.mxu0 0
      %1426 = vmatprep.subr.bf16.mxu0 0
      %1427 = vmatpush1.bf16.msra.mxu0 0
      %1428 = vmatprep.subr.bf16.mxu0 0
      %1429 = vmatpush1.bf16.msra.mxu0 0
      %1430 = vmatprep.subr.bf16.mxu0 0
      %1431 = vmatpush1.bf16.msra.mxu0 0
      %1432 = vmatprep.subr.bf16.mxu0 0
      %1433 = vmatpush1.bf16.msra.mxu0 0
      %1434 = vmatprep.subr.bf16.mxu0 0
      %1435 = vmatpush1.bf16.msra.mxu0 0
      %1436 = vmatprep.subr.bf16.mxu0 0
      %1437 = vmatpush1.bf16.msra.mxu0 0
      %1438 = vmatprep.subr.bf16.mxu0 0
      %1439 = vmatpush1.bf16.msra.mxu0 0
      %1440 = vmatprep.subr.bf16.mxu0 0
      %1441 = vmatpush1.bf16.msra.mxu0 0
      %1442 = vmatprep.subr.bf16.mxu0 0
      %1443 = vmatpush1.bf16.msra.mxu0 0
      %1444 = vmatprep.mubr.bf16.mxu0 0
      %1445 = vmatmul.mubr.bf16.gmra.mrb[0].mxu0 %v1407
      %v1446 = vpop.f32.mrb[0].mxu0
      %v1447 = vadd.f32 %v1401, %v1446
      %v1448 = vpop.f32.mrb[0].mxu0
      %v1449 = vpop.f32.mrb[0].mxu0
      %v1450 = vpop.f32.mrb[0].mxu0
      %1451 = vdwg.mxu0
      %1452 = vmatprep.subr.bf16.mxu0 0
      %1453 = vmatpush1.bf16.msra.mxu0 %v650
      %1454 = vmatprep.subr.bf16.mxu0 0
      %1455 = vmatpush1.bf16.msra.mxu0 0
      %1456 = vmatprep.subr.bf16.mxu0 0
      %1457 = vmatpush1.bf16.msra.mxu0 0
      %1458 = vmatprep.subr.bf16.mxu0 0
      %1459 = vmatpush1.bf16.msra.mxu0 0
      %1460 = vmatprep.subr.bf16.mxu0 0
      %1461 = vmatpush1.bf16.msra.mxu0 0
      %1462 = vmatprep.subr.bf16.mxu0 0
      %1463 = vmatpush1.bf16.msra.mxu0 0
      %1464 = vmatprep.subr.bf16.mxu0 0
      %1465 = vmatpush1.bf16.msra.mxu0 0
      %1466 = vmatprep.subr.bf16.mxu0 0
      %1467 = vmatpush1.bf16.msra.mxu0 0
      %1468 = vmatprep.subr.bf16.mxu0 0
      %1469 = vmatpush1.bf16.msra.mxu0 0
      %1470 = vmatprep.subr.bf16.mxu0 0
      %1471 = vmatpush1.bf16.msra.mxu0 0
      %1472 = vmatprep.subr.bf16.mxu0 0
      %1473 = vmatpush1.bf16.msra.mxu0 0
      %1474 = vmatprep.subr.bf16.mxu0 0
      %1475 = vmatpush1.bf16.msra.mxu0 0
      %1476 = vmatprep.subr.bf16.mxu0 0
      %1477 = vmatpush1.bf16.msra.mxu0 0
      %1478 = vmatprep.subr.bf16.mxu0 0
      %1479 = vmatpush1.bf16.msra.mxu0 0
      %1480 = vmatprep.subr.bf16.mxu0 0
      %1481 = vmatpush1.bf16.msra.mxu0 0
      %1482 = vmatprep.subr.bf16.mxu0 0
      %1483 = vmatpush1.bf16.msra.mxu0 0
      %1484 = vmatprep.mubr.bf16.mxu0 0
      %1485 = vmatmul.mubr.bf16.gmra.mrb[0].mxu0 %v442
      %v1486 = vpop.f32.mrb[0].mxu0
      %v1487 = vadd.f32 0.0, %v1486
      %v1488 = vpop.f32.mrb[0].mxu0
      %v1489 = vpop.f32.mrb[0].mxu0
      %v1490 = vpop.f32.mrb[0].mxu0
      %1491 = vdwg.mxu0
      %1492 = vmatprep.subr.bf16.mxu0 0
      %1493 = vmatpush1.bf16.msra.mxu0 %v600
      %1494 = vmatprep.subr.bf16.mxu0 0
      %1495 = vmatpush1.bf16.msra.mxu0 0
      %1496 = vmatprep.subr.bf16.mxu0 0
      %1497 = vmatpush1.bf16.msra.mxu0 0
      %1498 = vmatprep.subr.bf16.mxu0 0
      %1499 = vmatpush1.bf16.msra.mxu0 0
      %1500 = vmatprep.subr.bf16.mxu0 0
      %1501 = vmatpush1.bf16.msra.mxu0 0
      %1502 = vmatprep.subr.bf16.mxu0 0
      %1503 = vmatpush1.bf16.msra.mxu0 0
      %1504 = vmatprep.subr.bf16.mxu0 0
      %1505 = vmatpush1.bf16.msra.mxu0 0
      %1506 = vmatprep.subr.bf16.mxu0 0
      %1507 = vmatpush1.bf16.msra.mxu0 0
      %1508 = vmatprep.subr.bf16.mxu0 0
      %1509 = vmatpush1.bf16.msra.mxu0 0
      %1510 = vmatprep.subr.bf16.mxu0 0
      %1511 = vmatpush1.bf16.msra.mxu0 0
      %1512 = vmatprep.subr.bf16.mxu0 0
      %1513 = vmatpush1.bf16.msra.mxu0 0
      %1514 = vmatprep.subr.bf16.mxu0 0
      %1515 = vmatpush1.bf16.msra.mxu0 0
      %1516 = vmatprep.subr.bf16.mxu0 0
      %1517 = vmatpush1.bf16.msra.mxu0 0
      %1518 = vmatprep.subr.bf16.mxu0 0
      %1519 = vmatpush1.bf16.msra.mxu0 0
      %1520 = vmatprep.subr.bf16.mxu0 0
      %1521 = vmatpush1.bf16.msra.mxu0 0
      %1522 = vmatprep.subr.bf16.mxu0 0
      %1523 = vmatpush1.bf16.msra.mxu0 0
      %1524 = vmatprep.mubr.bf16.mxu0 0
      %1525 = vmatmul.mubr.bf16.gmra.mrb[0].mxu0 %v489
      %v1526 = vpop.f32.mrb[0].mxu0
      %v1527 = vadd.f32 %v1487, %v1526
      %v1528 = vpop.f32.mrb[0].mxu0
      %v1529 = vpop.f32.mrb[0].mxu0
      %v1530 = vpop.f32.mrb[0].mxu0
      %1531 = vdwg.mxu0
      %1532 = vmatprep.subr.bf16.mxu0 0
      %1533 = vmatpush1.bf16.msra.mxu0 %v709
      %1534 = vmatprep.subr.bf16.mxu0 0
      %1535 = vmatpush1.bf16.msra.mxu0 0
      %1536 = vmatprep.subr.bf16.mxu0 0
      %1537 = vmatpush1.bf16.msra.mxu0 0
      %1538 = vmatprep.subr.bf16.mxu0 0
      %1539 = vmatpush1.bf16.msra.mxu0 0
      %1540 = vmatprep.subr.bf16.mxu0 0
      %1541 = vmatpush1.bf16.msra.mxu0 0
      %1542 = vmatprep.subr.bf16.mxu0 0
      %1543 = vmatpush1.bf16.msra.mxu0 0
      %1544 = vmatprep.subr.bf16.mxu0 0
      %1545 = vmatpush1.bf16.msra.mxu0 0
      %1546 = vmatprep.subr.bf16.mxu0 0
      %1547 = vmatpush1.bf16.msra.mxu0 0
      %1548 = vmatprep.subr.bf16.mxu0 0
      %1549 = vmatpush1.bf16.msra.mxu0 0
      %1550 = vmatprep.subr.bf16.mxu0 0
      %1551 = vmatpush1.bf16.msra.mxu0 0
      %1552 = vmatprep.subr.bf16.mxu0 0
      %1553 = vmatpush1.bf16.msra.mxu0 0
      %1554 = vmatprep.subr.bf16.mxu0 0
      %1555 = vmatpush1.bf16.msra.mxu0 0
      %1556 = vmatprep.subr.bf16.mxu0 0
      %1557 = vmatpush1.bf16.msra.mxu0 0
      %1558 = vmatprep.subr.bf16.mxu0 0
      %1559 = vmatpush1.bf16.msra.mxu0 0
      %1560 = vmatprep.subr.bf16.mxu0 0
      %1561 = vmatpush1.bf16.msra.mxu0 0
      %1562 = vmatprep.subr.bf16.mxu0 0
      %1563 = vmatpush1.bf16.msra.mxu0 0
      %1564 = vmatprep.mubr.bf16.mxu0 0
      %1565 = vmatmul.mubr.bf16.gmra.mrb[0].mxu0 %v547
      %v1566 = vpop.f32.mrb[0].mxu0
      %v1567 = vadd.f32 0.0, %v1566
      %v1568 = vpop.f32.mrb[0].mxu0
      %v1569 = vpop.f32.mrb[0].mxu0
      %v1570 = vpop.f32.mrb[0].mxu0
      %1571 = vdwg.mxu0
      %v1572 = vadd.f32 %v1527, %v1567
      %1573 = vmatprep.subr.bf16.mxu0 0
      %1574 = vmatpush1.bf16.msra.mxu0 %v769
      %1575 = vmatprep.subr.bf16.mxu0 0
      %1576 = vmatpush1.bf16.msra.mxu0 0
      %1577 = vmatprep.subr.bf16.mxu0 0
      %1578 = vmatpush1.bf16.msra.mxu0 0
      %1579 = vmatprep.subr.bf16.mxu0 0
      %1580 = vmatpush1.bf16.msra.mxu0 0
      %1581 = vmatprep.subr.bf16.mxu0 0
      %1582 = vmatpush1.bf16.msra.mxu0 0
      %1583 = vmatprep.subr.bf16.mxu0 0
      %1584 = vmatpush1.bf16.msra.mxu0 0
      %1585 = vmatprep.subr.bf16.mxu0 0
      %1586 = vmatpush1.bf16.msra.mxu0 0
      %1587 = vmatprep.subr.bf16.mxu0 0
      %1588 = vmatpush1.bf16.msra.mxu0 0
      %1589 = vmatprep.subr.bf16.mxu0 0
      %1590 = vmatpush1.bf16.msra.mxu0 0
      %1591 = vmatprep.subr.bf16.mxu0 0
      %1592 = vmatpush1.bf16.msra.mxu0 0
      %1593 = vmatprep.subr.bf16.mxu0 0
      %1594 = vmatpush1.bf16.msra.mxu0 0
      %1595 = vmatprep.subr.bf16.mxu0 0
      %1596 = vmatpush1.bf16.msra.mxu0 0
      %1597 = vmatprep.subr.bf16.mxu0 0
      %1598 = vmatpush1.bf16.msra.mxu0 0
      %1599 = vmatprep.subr.bf16.mxu0 0
      %1600 = vmatpush1.bf16.msra.mxu0 0
      %1601 = vmatprep.subr.bf16.mxu0 0
      %1602 = vmatpush1.bf16.msra.mxu0 0
      %1603 = vmatprep.subr.bf16.mxu0 0
      %1604 = vmatpush1.bf16.msra.mxu0 0
      %1605 = vmatprep.mubr.bf16.mxu0 0
      %1606 = vmatmul.mubr.bf16.gmra.mrb[0].mxu0 %v597
      %v1607 = vpop.f32.mrb[0].mxu0
      %v1608 = vadd.f32 0.0, %v1607
      %v1609 = vpop.f32.mrb[0].mxu0
      %v1610 = vpop.f32.mrb[0].mxu0
      %v1611 = vpop.f32.mrb[0].mxu0
      %1612 = vdwg.mxu0
      %v1613 = vadd.f32 %v1572, %v1608
      %1614 = vmatprep.subr.bf16.mxu0 0
      %1615 = vmatpush1.bf16.msra.mxu0 %v829
      %1616 = vmatprep.subr.bf16.mxu0 0
      %1617 = vmatpush1.bf16.msra.mxu0 0
      %1618 = vmatprep.subr.bf16.mxu0 0
      %1619 = vmatpush1.bf16.msra.mxu0 0
      %1620 = vmatprep.subr.bf16.mxu0 0
      %1621 = vmatpush1.bf16.msra.mxu0 0
      %1622 = vmatprep.subr.bf16.mxu0 0
      %1623 = vmatpush1.bf16.msra.mxu0 0
      %1624 = vmatprep.subr.bf16.mxu0 0
      %1625 = vmatpush1.bf16.msra.mxu0 0
      %1626 = vmatprep.subr.bf16.mxu0 0
      %1627 = vmatpush1.bf16.msra.mxu0 0
      %1628 = vmatprep.subr.bf16.mxu0 0
      %1629 = vmatpush1.bf16.msra.mxu0 0
      %1630 = vmatprep.subr.bf16.mxu0 0
      %1631 = vmatpush1.bf16.msra.mxu0 0
      %1632 = vmatprep.subr.bf16.mxu0 0
      %1633 = vmatpush1.bf16.msra.mxu0 0
      %1634 = vmatprep.subr.bf16.mxu0 0
      %1635 = vmatpush1.bf16.msra.mxu0 0
      %1636 = vmatprep.subr.bf16.mxu0 0
      %1637 = vmatpush1.bf16.msra.mxu0 0
      %1638 = vmatprep.subr.bf16.mxu0 0
      %1639 = vmatpush1.bf16.msra.mxu0 0
      %1640 = vmatprep.subr.bf16.mxu0 0
      %1641 = vmatpush1.bf16.msra.mxu0 0
      %1642 = vmatprep.subr.bf16.mxu0 0
      %1643 = vmatpush1.bf16.msra.mxu0 0
      %1644 = vmatprep.subr.bf16.mxu0 0
      %1645 = vmatpush1.bf16.msra.mxu0 0
      %1646 = vmatprep.mubr.bf16.mxu0 0
      %1647 = vmatmul.mubr.bf16.gmra.mrb[0].mxu0 %v647
      %v1648 = vpop.f32.mrb[0].mxu0
      %v1649 = vadd.f32 0.0, %v1648
      %v1650 = vpop.f32.mrb[0].mxu0
      %v1651 = vpop.f32.mrb[0].mxu0
      %v1652 = vpop.f32.mrb[0].mxu0
      %1653 = vdwg.mxu0
      %v1654 = vadd.f32 %v1613, %v1649
      %1655 = vmatprep.subr.bf16.mxu0 0
      %1656 = vmatpush1.bf16.msra.mxu0 %v889
      %1657 = vmatprep.subr.bf16.mxu0 0
      %1658 = vmatpush1.bf16.msra.mxu0 0
      %1659 = vmatprep.subr.bf16.mxu0 0
      %1660 = vmatpush1.bf16.msra.mxu0 0
      %1661 = vmatprep.subr.bf16.mxu0 0
      %1662 = vmatpush1.bf16.msra.mxu0 0
      %1663 = vmatprep.subr.bf16.mxu0 0
      %1664 = vmatpush1.bf16.msra.mxu0 0
      %1665 = vmatprep.subr.bf16.mxu0 0
      %1666 = vmatpush1.bf16.msra.mxu0 0
      %1667 = vmatprep.subr.bf16.mxu0 0
      %1668 = vmatpush1.bf16.msra.mxu0 0
      %1669 = vmatprep.subr.bf16.mxu0 0
      %1670 = vmatpush1.bf16.msra.mxu0 0
      %1671 = vmatprep.subr.bf16.mxu0 0
      %1672 = vmatpush1.bf16.msra.mxu0 0
      %1673 = vmatprep.subr.bf16.mxu0 0
      %1674 = vmatpush1.bf16.msra.mxu0 0
      %1675 = vmatprep.subr.bf16.mxu0 0
      %1676 = vmatpush1.bf16.msra.mxu0 0
      %1677 = vmatprep.subr.bf16.mxu0 0
      %1678 = vmatpush1.bf16.msra.mxu0 0
      %1679 = vmatprep.subr.bf16.mxu0 0
      %1680 = vmatpush1.bf16.msra.mxu0 0
      %1681 = vmatprep.subr.bf16.mxu0 0
      %1682 = vmatpush1.bf16.msra.mxu0 0
      %1683 = vmatprep.subr.bf16.mxu0 0
      %1684 = vmatpush1.bf16.msra.mxu0 0
      %1685 = vmatprep.subr.bf16.mxu0 0
      %1686 = vmatpush1.bf16.msra.mxu0 0
      %1687 = vmatprep.mubr.bf16.mxu0 0
      %1688 = vmatmul.mubr.bf16.gmra.mrb[0].mxu0 %v706
      %v1689 = vpop.f32.mrb[0].mxu0
      %v1690 = vadd.f32 0.0, %v1689
      %v1691 = vpop.f32.mrb[0].mxu0
      %v1692 = vpop.f32.mrb[0].mxu0
      %v1693 = vpop.f32.mrb[0].mxu0
      %1694 = vdwg.mxu0
      %v1695 = vadd.f32 %v1654, %v1690
      %v1696 = vld [vmem:[%s408] sm:$0x3]
      %v1699 = vunpack.c.l.s4 1983009808
      %v1700 = vunpack.c.0.s8 %v1699
      %v1701 = vlaneseq
      %v1702 = vshrl.u32 %v1701, 7
      %v1703 = vsub.s32 %v1700, %v1702
      %v1704 = vrot.slane %v1696, %v1703
      %1705 = vrot.lane.b32.xlu0 %v1704, 119
      %v1706 = vpop.permute.xlu0 %1705
      %v1708 = vsel %vm444, %v1706, 0
      %1710 = vmatprep.subr.bf16.mxu0 0
      %1711 = vmatpush1.bf16.msra.mxu0 %v1708
      %1712 = vmatprep.subr.bf16.mxu0 0
      %1713 = vmatpush1.bf16.msra.mxu0 0
      %1714 = vmatprep.subr.bf16.mxu0 0
      %1715 = vmatpush1.bf16.msra.mxu0 0
      %1716 = vmatprep.subr.bf16.mxu0 0
      %1717 = vmatpush1.bf16.msra.mxu0 0
      %1718 = vmatprep.subr.bf16.mxu0 0
      %1719 = vmatpush1.bf16.msra.mxu0 0
      %1720 = vmatprep.subr.bf16.mxu0 0
      %1721 = vmatpush1.bf16.msra.mxu0 0
      %1722 = vmatprep.subr.bf16.mxu0 0
      %1723 = vmatpush1.bf16.msra.mxu0 0
      %1724 = vmatprep.subr.bf16.mxu0 0
      %1725 = vmatpush1.bf16.msra.mxu0 0
      %1726 = vmatprep.subr.bf16.mxu0 0
      %1727 = vmatpush1.bf16.msra.mxu0 0
      %1728 = vmatprep.subr.bf16.mxu0 0
      %1729 = vmatpush1.bf16.msra.mxu0 0
      %1730 = vmatprep.subr.bf16.mxu0 0
      %1731 = vmatpush1.bf16.msra.mxu0 0
      %1732 = vmatprep.subr.bf16.mxu0 0
      %1733 = vmatpush1.bf16.msra.mxu0 0
      %1734 = vmatprep.subr.bf16.mxu0 0
      %1735 = vmatpush1.bf16.msra.mxu0 0
      %1736 = vmatprep.subr.bf16.mxu0 0
      %1737 = vmatpush1.bf16.msra.mxu0 0
      %1738 = vmatprep.subr.bf16.mxu0 0
      %1739 = vmatpush1.bf16.msra.mxu0 0
      %1740 = vmatprep.subr.bf16.mxu0 0
      %1741 = vmatpush1.bf16.msra.mxu0 0
      %1742 = vmatprep.mubr.bf16.mxu0 0
      %1743 = vmatmul.mubr.bf16.gmra.mrb[0].mxu0 %v766
      %v1744 = vpop.f32.mrb[0].mxu0
      %v1745 = vadd.f32 0.0, %v1744
      %v1746 = vpop.f32.mrb[0].mxu0
      %v1747 = vpop.f32.mrb[0].mxu0
      %v1748 = vpop.f32.mrb[0].mxu0
      %1749 = vdwg.mxu0
      %v1750 = vadd.f32 %v1695, %v1745
      %v1751 = vld [vmem:[%s415] sm:$0x3]
      %v1754 = vunpack.c.l.s4 1983009808
      %v1755 = vunpack.c.0.s8 %v1754
      %v1756 = vlaneseq
      %v1757 = vshrl.u32 %v1756, 7
      %v1758 = vsub.s32 %v1755, %v1757
      %v1759 = vrot.slane %v1751, %v1758
      %1760 = vrot.lane.b32.xlu0 %v1759, 119
      %v1761 = vpop.permute.xlu0 %1760
      %v1763 = vsel %vm444, %v1761, 0
      %1765 = vmatprep.subr.bf16.mxu0 0
      %1766 = vmatpush1.bf16.msra.mxu0 %v1763
      %1767 = vmatprep.subr.bf16.mxu0 0
      %1768 = vmatpush1.bf16.msra.mxu0 0
      %1769 = vmatprep.subr.bf16.mxu0 0
      %1770 = vmatpush1.bf16.msra.mxu0 0
      %1771 = vmatprep.subr.bf16.mxu0 0
      %1772 = vmatpush1.bf16.msra.mxu0 0
      %1773 = vmatprep.subr.bf16.mxu0 0
      %1774 = vmatpush1.bf16.msra.mxu0 0
      %1775 = vmatprep.subr.bf16.mxu0 0
      %1776 = vmatpush1.bf16.msra.mxu0 0
      %1777 = vmatprep.subr.bf16.mxu0 0
      %1778 = vmatpush1.bf16.msra.mxu0 0
      %1779 = vmatprep.subr.bf16.mxu0 0
      %1780 = vmatpush1.bf16.msra.mxu0 0
      %1781 = vmatprep.subr.bf16.mxu0 0
      %1782 = vmatpush1.bf16.msra.mxu0 0
      %1783 = vmatprep.subr.bf16.mxu0 0
      %1784 = vmatpush1.bf16.msra.mxu0 0
      %1785 = vmatprep.subr.bf16.mxu0 0
      %1786 = vmatpush1.bf16.msra.mxu0 0
      %1787 = vmatprep.subr.bf16.mxu0 0
      %1788 = vmatpush1.bf16.msra.mxu0 0
      %1789 = vmatprep.subr.bf16.mxu0 0
      %1790 = vmatpush1.bf16.msra.mxu0 0
      %1791 = vmatprep.subr.bf16.mxu0 0
      %1792 = vmatpush1.bf16.msra.mxu0 0
      %1793 = vmatprep.subr.bf16.mxu0 0
      %1794 = vmatpush1.bf16.msra.mxu0 0
      %1795 = vmatprep.subr.bf16.mxu0 0
      %1796 = vmatpush1.bf16.msra.mxu0 0
      %1797 = vmatprep.mubr.bf16.mxu0 0
      %1798 = vmatmul.mubr.bf16.gmra.mrb[0].mxu0 %v826
      %v1799 = vpop.f32.mrb[0].mxu0
      %v1800 = vadd.f32 0.0, %v1799
      %v1801 = vpop.f32.mrb[0].mxu0
      %v1802 = vpop.f32.mrb[0].mxu0
      %v1803 = vpop.f32.mrb[0].mxu0
      %1804 = vdwg.mxu0
      %v1805 = vadd.f32 %v1750, %v1800
      %v1806 = vld [vmem:[%s408] sm:$0x3]
      %v1809 = vunpack.c.l.s4 1983009808
      %v1810 = vunpack.c.0.s8 %v1809
      %v1811 = vlaneseq
      %v1812 = vshrl.u32 %v1811, 7
      %v1813 = vsub.s32 %v1810, %v1812
      %v1814 = vrot.slane %v1806, %v1813
      %1815 = vrot.lane.b32.xlu0 %v1814, 118
      %v1816 = vpop.permute.xlu0 %1815
      %v1818 = vsel %vm444, %v1816, 0
      %1820 = vmatprep.subr.bf16.mxu0 0
      %1821 = vmatpush1.bf16.msra.mxu0 %v1818
      %1822 = vmatprep.subr.bf16.mxu0 0
      %1823 = vmatpush1.bf16.msra.mxu0 0
      %1824 = vmatprep.subr.bf16.mxu0 0
      %1825 = vmatpush1.bf16.msra.mxu0 0
      %1826 = vmatprep.subr.bf16.mxu0 0
      %1827 = vmatpush1.bf16.msra.mxu0 0
      %1828 = vmatprep.subr.bf16.mxu0 0
      %1829 = vmatpush1.bf16.msra.mxu0 0
      %1830 = vmatprep.subr.bf16.mxu0 0
      %1831 = vmatpush1.bf16.msra.mxu0 0
      %1832 = vmatprep.subr.bf16.mxu0 0
      %1833 = vmatpush1.bf16.msra.mxu0 0
      %1834 = vmatprep.subr.bf16.mxu0 0
      %1835 = vmatpush1.bf16.msra.mxu0 0
      %1836 = vmatprep.subr.bf16.mxu0 0
      %1837 = vmatpush1.bf16.msra.mxu0 0
      %1838 = vmatprep.subr.bf16.mxu0 0
      %1839 = vmatpush1.bf16.msra.mxu0 0
      %1840 = vmatprep.subr.bf16.mxu0 0
      %1841 = vmatpush1.bf16.msra.mxu0 0
      %1842 = vmatprep.subr.bf16.mxu0 0
      %1843 = vmatpush1.bf16.msra.mxu0 0
      %1844 = vmatprep.subr.bf16.mxu0 0
      %1845 = vmatpush1.bf16.msra.mxu0 0
      %1846 = vmatprep.subr.bf16.mxu0 0
      %1847 = vmatpush1.bf16.msra.mxu0 0
      %1848 = vmatprep.subr.bf16.mxu0 0
      %1849 = vmatpush1.bf16.msra.mxu0 0
      %1850 = vmatprep.subr.bf16.mxu0 0
      %1851 = vmatpush1.bf16.msra.mxu0 0
      %1852 = vmatprep.mubr.bf16.mxu0 0
      %1853 = vmatmul.mubr.bf16.gmra.mrb[0].mxu0 %v886
      %v1854 = vpop.f32.mrb[0].mxu0
      %v1855 = vadd.f32 0.0, %v1854
      %v1856 = vpop.f32.mrb[0].mxu0
      %v1857 = vpop.f32.mrb[0].mxu0
      %v1858 = vpop.f32.mrb[0].mxu0
      %1859 = vdwg.mxu0
      %v1860 = vadd.f32 %v1805, %v1855
      %v1861 = vadd.f32 %v1860, %v936
      %v1862 = vmul.f32 %v1861, 0.2
      %v1863 = vmax.f32 %v1861, %v1862
      %v1864 = vpack.c.bf16 %v1863, %v1863
      %s1865 = scalar_lea.vmem %s6, 8
      %v1866 = vld [vmem:[%s1865] sm:$0xf]
      %v1868 = vsel %vm1358, %v1866, 0
      %v1871 = vsel %vm1362, %v1864, 0
      %1873 = vmatprep.subr.bf16.mxu0 0
      %1874 = vmatpush1.bf16.msra.mxu0 %v1871
      %1875 = vmatprep.subr.bf16.mxu0 0
      %1876 = vmatpush1.bf16.msra.mxu0 0
      %1877 = vmatprep.subr.bf16.mxu0 0
      %1878 = vmatpush1.bf16.msra.mxu0 0
      %1879 = vmatprep.subr.bf16.mxu0 0
      %1880 = vmatpush1.bf16.msra.mxu0 0
      %1881 = vmatprep.subr.bf16.mxu0 0
      %1882 = vmatpush1.bf16.msra.mxu0 0
      %1883 = vmatprep.subr.bf16.mxu0 0
      %1884 = vmatpush1.bf16.msra.mxu0 0
      %1885 = vmatprep.subr.bf16.mxu0 0
      %1886 = vmatpush1.bf16.msra.mxu0 0
      %1887 = vmatprep.subr.bf16.mxu0 0
      %1888 = vmatpush1.bf16.msra.mxu0 0
      %1889 = vmatprep.subr.bf16.mxu0 0
      %1890 = vmatpush1.bf16.msra.mxu0 0
      %1891 = vmatprep.subr.bf16.mxu0 0
      %1892 = vmatpush1.bf16.msra.mxu0 0
      %1893 = vmatprep.subr.bf16.mxu0 0
      %1894 = vmatpush1.bf16.msra.mxu0 0
      %1895 = vmatprep.subr.bf16.mxu0 0
      %1896 = vmatpush1.bf16.msra.mxu0 0
      %1897 = vmatprep.subr.bf16.mxu0 0
      %1898 = vmatpush1.bf16.msra.mxu0 0
      %1899 = vmatprep.subr.bf16.mxu0 0
      %1900 = vmatpush1.bf16.msra.mxu0 0
      %1901 = vmatprep.subr.bf16.mxu0 0
      %1902 = vmatpush1.bf16.msra.mxu0 0
      %1903 = vmatprep.subr.bf16.mxu0 0
      %1904 = vmatpush1.bf16.msra.mxu0 0
      %1905 = vmatprep.mubr.bf16.mxu0 0
      %1906 = vmatmul.mubr.bf16.gmra.mrb[0].mxu0 %v1868
      %v1907 = vpop.f32.mrb[0].mxu0
      %v1908 = vadd.f32 0.0, %v1907
      %v1909 = vpop.f32.mrb[0].mxu0
      %v1910 = vpop.f32.mrb[0].mxu0
      %v1911 = vpop.f32.mrb[0].mxu0
      %1912 = vdwg.mxu0
      %v1913 = vadd.f32 %v1447, %v1908
      %1914 = vmatprep.subr.bf16.mxu0 0
      %1915 = vmatpush1.bf16.msra.mxu0 %v709
      %1916 = vmatprep.subr.bf16.mxu0 0
      %1917 = vmatpush1.bf16.msra.mxu0 0
      %1918 = vmatprep.subr.bf16.mxu0 0
      %1919 = vmatpush1.bf16.msra.mxu0 0
      %1920 = vmatprep.subr.bf16.mxu0 0
      %1921 = vmatpush1.bf16.msra.mxu0 0
      %1922 = vmatprep.subr.bf16.mxu0 0
      %1923 = vmatpush1.bf16.msra.mxu0 0
      %1924 = vmatprep.subr.bf16.mxu0 0
      %1925 = vmatpush1.bf16.msra.mxu0 0
      %1926 = vmatprep.subr.bf16.mxu0 0
      %1927 = vmatpush1.bf16.msra.mxu0 0
      %1928 = vmatprep.subr.bf16.mxu0 0
      %1929 = vmatpush1.bf16.msra.mxu0 0
      %1930 = vmatprep.subr.bf16.mxu0 0
      %1931 = vmatpush1.bf16.msra.mxu0 0
      %1932 = vmatprep.subr.bf16.mxu0 0
      %1933 = vmatpush1.bf16.msra.mxu0 0
      %1934 = vmatprep.subr.bf16.mxu0 0
      %1935 = vmatpush1.bf16.msra.mxu0 0
      %1936 = vmatprep.subr.bf16.mxu0 0
      %1937 = vmatpush1.bf16.msra.mxu0 0
      %1938 = vmatprep.subr.bf16.mxu0 0
      %1939 = vmatpush1.bf16.msra.mxu0 0
      %1940 = vmatprep.subr.bf16.mxu0 0
      %1941 = vmatpush1.bf16.msra.mxu0 0
      %1942 = vmatprep.subr.bf16.mxu0 0
      %1943 = vmatpush1.bf16.msra.mxu0 0
      %1944 = vmatprep.subr.bf16.mxu0 0
      %1945 = vmatpush1.bf16.msra.mxu0 0
      %1946 = vmatprep.mubr.bf16.mxu0 0
      %1947 = vmatmul.mubr.bf16.gmra.mrb[0].mxu0 %v442
      %v1948 = vpop.f32.mrb[0].mxu0
      %v1949 = vadd.f32 0.0, %v1948
      %v1950 = vpop.f32.mrb[0].mxu0
      %v1951 = vpop.f32.mrb[0].mxu0
      %v1952 = vpop.f32.mrb[0].mxu0
      %1953 = vdwg.mxu0
      %1954 = vmatprep.subr.bf16.mxu0 0
      %1955 = vmatpush1.bf16.msra.mxu0 %v650
      %1956 = vmatprep.subr.bf16.mxu0 0
      %1957 = vmatpush1.bf16.msra.mxu0 0
      %1958 = vmatprep.subr.bf16.mxu0 0
      %1959 = vmatpush1.bf16.msra.mxu0 0
      %1960 = vmatprep.subr.bf16.mxu0 0
      %1961 = vmatpush1.bf16.msra.mxu0 0
      %1962 = vmatprep.subr.bf16.mxu0 0
      %1963 = vmatpush1.bf16.msra.mxu0 0
      %1964 = vmatprep.subr.bf16.mxu0 0
      %1965 = vmatpush1.bf16.msra.mxu0 0
      %1966 = vmatprep.subr.bf16.mxu0 0
      %1967 = vmatpush1.bf16.msra.mxu0 0
      %1968 = vmatprep.subr.bf16.mxu0 0
      %1969 = vmatpush1.bf16.msra.mxu0 0
      %1970 = vmatprep.subr.bf16.mxu0 0
      %1971 = vmatpush1.bf16.msra.mxu0 0
      %1972 = vmatprep.subr.bf16.mxu0 0
      %1973 = vmatpush1.bf16.msra.mxu0 0
      %1974 = vmatprep.subr.bf16.mxu0 0
      %1975 = vmatpush1.bf16.msra.mxu0 0
      %1976 = vmatprep.subr.bf16.mxu0 0
      %1977 = vmatpush1.bf16.msra.mxu0 0
      %1978 = vmatprep.subr.bf16.mxu0 0
      %1979 = vmatpush1.bf16.msra.mxu0 0
      %1980 = vmatprep.subr.bf16.mxu0 0
      %1981 = vmatpush1.bf16.msra.mxu0 0
      %1982 = vmatprep.subr.bf16.mxu0 0
      %1983 = vmatpush1.bf16.msra.mxu0 0
      %1984 = vmatprep.subr.bf16.mxu0 0
      %1985 = vmatpush1.bf16.msra.mxu0 0
      %1986 = vmatprep.mubr.bf16.mxu0 0
      %1987 = vmatmul.mubr.bf16.gmra.mrb[0].mxu0 %v489
      %v1988 = vpop.f32.mrb[0].mxu0
      %v1989 = vadd.f32 %v1949, %v1988
      %v1990 = vpop.f32.mrb[0].mxu0
      %v1991 = vpop.f32.mrb[0].mxu0
      %v1992 = vpop.f32.mrb[0].mxu0
      %1993 = vdwg.mxu0
      %1994 = vmatprep.subr.bf16.mxu0 0
      %1995 = vmatpush1.bf16.msra.mxu0 %v1172
      %1996 = vmatprep.subr.bf16.mxu0 0
      %1997 = vmatpush1.bf16.msra.mxu0 0
      %1998 = vmatprep.subr.bf16.mxu0 0
      %1999 = vmatpush1.bf16.msra.mxu0 0
      %2000 = vmatprep.subr.bf16.mxu0 0
      %2001 = vmatpush1.bf16.msra.mxu0 0
      %2002 = vmatprep.subr.bf16.mxu0 0
      %2003 = vmatpush1.bf16.msra.mxu0 0
      %2004 = vmatprep.subr.bf16.mxu0 0
      %2005 = vmatpush1.bf16.msra.mxu0 0
      %2006 = vmatprep.subr.bf16.mxu0 0
      %2007 = vmatpush1.bf16.msra.mxu0 0
      %2008 = vmatprep.subr.bf16.mxu0 0
      %2009 = vmatpush1.bf16.msra.mxu0 0
      %2010 = vmatprep.subr.bf16.mxu0 0
      %2011 = vmatpush1.bf16.msra.mxu0 0
      %2012 = vmatprep.subr.bf16.mxu0 0
      %2013 = vmatpush1.bf16.msra.mxu0 0
      %2014 = vmatprep.subr.bf16.mxu0 0
      %2015 = vmatpush1.bf16.msra.mxu0 0
      %2016 = vmatprep.subr.bf16.mxu0 0
      %2017 = vmatpush1.bf16.msra.mxu0 0
      %2018 = vmatprep.subr.bf16.mxu0 0
      %2019 = vmatpush1.bf16.msra.mxu0 0
      %2020 = vmatprep.subr.bf16.mxu0 0
      %2021 = vmatpush1.bf16.msra.mxu0 0
      %2022 = vmatprep.subr.bf16.mxu0 0
      %2023 = vmatpush1.bf16.msra.mxu0 0
      %2024 = vmatprep.subr.bf16.mxu0 0
      %2025 = vmatpush1.bf16.msra.mxu0 0
      %2026 = vmatprep.mubr.bf16.mxu0 0
      %2027 = vmatmul.mubr.bf16.gmra.mrb[0].mxu0 %v547
      %v2028 = vpop.f32.mrb[0].mxu0
      %v2029 = vadd.f32 0.0, %v2028
      %v2030 = vpop.f32.mrb[0].mxu0
      %v2031 = vpop.f32.mrb[0].mxu0
      %v2032 = vpop.f32.mrb[0].mxu0
      %2033 = vdwg.mxu0
      %v2034 = vadd.f32 %v1989, %v2029
      %2035 = vmatprep.subr.bf16.mxu0 0
      %2036 = vmatpush1.bf16.msra.mxu0 %v829
      %2037 = vmatprep.subr.bf16.mxu0 0
      %2038 = vmatpush1.bf16.msra.mxu0 0
      %2039 = vmatprep.subr.bf16.mxu0 0
      %2040 = vmatpush1.bf16.msra.mxu0 0
      %2041 = vmatprep.subr.bf16.mxu0 0
      %2042 = vmatpush1.bf16.msra.mxu0 0
      %2043 = vmatprep.subr.bf16.mxu0 0
      %2044 = vmatpush1.bf16.msra.mxu0 0
      %2045 = vmatprep.subr.bf16.mxu0 0
      %2046 = vmatpush1.bf16.msra.mxu0 0
      %2047 = vmatprep.subr.bf16.mxu0 0
      %2048 = vmatpush1.bf16.msra.mxu0 0
      %2049 = vmatprep.subr.bf16.mxu0 0
      %2050 = vmatpush1.bf16.msra.mxu0 0
      %2051 = vmatprep.subr.bf16.mxu0 0
      %2052 = vmatpush1.bf16.msra.mxu0 0
      %2053 = vmatprep.subr.bf16.mxu0 0
      %2054 = vmatpush1.bf16.msra.mxu0 0
      %2055 = vmatprep.subr.bf16.mxu0 0
      %2056 = vmatpush1.bf16.msra.mxu0 0
      %2057 = vmatprep.subr.bf16.mxu0 0
      %2058 = vmatpush1.bf16.msra.mxu0 0
      %2059 = vmatprep.subr.bf16.mxu0 0
      %2060 = vmatpush1.bf16.msra.mxu0 0
      %2061 = vmatprep.subr.bf16.mxu0 0
      %2062 = vmatpush1.bf16.msra.mxu0 0
      %2063 = vmatprep.subr.bf16.mxu0 0
      %2064 = vmatpush1.bf16.msra.mxu0 0
      %2065 = vmatprep.subr.bf16.mxu0 0
      %2066 = vmatpush1.bf16.msra.mxu0 0
      %2067 = vmatprep.mubr.bf16.mxu0 0
      %2068 = vmatmul.mubr.bf16.gmra.mrb[0].mxu0 %v597
      %v2069 = vpop.f32.mrb[0].mxu0
      %v2070 = vadd.f32 0.0, %v2069
      %v2071 = vpop.f32.mrb[0].mxu0
      %v2072 = vpop.f32.mrb[0].mxu0
      %v2073 = vpop.f32.mrb[0].mxu0
      %2074 = vdwg.mxu0
      %v2075 = vadd.f32 %v2034, %v2070
      %2076 = vmatprep.subr.bf16.mxu0 0
      %2077 = vmatpush1.bf16.msra.mxu0 %v889
      %2078 = vmatprep.subr.bf16.mxu0 0
      %2079 = vmatpush1.bf16.msra.mxu0 0
      %2080 = vmatprep.subr.bf16.mxu0 0
      %2081 = vmatpush1.bf16.msra.mxu0 0
      %2082 = vmatprep.subr.bf16.mxu0 0
      %2083 = vmatpush1.bf16.msra.mxu0 0
      %2084 = vmatprep.subr.bf16.mxu0 0
      %2085 = vmatpush1.bf16.msra.mxu0 0
      %2086 = vmatprep.subr.bf16.mxu0 0
      %2087 = vmatpush1.bf16.msra.mxu0 0
      %2088 = vmatprep.subr.bf16.mxu0 0
      %2089 = vmatpush1.bf16.msra.mxu0 0
      %2090 = vmatprep.subr.bf16.mxu0 0
      %2091 = vmatpush1.bf16.msra.mxu0 0
      %2092 = vmatprep.subr.bf16.mxu0 0
      %2093 = vmatpush1.bf16.msra.mxu0 0
      %2094 = vmatprep.subr.bf16.mxu0 0
      %2095 = vmatpush1.bf16.msra.mxu0 0
      %2096 = vmatprep.subr.bf16.mxu0 0
      %2097 = vmatpush1.bf16.msra.mxu0 0
      %2098 = vmatprep.subr.bf16.mxu0 0
      %2099 = vmatpush1.bf16.msra.mxu0 0
      %2100 = vmatprep.subr.bf16.mxu0 0
      %2101 = vmatpush1.bf16.msra.mxu0 0
      %2102 = vmatprep.subr.bf16.mxu0 0
      %2103 = vmatpush1.bf16.msra.mxu0 0
      %2104 = vmatprep.subr.bf16.mxu0 0
      %2105 = vmatpush1.bf16.msra.mxu0 0
      %2106 = vmatprep.subr.bf16.mxu0 0
      %2107 = vmatpush1.bf16.msra.mxu0 0
      %2108 = vmatprep.mubr.bf16.mxu0 0
      %2109 = vmatmul.mubr.bf16.gmra.mrb[0].mxu0 %v647
      %v2110 = vpop.f32.mrb[0].mxu0
      %v2111 = vadd.f32 0.0, %v2110
      %v2112 = vpop.f32.mrb[0].mxu0
      %v2113 = vpop.f32.mrb[0].mxu0
      %v2114 = vpop.f32.mrb[0].mxu0
      %2115 = vdwg.mxu0
      %v2116 = vadd.f32 %v2075, %v2111
      %2117 = vmatprep.subr.bf16.mxu0 0
      %2118 = vmatpush1.bf16.msra.mxu0 %v1309
      %2119 = vmatprep.subr.bf16.mxu0 0
      %2120 = vmatpush1.bf16.msra.mxu0 0
      %2121 = vmatprep.subr.bf16.mxu0 0
      %2122 = vmatpush1.bf16.msra.mxu0 0
      %2123 = vmatprep.subr.bf16.mxu0 0
      %2124 = vmatpush1.bf16.msra.mxu0 0
      %2125 = vmatprep.subr.bf16.mxu0 0
      %2126 = vmatpush1.bf16.msra.mxu0 0
      %2127 = vmatprep.subr.bf16.mxu0 0
      %2128 = vmatpush1.bf16.msra.mxu0 0
      %2129 = vmatprep.subr.bf16.mxu0 0
      %2130 = vmatpush1.bf16.msra.mxu0 0
      %2131 = vmatprep.subr.bf16.mxu0 0
      %2132 = vmatpush1.bf16.msra.mxu0 0
      %2133 = vmatprep.subr.bf16.mxu0 0
      %2134 = vmatpush1.bf16.msra.mxu0 0
      %2135 = vmatprep.subr.bf16.mxu0 0
      %2136 = vmatpush1.bf16.msra.mxu0 0
      %2137 = vmatprep.subr.bf16.mxu0 0
      %2138 = vmatpush1.bf16.msra.mxu0 0
      %2139 = vmatprep.subr.bf16.mxu0 0
      %2140 = vmatpush1.bf16.msra.mxu0 0
      %2141 = vmatprep.subr.bf16.mxu0 0
      %2142 = vmatpush1.bf16.msra.mxu0 0
      %2143 = vmatprep.subr.bf16.mxu0 0
      %2144 = vmatpush1.bf16.msra.mxu0 0
      %2145 = vmatprep.subr.bf16.mxu0 0
      %2146 = vmatpush1.bf16.msra.mxu0 0
      %2147 = vmatprep.subr.bf16.mxu0 0
      %2148 = vmatpush1.bf16.msra.mxu0 0
      %2149 = vmatprep.mubr.bf16.mxu0 0
      %2150 = vmatmul.mubr.bf16.gmra.mrb[0].mxu0 %v706
      %v2151 = vpop.f32.mrb[0].mxu0
      %v2152 = vadd.f32 0.0, %v2151
      %v2153 = vpop.f32.mrb[0].mxu0
      %v2154 = vpop.f32.mrb[0].mxu0
      %v2155 = vpop.f32.mrb[0].mxu0
      %2156 = vdwg.mxu0
      %v2157 = vadd.f32 %v2116, %v2152
      %2158 = vmatprep.subr.bf16.mxu0 0
      %2159 = vmatpush1.bf16.msra.mxu0 %v1763
      %2160 = vmatprep.subr.bf16.mxu0 0
      %2161 = vmatpush1.bf16.msra.mxu0 0
      %2162 = vmatprep.subr.bf16.mxu0 0
      %2163 = vmatpush1.bf16.msra.mxu0 0
      %2164 = vmatprep.subr.bf16.mxu0 0
      %2165 = vmatpush1.bf16.msra.mxu0 0
      %2166 = vmatprep.subr.bf16.mxu0 0
      %2167 = vmatpush1.bf16.msra.mxu0 0
      %2168 = vmatprep.subr.bf16.mxu0 0
      %2169 = vmatpush1.bf16.msra.mxu0 0
      %2170 = vmatprep.subr.bf16.mxu0 0
      %2171 = vmatpush1.bf16.msra.mxu0 0
      %2172 = vmatprep.subr.bf16.mxu0 0
      %2173 = vmatpush1.bf16.msra.mxu0 0
      %2174 = vmatprep.subr.bf16.mxu0 0
      %2175 = vmatpush1.bf16.msra.mxu0 0
      %2176 = vmatprep.subr.bf16.mxu0 0
      %2177 = vmatpush1.bf16.msra.mxu0 0
      %2178 = vmatprep.subr.bf16.mxu0 0
      %2179 = vmatpush1.bf16.msra.mxu0 0
      %2180 = vmatprep.subr.bf16.mxu0 0
      %2181 = vmatpush1.bf16.msra.mxu0 0
      %2182 = vmatprep.subr.bf16.mxu0 0
      %2183 = vmatpush1.bf16.msra.mxu0 0
      %2184 = vmatprep.subr.bf16.mxu0 0
      %2185 = vmatpush1.bf16.msra.mxu0 0
      %2186 = vmatprep.subr.bf16.mxu0 0
      %2187 = vmatpush1.bf16.msra.mxu0 0
      %2188 = vmatprep.subr.bf16.mxu0 0
      %2189 = vmatpush1.bf16.msra.mxu0 0
      %2190 = vmatprep.mubr.bf16.mxu0 0
      %2191 = vmatmul.mubr.bf16.gmra.mrb[0].mxu0 %v766
      %v2192 = vpop.f32.mrb[0].mxu0
      %v2193 = vadd.f32 0.0, %v2192
      %v2194 = vpop.f32.mrb[0].mxu0
      %v2195 = vpop.f32.mrb[0].mxu0
      %v2196 = vpop.f32.mrb[0].mxu0
      %2197 = vdwg.mxu0
      %v2198 = vadd.f32 %v2157, %v2193
      %2199 = vmatprep.subr.bf16.mxu0 0
      %2200 = vmatpush1.bf16.msra.mxu0 %v1818
      %2201 = vmatprep.subr.bf16.mxu0 0
      %2202 = vmatpush1.bf16.msra.mxu0 0
      %2203 = vmatprep.subr.bf16.mxu0 0
      %2204 = vmatpush1.bf16.msra.mxu0 0
      %2205 = vmatprep.subr.bf16.mxu0 0
      %2206 = vmatpush1.bf16.msra.mxu0 0
      %2207 = vmatprep.subr.bf16.mxu0 0
      %2208 = vmatpush1.bf16.msra.mxu0 0
      %2209 = vmatprep.subr.bf16.mxu0 0
      %2210 = vmatpush1.bf16.msra.mxu0 0
      %2211 = vmatprep.subr.bf16.mxu0 0
      %2212 = vmatpush1.bf16.msra.mxu0 0
      %2213 = vmatprep.subr.bf16.mxu0 0
      %2214 = vmatpush1.bf16.msra.mxu0 0
      %2215 = vmatprep.subr.bf16.mxu0 0
      %2216 = vmatpush1.bf16.msra.mxu0 0
      %2217 = vmatprep.subr.bf16.mxu0 0
      %2218 = vmatpush1.bf16.msra.mxu0 0
      %2219 = vmatprep.subr.bf16.mxu0 0
      %2220 = vmatpush1.bf16.msra.mxu0 0
      %2221 = vmatprep.subr.bf16.mxu0 0
      %2222 = vmatpush1.bf16.msra.mxu0 0
      %2223 = vmatprep.subr.bf16.mxu0 0
      %2224 = vmatpush1.bf16.msra.mxu0 0
      %2225 = vmatprep.subr.bf16.mxu0 0
      %2226 = vmatpush1.bf16.msra.mxu0 0
      %2227 = vmatprep.subr.bf16.mxu0 0
      %2228 = vmatpush1.bf16.msra.mxu0 0
      %2229 = vmatprep.subr.bf16.mxu0 0
      %2230 = vmatpush1.bf16.msra.mxu0 0
      %2231 = vmatprep.mubr.bf16.mxu0 0
      %2232 = vmatmul.mubr.bf16.gmra.mrb[0].mxu0 %v826
      %v2233 = vpop.f32.mrb[0].mxu0
      %v2234 = vadd.f32 0.0, %v2233
      %v2235 = vpop.f32.mrb[0].mxu0
      %v2236 = vpop.f32.mrb[0].mxu0
      %v2237 = vpop.f32.mrb[0].mxu0
      %2238 = vdwg.mxu0
      %v2239 = vadd.f32 %v2198, %v2234
      %v2240 = vld [vmem:[%s415] sm:$0x3]
      %v2243 = vunpack.c.l.s4 1983009808
      %v2244 = vunpack.c.0.s8 %v2243
      %v2245 = vlaneseq
      %v2246 = vshrl.u32 %v2245, 7
      %v2247 = vsub.s32 %v2244, %v2246
      %v2248 = vrot.slane %v2240, %v2247
      %2249 = vrot.lane.b32.xlu0 %v2248, 118
      %v2250 = vpop.permute.xlu0 %2249
      %v2252 = vsel %vm444, %v2250, 0
      %2254 = vmatprep.subr.bf16.mxu0 0
      %2255 = vmatpush1.bf16.msra.mxu0 %v2252
      %2256 = vmatprep.subr.bf16.mxu0 0
      %2257 = vmatpush1.bf16.msra.mxu0 0
      %2258 = vmatprep.subr.bf16.mxu0 0
      %2259 = vmatpush1.bf16.msra.mxu0 0
      %2260 = vmatprep.subr.bf16.mxu0 0
      %2261 = vmatpush1.bf16.msra.mxu0 0
      %2262 = vmatprep.subr.bf16.mxu0 0
      %2263 = vmatpush1.bf16.msra.mxu0 0
      %2264 = vmatprep.subr.bf16.mxu0 0
      %2265 = vmatpush1.bf16.msra.mxu0 0
      %2266 = vmatprep.subr.bf16.mxu0 0
      %2267 = vmatpush1.bf16.msra.mxu0 0
      %2268 = vmatprep.subr.bf16.mxu0 0
      %2269 = vmatpush1.bf16.msra.mxu0 0
      %2270 = vmatprep.subr.bf16.mxu0 0
      %2271 = vmatpush1.bf16.msra.mxu0 0
      %2272 = vmatprep.subr.bf16.mxu0 0
      %2273 = vmatpush1.bf16.msra.mxu0 0
      %2274 = vmatprep.subr.bf16.mxu0 0
      %2275 = vmatpush1.bf16.msra.mxu0 0
      %2276 = vmatprep.subr.bf16.mxu0 0
      %2277 = vmatpush1.bf16.msra.mxu0 0
      %2278 = vmatprep.subr.bf16.mxu0 0
      %2279 = vmatpush1.bf16.msra.mxu0 0
      %2280 = vmatprep.subr.bf16.mxu0 0
      %2281 = vmatpush1.bf16.msra.mxu0 0
      %2282 = vmatprep.subr.bf16.mxu0 0
      %2283 = vmatpush1.bf16.msra.mxu0 0
      %2284 = vmatprep.subr.bf16.mxu0 0
      %2285 = vmatpush1.bf16.msra.mxu0 0
      %2286 = vmatprep.mubr.bf16.mxu0 0
      %2287 = vmatmul.mubr.bf16.gmra.mrb[0].mxu0 %v886
      %v2288 = vpop.f32.mrb[0].mxu0
      %v2289 = vadd.f32 0.0, %v2288
      %v2290 = vpop.f32.mrb[0].mxu0
      %v2291 = vpop.f32.mrb[0].mxu0
      %v2292 = vpop.f32.mrb[0].mxu0
      %2293 = vdwg.mxu0
      %v2294 = vadd.f32 %v2239, %v2289
      %v2295 = vadd.f32 %v2294, %v936
      %v2296 = vmul.f32 %v2295, 0.2
      %v2297 = vmax.f32 %v2295, %v2296
      %v2298 = vpack.c.bf16 %v2297, %v2297
      %s2299 = scalar_lea.vmem %s6, 12
      %v2300 = vld [vmem:[%s2299] sm:$0xf]
      %v2302 = vsel %vm1358, %v2300, 0
      %v2305 = vsel %vm1362, %v2298, 0
      %2307 = vmatprep.subr.bf16.mxu0 0
      %2308 = vmatpush1.bf16.msra.mxu0 %v2305
      %2309 = vmatprep.subr.bf16.mxu0 0
      %2310 = vmatpush1.bf16.msra.mxu0 0
      %2311 = vmatprep.subr.bf16.mxu0 0
      %2312 = vmatpush1.bf16.msra.mxu0 0
      %2313 = vmatprep.subr.bf16.mxu0 0
      %2314 = vmatpush1.bf16.msra.mxu0 0
      %2315 = vmatprep.subr.bf16.mxu0 0
      %2316 = vmatpush1.bf16.msra.mxu0 0
      %2317 = vmatprep.subr.bf16.mxu0 0
      %2318 = vmatpush1.bf16.msra.mxu0 0
      %2319 = vmatprep.subr.bf16.mxu0 0
      %2320 = vmatpush1.bf16.msra.mxu0 0
      %2321 = vmatprep.subr.bf16.mxu0 0
      %2322 = vmatpush1.bf16.msra.mxu0 0
      %2323 = vmatprep.subr.bf16.mxu0 0
      %2324 = vmatpush1.bf16.msra.mxu0 0
      %2325 = vmatprep.subr.bf16.mxu0 0
      %2326 = vmatpush1.bf16.msra.mxu0 0
      %2327 = vmatprep.subr.bf16.mxu0 0
      %2328 = vmatpush1.bf16.msra.mxu0 0
      %2329 = vmatprep.subr.bf16.mxu0 0
      %2330 = vmatpush1.bf16.msra.mxu0 0
      %2331 = vmatprep.subr.bf16.mxu0 0
      %2332 = vmatpush1.bf16.msra.mxu0 0
      %2333 = vmatprep.subr.bf16.mxu0 0
      %2334 = vmatpush1.bf16.msra.mxu0 0
      %2335 = vmatprep.subr.bf16.mxu0 0
      %2336 = vmatpush1.bf16.msra.mxu0 0
      %2337 = vmatprep.subr.bf16.mxu0 0
      %2338 = vmatpush1.bf16.msra.mxu0 0
      %2339 = vmatprep.mubr.bf16.mxu0 0
      %2340 = vmatmul.mubr.bf16.gmra.mrb[0].mxu0 %v2302
      %v2341 = vpop.f32.mrb[0].mxu0
      %v2342 = vadd.f32 0.0, %v2341
      %v2343 = vpop.f32.mrb[0].mxu0
      %v2344 = vpop.f32.mrb[0].mxu0
      %v2345 = vpop.f32.mrb[0].mxu0
      %2346 = vdwg.mxu0
      %v2347 = vadd.f32 %v1913, %v2342
      %v2348 = vlaneseq
      %v2349 = vand.u32 %v2348, 127
      %vm2350 = vcmp.lt.s32.totalorder %v2349, 0
      %v2351 = vsub.s32 0, %v2349
      %v2352 = vsel %vm2350, %v2351, %v2349
      %v2353 = vmul.u32.u64.compose %v2352, 3817748708
      %v2354 = vextract.low.u32 %v2353
      %v2355 = vextract.high.u32 %v2353
      %v2356 = vshrl.u32 %v2355, 3
      %v2357 = vmul.u32 %v2356, 9
      %v2358 = vsub.s32 %v2352, %v2357
      %v2359 = vsub.s32 0, %v2358
      %v2360 = vsel %vm2350, %v2359, %v2358
      %vm2361 = vcmp.ne.s32.totalorder %v2360, 0
      %vm2362 = vcmp.lt.s32.totalorder %v2360, 0
      %vm2363 = vmand %vm2362, %vm2361
      %v2364 = vadd.s32 %v2360, 9
      %v2365 = vsel %vm2363, %v2364, %v2360
      %vm2366 = vcmp.lt.s32.totalorder %v2365, 8
      %v2367 = vsel %vm2366, %v2347, 0.0
      %v2368 = vld [vmem:[#allocation2] sm:$0xff]
      %vm2369 = vcmask 588800
      %v2370 = vsel %vm2369, %v2367, 0.0
      %2371 = vadd.xlane.f32.xlu0 %v2370
      %v2372 = vpop.xlane.xlu0 %2371
      %v2373 = vadd.f32 %v2368, %v2372
      %vm2374 = vcmask 7168
      %2375 = vst.msk [vmem:[#allocation2] sm:$0xff] %vm2374, %v2373
      %v2376 = vld [vmem:[#allocation3] sm:$0xff]
      %v2377 = vmul.f32 %v2367, %v2367
      %v2378 = vsel %vm2369, %v2377, 0.0
      %2379 = vadd.xlane.f32.xlu0 %v2378
      %v2380 = vpop.xlane.xlu0 %2379
      %v2381 = vadd.f32 %v2376, %v2380
      %2382 = vst.msk [vmem:[#allocation3] sm:$0xff] %vm2374, %v2381
      %v2383 = vpack.c.bf16 %v2347, %v2347
      %vm2384 = vcmask 584704
      %2385 = vst.msk [vmem:[%s422] sm:$0xf] %vm2384, %v2383
      // Predicated region
      $region53: #{encoder_block_pallas.4} parent=47 // pred_check
        %p2386 = pneg %p428
      $region54: #{encoder_block_pallas.4} parent=47 // pred_check_branch
        %2388 = sbr.rel (%p2386) target = $region56
      $region55: #{encoder_block_pallas.4} parent=47 // pred_region
        %v2389 = vld [vmem:[#allocation2] sm:$0xff]
        %v2390 = vmul.f32 %v2389, 0.015625
        %v2391 = vld [vmem:[#allocation3] sm:$0xff]
        %v2392 = vmul.f32 %v2391, 0.015625
        %v2393 = vmul.f32 %v2390, %v2390
        %v2394 = vsub.f32 %v2392, %v2393
        %v2395 = vmax.f32 %v2394, 0.0
        %2396 = vst.msk [vmem:[%s426] sm:$0xff] %vm2374, %v2390
        %v2397 = vadd.f32 %v2395, 1e-05
        %v2398 = vrsqrt.pop %v2397
        %2400 = vrot.lane.b32.xlu0 %v2398, 1
        %v2401 = vpop.permute.xlu0 %2400
        %vm2403 = vcmask 15368
        %2404 = vst.msk [vmem:[%s426] sm:$0xff] %vm2403, %v2401
      $region56: #{encoder_block_pallas.4} parent=47 // pred_fallthru
        _
      %p2405 = scmp.lt.s32.totalorder %s24, 1
      %s2406 = scalar_select %p2405, %s24, 1
      %p2407 = scmp.lt.s32.totalorder %s25, 0
      %s2408 = scalar_select %p2407, %s25, 0
      %s2409 = sadd.s32 %s2408, %s2406
      %s2410 = smul.addr %s2409, 4
      %s2411 = scalar_lea.vmem %s7, %s2410
      %p2412 = scmp.lt.s32.totalorder %s24, 1
      %s2413 = scalar_select %p2412, %s24, 1
      %s2414 = smul.addr %s2413, 8
      %s2415 = scalar_lea.vmem %s8, %s2414
      // Predicated region
      $region57: #{encoder_block_pallas.4} parent=47 // pred_check
        %p2416 = pneg %p227
      $region58: #{encoder_block_pallas.4} parent=47 // pred_check_branch
        %2418 = sbr.rel (%p2416) target = $region60
      $region59: #{encoder_block_pallas.4} parent=47 // pred_region
        _
      $region60: #{encoder_block_pallas.4} parent=47 // pred_fallthru
        _
      // Predicated region
      $region61: #{encoder_block_pallas.4} parent=47 // pred_check
        %p2419 = pneg %p253
      $region62: #{encoder_block_pallas.4} parent=47 // pred_check_branch
        %2421 = sbr.rel (%p2419) target = $region64
      $region63: #{encoder_block_pallas.4} parent=47 // pred_region
        _
      $region64: #{encoder_block_pallas.4} parent=47 // pred_fallthru
        _
    $region48: #{encoder_block_pallas.4} parent=5 // pred_fallthru
      _
    %p2422 = scmp.le.s32.totalorder 2, %s15
    // Predicated region
    $region65: #{encoder_block_pallas.4} parent=5 // pred_check
      %p2423 = pneg %p2422
    $region66: #{encoder_block_pallas.4} parent=5 // pred_check_branch
      %2425 = sbr.rel (%p2423) target = $region68
    $region67: #{encoder_block_pallas.4} parent=5 // pred_region
      %s2426 = ssub.s32 %s15, 2
      // Predicated region
      $region69: #{encoder_block_pallas.4} parent=67 // pred_check
        %p2427 = pneg %p233
      $region70: #{encoder_block_pallas.4} parent=67 // pred_check_branch
        %2429 = sbr.rel (%p2427) target = $region72
      $region71: #{encoder_block_pallas.4} parent=67 // pred_region
        %p2430 = scmp.lt.s32.totalorder %s26, 1
        %s2431 = scalar_select %p2430, %s26, 1
        %p2432 = scmp.lt.s32.totalorder %s27, 0
        %s2433 = scalar_select %p2432, %s27, 0
        %s2434 = sadd.s32 %s2433, %s2431
        %s2435 = smul.addr %s2434, 4
        %s2436 = scalar_lea.vmem %s7, %s2435
      $region72: #{encoder_block_pallas.4} parent=67 // pred_fallthru
        _
      // Predicated region
      $region73: #{encoder_block_pallas.4} parent=67 // pred_check
        %p2437 = pneg %p259
      $region74: #{encoder_block_pallas.4} parent=67 // pred_check_branch
        %2439 = sbr.rel (%p2437) target = $region76
      $region75: #{encoder_block_pallas.4} parent=67 // pred_region
        %p2440 = scmp.lt.s32.totalorder %s26, 1
        %s2441 = scalar_select %p2440, %s26, 1
        %s2442 = smul.addr %s2441, 8
        %s2443 = scalar_lea.vmem %s8, %s2442
      $region76: #{encoder_block_pallas.4} parent=67 // pred_fallthru
        _
    $region68: #{encoder_block_pallas.4} parent=5 // pred_fallthru
      _
  $region6: #{encoder_block_pallas.4} parent=0 // loop_footer
    %s19 = sadd.s32 1, %s15
  $region7: #{encoder_block_pallas.4} parent=0 // loop_footer_branch
    %14 = sbr.rel target = $region3
  $region8: #{encoder_block_pallas.4} parent=0 // loop_exit
    _

</llo_original>
